<compile_context>
chip_gen: v7x
topology: tpu7x:2x2x1
jax: 0.10.0
libtpu: 0.0.40
codegen_flags: <defaults>
</compile_context>

<pallas_src>
import functools

import jax
import jax.numpy as jnp
from jax.experimental import pallas as pl
from jax.experimental.pallas import tpu as pltpu

IN_DIM = 11
HID = 50
OUT_DIM = 4
LANE = 128
XLANE = 16          # x lanes: features [0:11], constant 1.0 at lane 11 (bias), zeros [12:16]
NGATES = 4


def _joint_lstm_kernel(x_ref, wih_ref, whh_ref, wout_ref, bout_ref,
                       y_ref, h_ref, c_ref, zx_ref):
    # x_ref   : (T*B_pad, 16)   f32, features in lanes [0:11], 1.0 in lane 11
    # wih_ref : (16, 512)       f32, bias folded into row 11
    # whh_ref : (128, 512)      bf16
    # wout_ref: (128, 128) f32, bout_ref: (1, 128) f32
    # y_ref   : (T*B_pad, 128)  f32 output
    # scratch : h_ref/c_ref (B_pad, 128) f32 carries, zx_ref (T*B_pad, 512) f32
    tb = x_ref.shape[0]
    b_pad = h_ref.shape[0]
    t_steps = tb // b_pad

    # ---- Phase 1: batched input projection for the whole sequence (one MXU pass).
    # Bias is folded in via the constant-1.0 lane of x, so no broadcast-add here.
    zx_ref[...] = jnp.dot(x_ref[...], wih_ref[...],
                          preferred_element_type=jnp.float32)

    # ---- init carries
    h_ref[...] = jnp.zeros_like(h_ref)
    c_ref[...] = jnp.zeros_like(c_ref)

    # ---- Phase 2: serial recurrence. W_hh is read from VMEM each step (transient
    # vregs, streamed by the scheduler) rather than held live across the loop.
    def step(t, carry):
        row = pl.multiple_of(t * b_pad, b_pad)
        z = zx_ref[pl.ds(row, b_pad), :] + jnp.dot(
            h_ref[...].astype(jnp.bfloat16), whh_ref[...],
            preferred_element_type=jnp.float32)

        i_g = jax.nn.sigmoid(z[:, 0 * LANE:1 * LANE])
        f_g = jax.nn.sigmoid(z[:, 1 * LANE:2 * LANE])
        g_g = jnp.tanh(z[:, 2 * LANE:3 * LANE])
        o_g = jax.nn.sigmoid(z[:, 3 * LANE:4 * LANE])

        c_new = f_g * c_ref[...] + i_g * g_g
        h_new = o_g * jnp.tanh(c_new)

        c_ref[...] = c_new
        h_ref[...] = h_new
        # Stash h_t in the (already consumed) i-gate lanes of zx; the output
        # projection is deferred to Phase 3 and reads from here (no aliasing).
        zx_ref[pl.ds(row, b_pad), 0:LANE] = h_new
        return carry

    jax.lax.fori_loop(0, t_steps, step, 0, unroll=min(t_steps, 8))

    # ---- Phase 3: chunked output projection (non-aliased: read zx, write y).
    p3 = tb
    for cand in (512, 256, 128, 64, 32, 16, 8):
        if tb % cand == 0:
            p3 = cand
            break
    n_chunks = tb // p3

    wout = wout_ref[...]
    bout = bout_ref[...]

    def proj(c, carry):
        row = pl.multiple_of(c * p3, p3)
        h_blk = zx_ref[pl.ds(row, p3), 0:LANE]
        y_ref[pl.ds(row, p3), :] = (
            jnp.dot(h_blk, wout, preferred_element_type=jnp.float32) + bout)
        return carry

    jax.lax.fori_loop(0, n_chunks, proj, 0)


def pack_params(params):
    """One-time packing of torch-convention weights into lane-aligned matrices."""
    w_ih, w_hh, b_ih, b_hh, w_lin, b_lin = [jnp.asarray(p, jnp.float32) for p in params]
    wih_p = jnp.zeros((XLANE, NGATES * LANE), jnp.float32)
    whh_p = jnp.zeros((LANE, NGATES * LANE), jnp.float32)
    for g in range(NGATES):
        wih_p = wih_p.at[:IN_DIM, g * LANE:g * LANE + HID].set(
            w_ih[g * HID:(g + 1) * HID, :].T)
        # bias folded into the constant-1.0 input lane
        wih_p = wih_p.at[IN_DIM, g * LANE:g * LANE + HID].set(
            b_ih[g * HID:(g + 1) * HID] + b_hh[g * HID:(g + 1) * HID])
        whh_p = whh_p.at[:HID, g * LANE:g * LANE + HID].set(
            w_hh[g * HID:(g + 1) * HID, :].T)
    wout_p = jnp.zeros((LANE, LANE), jnp.float32).at[:HID, :OUT_DIM].set(w_lin.T)
    bout_p = jnp.zeros((1, LANE), jnp.float32).at[0, :OUT_DIM].set(b_lin)
    # Only the serial-path MXU operand goes bf16; everything else stays f32.
    return wih_p, whh_p.astype(jnp.bfloat16), wout_p, bout_p


@jax.jit
def joint_model_apply(x, wih_p, whh_p, wout_p, bout_p):
    """x: (B, T, 11) f32 -> (B, T, 4) f32, same semantics as the PyTorch JointModel."""
    B, T, D = x.shape
    assert D == IN_DIM
    B_pad = max(8, ((B + 7) // 8) * 8)
    TB = T * B_pad

    # time-major, batch-padded, 16-lane input with the bias lane set to 1.0
    x_p = jnp.zeros((T, B_pad, XLANE), jnp.float32)
    x_p = x_p.at[:, :, IN_DIM].set(1.0)
    x_p = x_p.at[:, :B, :IN_DIM].set(jnp.transpose(x, (1, 0, 2)))
    x_p = x_p.reshape(TB, XLANE)

    # VMEM budget (lane-padded footprints, x/y double-buffered) + headroom.
    need = (2 * TB * LANE * 4          # x (lane-padded in VMEM)
            + 2 * TB * LANE * 4        # y
            + TB * NGATES * LANE * 4   # zx scratch
            + 2 * B_pad * LANE * 4     # h/c carries
            + (4 << 20))               # weights + compiler scratch headroom
    vmem_limit = min(max(need, 32 * 1024 * 1024), 64 * 1024 * 1024)

    y_p = pl.pallas_call(
        _joint_lstm_kernel,
        out_shape=jax.ShapeDtypeStruct((TB, LANE), jnp.float32),
        grid=(1,),
        in_specs=[
            pl.BlockSpec((TB, XLANE), lambda i: (0, 0)),             # x (flat, 16 lanes)
            pl.BlockSpec((XLANE, NGATES * LANE), lambda i: (0, 0)),  # W_ih (+bias row)
            pl.BlockSpec((LANE, NGATES * LANE), lambda i: (0, 0)),   # W_hh (bf16)
            pl.BlockSpec((LANE, LANE), lambda i: (0, 0)),            # W_out
            pl.BlockSpec((1, LANE), lambda i: (0, 0)),               # b_out
        ],
        out_specs=pl.BlockSpec((TB, LANE), lambda i: (0, 0)),
        scratch_shapes=[
            pltpu.VMEM((B_pad, LANE), jnp.float32),            # h carry
            pltpu.VMEM((B_pad, LANE), jnp.float32),            # c carry
            pltpu.VMEM((TB, NGATES * LANE), jnp.float32),      # Zx (+ h stash in lanes 0:128)
        ],
        compiler_params=pltpu.CompilerParams(
            dimension_semantics=("arbitrary",),   # recurrence is sequential
            vmem_limit_bytes=vmem_limit),
    )(x_p, wih_p, whh_p, wout_p, bout_p)

    # back to (B, T, 4), batch-first like PyTorch
    return jnp.transpose(y_p.reshape(T, B_pad, LANE)[:, :B, :OUT_DIM], (1, 0, 2))


def joint_model_pallas(x, params):
    packed = pack_params(params)
    return joint_model_apply(x, *packed)


def joint_model_ref(x, params):
    """Pure-JAX f32 reference matching torch.nn.LSTM + Linear semantics."""
    w_ih, w_hh, b_ih, b_hh, w_lin, b_lin = params
    B, T, _ = x.shape

    def step(carry, x_t):
        h, c = carry
        z = x_t @ w_ih.T + b_ih + h @ w_hh.T + b_hh
        i = jax.nn.sigmoid(z[:, 0 * HID:1 * HID])
        f = jax.nn.sigmoid(z[:, 1 * HID:2 * HID])
        g = jnp.tanh(z[:, 2 * HID:3 * HID])
        o = jax.nn.sigmoid(z[:, 3 * HID:4 * HID])
        c = f * c + i * g
        h = o * jnp.tanh(c)
        return (h, c), h

    h0 = jnp.zeros((B, HID), jnp.float32)
    c0 = jnp.zeros((B, HID), jnp.float32)
    (_, _), hs = jax.lax.scan(step, (h0, c0), jnp.transpose(x, (1, 0, 2)))
    hs = jnp.transpose(hs, (1, 0, 2))          # (B, T, 50)
    return hs @ w_lin.T + b_lin                # (B, T, 4)


def init_params(key):
    """Deterministic init mimicking torch's U(-1/sqrt(H), 1/sqrt(H))."""
    k = 1.0 / jnp.sqrt(jnp.float32(HID))
    keys = jax.random.split(key, 6)
    w_ih = jax.random.uniform(keys[0], (4 * HID, IN_DIM), jnp.float32, -k, k)
    w_hh = jax.random.uniform(keys[1], (4 * HID, HID), jnp.float32, -k, k)
    b_ih = jax.random.uniform(keys[2], (4 * HID,), jnp.float32, -k, k)
    b_hh = jax.random.uniform(keys[3], (4 * HID,), jnp.float32, -k, k)
    w_lin = jax.random.uniform(keys[4], (OUT_DIM, HID), jnp.float32, -k, k)
    b_lin = jax.random.uniform(keys[5], (OUT_DIM,), jnp.float32, -k, k)
    return (w_ih, w_hh, b_ih, b_hh, w_lin, b_lin)


if __name__ == "__main__":
    key = jax.random.PRNGKey(0)
    pkey, xkey = jax.random.split(key)
    params = init_params(pkey)

    B, T = 2, 8
    x = jax.random.normal(xkey, (B, T, IN_DIM), jnp.float32)

    # Pack once (static params), then call the jitted apply.
    packed = pack_params(params)
    y = joint_model_apply(x, *packed)
    y = jax.block_until_ready(y)

    y_ref = jax.block_until_ready(joint_model_ref(x, params))
    assert y.shape == (B, T, OUT_DIM)
    max_err = jnp.max(jnp.abs(y - y_ref))
    # bf16 MXU operands on the serial path -> ~1e-2 scale tolerance.
    assert jnp.allclose(y, y_ref, atol=2e-2, rtol=2e-2), f"max err {max_err}"

    print("KERNEL_OK")
</pallas_src>

<mosaic_0001>
module attributes {stable_mosaic.version = 11 : i64} {
  func.func @_joint_lstm_kernel(%arg0: i32, %arg1: memref<64x16xf32, #tpu.memory_space<vmem>>, %arg2: memref<16x512xf32, #tpu.memory_space<vmem>>, %arg3: memref<128x512xbf16, #tpu.memory_space<vmem>>, %arg4: memref<128x128xf32, #tpu.memory_space<vmem>>, %arg5: memref<1x128xf32, #tpu.memory_space<vmem>>, %arg6: memref<64x128xf32, #tpu.memory_space<vmem>>, %arg7: memref<8x128xf32, #tpu.memory_space<vmem>>, %arg8: memref<8x128xf32, #tpu.memory_space<vmem>>, %arg9: memref<64x512xf32, #tpu.memory_space<vmem>>) attributes {dimension_semantics = [#tpu.dimension_semantics<arbitrary>], iteration_bounds = array<i64: 1>, scalar_prefetch = 0 : i64, scratch_operands = 3 : i64, tpu.core_type = #tpu.core_type<tc>, window_params = [{pipeline_mode = #tpu.pipeline_mode<synchronous>, transform_indices = @transform_0, window_bounds = array<i64: 64, 16>}, {pipeline_mode = #tpu.pipeline_mode<synchronous>, transform_indices = @transform_1, window_bounds = array<i64: 16, 512>}, {pipeline_mode = #tpu.pipeline_mode<synchronous>, transform_indices = @transform_2, window_bounds = array<i64: 128, 512>}, {pipeline_mode = #tpu.pipeline_mode<synchronous>, transform_indices = @transform_3, window_bounds = array<i64: 128, 128>}, {pipeline_mode = #tpu.pipeline_mode<synchronous>, transform_indices = @transform_4, window_bounds = array<i64: 1, 128>}, {pipeline_mode = #tpu.pipeline_mode<synchronous>, transform_indices = @transform_5, window_bounds = array<i64: 64, 128>}]} {
    %c0 = arith.constant 0 : index
    %c0_0 = arith.constant 0 : index
    %0 = vector.load %arg1[%c0, %c0_0] : memref<64x16xf32, #tpu.memory_space<vmem>>, vector<64x16xf32>
    %c0_1 = arith.constant 0 : index
    %c0_2 = arith.constant 0 : index
    %1 = vector.load %arg2[%c0_1, %c0_2] : memref<16x512xf32, #tpu.memory_space<vmem>>, vector<16x512xf32>
    %cst = arith.constant dense<0.000000e+00> : vector<64x512xf32>
    %2 = tpu.matmul %0, %1, %cst {dimension_numbers = #tpu.dot_dimension_numbers<[1], [0], [0], [1], [0, 0, 1, 1], [], []>} : vector<64x16xf32>, vector<16x512xf32>, vector<64x512xf32> -> vector<64x512xf32>
    %c0_3 = arith.constant 0 : index
    %c0_4 = arith.constant 0 : index
    %3 = vector.load %arg9[%c0_3, %c0_4] : memref<64x512xf32, #tpu.memory_space<vmem>>, vector<64x512xf32>
    tpu.vector_store %arg9[%c0_3, %c0_4], %2 {strides = array<i32>} : memref<64x512xf32, #tpu.memory_space<vmem>>, vector<64x512xf32>,
    %cst_5 = arith.constant 0.000000e+00 : f32
    %4 = vector.broadcast %cst_5 : f32 to vector<8x128xf32>
    %c0_6 = arith.constant 0 : index
    %c0_7 = arith.constant 0 : index
    %5 = vector.load %arg7[%c0_6, %c0_7] : memref<8x128xf32, #tpu.memory_space<vmem>>, vector<8x128xf32>
    tpu.vector_store %arg7[%c0_6, %c0_7], %4 {strides = array<i32>} : memref<8x128xf32, #tpu.memory_space<vmem>>, vector<8x128xf32>,
    %cst_8 = arith.constant 0.000000e+00 : f32
    %6 = vector.broadcast %cst_8 : f32 to vector<8x128xf32>
    %c0_9 = arith.constant 0 : index
    %c0_10 = arith.constant 0 : index
    %7 = vector.load %arg8[%c0_9, %c0_10] : memref<8x128xf32, #tpu.memory_space<vmem>>, vector<8x128xf32>
    tpu.vector_store %arg8[%c0_9, %c0_10], %6 {strides = array<i32>} : memref<8x128xf32, #tpu.memory_space<vmem>>, vector<8x128xf32>,
    %c0_i32 = arith.constant 0 : i32
    %c8_i32 = arith.constant 8 : i32
    %8 = arith.muli %c0_i32, %c8_i32 : i32
    %9 = tpu.assume_multiple %8, 8 : i32
    %10 = arith.index_cast %9 : i32 to index
    %c0_11 = arith.constant 0 : index
    %11 = vector.load %arg9[%10, %c0_11] : memref<64x512xf32, #tpu.memory_space<vmem>>, vector<8x512xf32>
    %c0_12 = arith.constant 0 : index
    %c0_13 = arith.constant 0 : index
    %12 = vector.load %arg7[%c0_12, %c0_13] : memref<8x128xf32, #tpu.memory_space<vmem>>, vector<8x128xf32>
    %13 = arith.truncf %12 : vector<8x128xf32> to vector<8x128xbf16>
    %c0_14 = arith.constant 0 : index
    %c0_15 = arith.constant 0 : index
    %14 = vector.load %arg3[%c0_14, %c0_15] : memref<128x512xbf16, #tpu.memory_space<vmem>>, vector<128x512xbf16>
    %cst_16 = arith.constant dense<0.000000e+00> : vector<8x512xf32>
    %15 = tpu.matmul %13, %14, %cst_16 {dimension_numbers = #tpu.dot_dimension_numbers<[1], [0], [0], [1], [0, 0, 1, 1], [], []>} : vector<8x128xbf16>, vector<128x512xbf16>, vector<8x512xf32> -> vector<8x512xf32>
    %16 = arith.addf %11, %15 : vector<8x512xf32>
    %17 = vector.extract_strided_slice %16 {offsets = [0, 0], sizes = [8, 128], strides = [1, 1]} : vector<8x512xf32> to vector<8x128xf32>
    %18 = arith.negf %17 : vector<8x128xf32>
    %19 = math.exp %18 : vector<8x128xf32>
    %cst_17 = arith.constant 1.000000e+00 : f32
    %20 = vector.broadcast %cst_17 : f32 to vector<8x128xf32>
    %21 = arith.addf %20, %19 : vector<8x128xf32>
    %22 = arith.divf %20, %21 : vector<8x128xf32>
    %23 = vector.extract_strided_slice %16 {offsets = [0, 128], sizes = [8, 128], strides = [1, 1]} : vector<8x512xf32> to vector<8x128xf32>
    %24 = arith.negf %23 : vector<8x128xf32>
    %25 = math.exp %24 : vector<8x128xf32>
    %cst_18 = arith.constant 1.000000e+00 : f32
    %26 = vector.broadcast %cst_18 : f32 to vector<8x128xf32>
    %27 = arith.addf %26, %25 : vector<8x128xf32>
    %28 = arith.divf %26, %27 : vector<8x128xf32>
    %29 = vector.extract_strided_slice %16 {offsets = [0, 256], sizes = [8, 128], strides = [1, 1]} : vector<8x512xf32> to vector<8x128xf32>
    %30 = math.tanh %29 : vector<8x128xf32>
    %31 = vector.extract_strided_slice %16 {offsets = [0, 384], sizes = [8, 128], strides = [1, 1]} : vector<8x512xf32> to vector<8x128xf32>
    %32 = arith.negf %31 : vector<8x128xf32>
    %33 = math.exp %32 : vector<8x128xf32>
    %cst_19 = arith.constant 1.000000e+00 : f32
    %34 = vector.broadcast %cst_19 : f32 to vector<8x128xf32>
    %35 = arith.addf %34, %33 : vector<8x128xf32>
    %36 = arith.divf %34, %35 : vector<8x128xf32>
    %c0_20 = arith.constant 0 : index
    %c0_21 = arith.constant 0 : index
    %37 = vector.load %arg8[%c0_20, %c0_21] : memref<8x128xf32, #tpu.memory_space<vmem>>, vector<8x128xf32>
    %38 = arith.mulf %28, %37 : vector<8x128xf32>
    %39 = arith.mulf %22, %30 : vector<8x128xf32>
    %40 = arith.addf %38, %39 : vector<8x128xf32>
    %41 = math.tanh %40 : vector<8x128xf32>
    %42 = arith.mulf %36, %41 : vector<8x128xf32>
    %c0_22 = arith.constant 0 : index
    %c0_23 = arith.constant 0 : index
    %43 = vector.load %arg8[%c0_22, %c0_23] : memref<8x128xf32, #tpu.memory_space<vmem>>, vector<8x128xf32>
    tpu.vector_store %arg8[%c0_22, %c0_23], %40 {strides = array<i32>} : memref<8x128xf32, #tpu.memory_space<vmem>>, vector<8x128xf32>,
    %c0_24 = arith.constant 0 : index
    %c0_25 = arith.constant 0 : index
    %44 = vector.load %arg7[%c0_24, %c0_25] : memref<8x128xf32, #tpu.memory_space<vmem>>, vector<8x128xf32>
    tpu.vector_store %arg7[%c0_24, %c0_25], %42 {strides = array<i32>} : memref<8x128xf32, #tpu.memory_space<vmem>>, vector<8x128xf32>,
    %45 = arith.index_cast %9 : i32 to index
    %c0_26 = arith.constant 0 : index
    %46 = vector.load %arg9[%45, %c0_26] : memref<64x512xf32, #tpu.memory_space<vmem>>, vector<8x128xf32>
    tpu.vector_store %arg9[%45, %c0_26], %42 {strides = array<i32>} : memref<64x512xf32, #tpu.memory_space<vmem>>, vector<8x128xf32>,
    %c1_i32 = arith.constant 1 : i32
    %c8_i32_27 = arith.constant 8 : i32
    %47 = arith.muli %c1_i32, %c8_i32_27 : i32
    %48 = tpu.assume_multiple %47, 8 : i32
    %49 = arith.index_cast %48 : i32 to index
    %c0_28 = arith.constant 0 : index
    %50 = vector.load %arg9[%49, %c0_28] : memref<64x512xf32, #tpu.memory_space<vmem>>, vector<8x512xf32>
    %c0_29 = arith.constant 0 : index
    %c0_30 = arith.constant 0 : index
    %51 = vector.load %arg7[%c0_29, %c0_30] : memref<8x128xf32, #tpu.memory_space<vmem>>, vector<8x128xf32>
    %52 = arith.truncf %51 : vector<8x128xf32> to vector<8x128xbf16>
    %c0_31 = arith.constant 0 : index
    %c0_32 = arith.constant 0 : index
    %53 = vector.load %arg3[%c0_31, %c0_32] : memref<128x512xbf16, #tpu.memory_space<vmem>>, vector<128x512xbf16>
    %cst_33 = arith.constant dense<0.000000e+00> : vector<8x512xf32>
    %54 = tpu.matmul %52, %53, %cst_33 {dimension_numbers = #tpu.dot_dimension_numbers<[1], [0], [0], [1], [0, 0, 1, 1], [], []>} : vector<8x128xbf16>, vector<128x512xbf16>, vector<8x512xf32> -> vector<8x512xf32>
    %55 = arith.addf %50, %54 : vector<8x512xf32>
    %56 = vector.extract_strided_slice %55 {offsets = [0, 0], sizes = [8, 128], strides = [1, 1]} : vector<8x512xf32> to vector<8x128xf32>
    %57 = arith.negf %56 : vector<8x128xf32>
    %58 = math.exp %57 : vector<8x128xf32>
    %cst_34 = arith.constant 1.000000e+00 : f32
    %59 = vector.broadcast %cst_34 : f32 to vector<8x128xf32>
    %60 = arith.addf %59, %58 : vector<8x128xf32>
    %61 = arith.divf %59, %60 : vector<8x128xf32>
    %62 = vector.extract_strided_slice %55 {offsets = [0, 128], sizes = [8, 128], strides = [1, 1]} : vector<8x512xf32> to vector<8x128xf32>
    %63 = arith.negf %62 : vector<8x128xf32>
    %64 = math.exp %63 : vector<8x128xf32>
    %cst_35 = arith.constant 1.000000e+00 : f32
    %65 = vector.broadcast %cst_35 : f32 to vector<8x128xf32>
    %66 = arith.addf %65, %64 : vector<8x128xf32>
    %67 = arith.divf %65, %66 : vector<8x128xf32>
    %68 = vector.extract_strided_slice %55 {offsets = [0, 256], sizes = [8, 128], strides = [1, 1]} : vector<8x512xf32> to vector<8x128xf32>
    %69 = math.tanh %68 : vector<8x128xf32>
    %70 = vector.extract_strided_slice %55 {offsets = [0, 384], sizes = [8, 128], strides = [1, 1]} : vector<8x512xf32> to vector<8x128xf32>
    %71 = arith.negf %70 : vector<8x128xf32>
    %72 = math.exp %71 : vector<8x128xf32>
    %cst_36 = arith.constant 1.000000e+00 : f32
    %73 = vector.broadcast %cst_36 : f32 to vector<8x128xf32>
    %74 = arith.addf %73, %72 : vector<8x128xf32>
    %75 = arith.divf %73, %74 : vector<8x128xf32>
    %c0_37 = arith.constant 0 : index
    %c0_38 = arith.constant 0 : index
    %76 = vector.load %arg8[%c0_37, %c0_38] : memref<8x128xf32, #tpu.memory_space<vmem>>, vector<8x128xf32>
    %77 = arith.mulf %67, %76 : vector<8x128xf32>
    %78 = arith.mulf %61, %69 : vector<8x128xf32>
    %79 = arith.addf %77, %78 : vector<8x128xf32>
    %80 = math.tanh %79 : vector<8x128xf32>
    %81 = arith.mulf %75, %80 : vector<8x128xf32>
    %c0_39 = arith.constant 0 : index
    %c0_40 = arith.constant 0 : index
    %82 = vector.load %arg8[%c0_39, %c0_40] : memref<8x128xf32, #tpu.memory_space<vmem>>, vector<8x128xf32>
    tpu.vector_store %arg8[%c0_39, %c0_40], %79 {strides = array<i32>} : memref<8x128xf32, #tpu.memory_space<vmem>>, vector<8x128xf32>,
    %c0_41 = arith.constant 0 : index
    %c0_42 = arith.constant 0 : index
    %83 = vector.load %arg7[%c0_41, %c0_42] : memref<8x128xf32, #tpu.memory_space<vmem>>, vector<8x128xf32>
    tpu.vector_store %arg7[%c0_41, %c0_42], %81 {strides = array<i32>} : memref<8x128xf32, #tpu.memory_space<vmem>>, vector<8x128xf32>,
    %84 = arith.index_cast %48 : i32 to index
    %c0_43 = arith.constant 0 : index
    %85 = vector.load %arg9[%84, %c0_43] : memref<64x512xf32, #tpu.memory_space<vmem>>, vector<8x128xf32>
    tpu.vector_store %arg9[%84, %c0_43], %81 {strides = array<i32>} : memref<64x512xf32, #tpu.memory_space<vmem>>, vector<8x128xf32>,
    %c2_i32 = arith.constant 2 : i32
    %c8_i32_44 = arith.constant 8 : i32
    %86 = arith.muli %c2_i32, %c8_i32_44 : i32
    %87 = tpu.assume_multiple %86, 8 : i32
    %88 = arith.index_cast %87 : i32 to index
    %c0_45 = arith.constant 0 : index
    %89 = vector.load %arg9[%88, %c0_45] : memref<64x512xf32, #tpu.memory_space<vmem>>, vector<8x512xf32>
    %c0_46 = arith.constant 0 : index
    %c0_47 = arith.constant 0 : index
    %90 = vector.load %arg7[%c0_46, %c0_47] : memref<8x128xf32, #tpu.memory_space<vmem>>, vector<8x128xf32>
    %91 = arith.truncf %90 : vector<8x128xf32> to vector<8x128xbf16>
    %c0_48 = arith.constant 0 : index
    %c0_49 = arith.constant 0 : index
    %92 = vector.load %arg3[%c0_48, %c0_49] : memref<128x512xbf16, #tpu.memory_space<vmem>>, vector<128x512xbf16>
    %cst_50 = arith.constant dense<0.000000e+00> : vector<8x512xf32>
    %93 = tpu.matmul %91, %92, %cst_50 {dimension_numbers = #tpu.dot_dimension_numbers<[1], [0], [0], [1], [0, 0, 1, 1], [], []>} : vector<8x128xbf16>, vector<128x512xbf16>, vector<8x512xf32> -> vector<8x512xf32>
    %94 = arith.addf %89, %93 : vector<8x512xf32>
    %95 = vector.extract_strided_slice %94 {offsets = [0, 0], sizes = [8, 128], strides = [1, 1]} : vector<8x512xf32> to vector<8x128xf32>
    %96 = arith.negf %95 : vector<8x128xf32>
    %97 = math.exp %96 : vector<8x128xf32>
    %cst_51 = arith.constant 1.000000e+00 : f32
    %98 = vector.broadcast %cst_51 : f32 to vector<8x128xf32>
    %99 = arith.addf %98, %97 : vector<8x128xf32>
    %100 = arith.divf %98, %99 : vector<8x128xf32>
    %101 = vector.extract_strided_slice %94 {offsets = [0, 128], sizes = [8, 128], strides = [1, 1]} : vector<8x512xf32> to vector<8x128xf32>
    %102 = arith.negf %101 : vector<8x128xf32>
    %103 = math.exp %102 : vector<8x128xf32>
    %cst_52 = arith.constant 1.000000e+00 : f32
    %104 = vector.broadcast %cst_52 : f32 to vector<8x128xf32>
    %105 = arith.addf %104, %103 : vector<8x128xf32>
    %106 = arith.divf %104, %105 : vector<8x128xf32>
    %107 = vector.extract_strided_slice %94 {offsets = [0, 256], sizes = [8, 128], strides = [1, 1]} : vector<8x512xf32> to vector<8x128xf32>
    %108 = math.tanh %107 : vector<8x128xf32>
    %109 = vector.extract_strided_slice %94 {offsets = [0, 384], sizes = [8, 128], strides = [1, 1]} : vector<8x512xf32> to vector<8x128xf32>
    %110 = arith.negf %109 : vector<8x128xf32>
    %111 = math.exp %110 : vector<8x128xf32>
    %cst_53 = arith.constant 1.000000e+00 : f32
    %112 = vector.broadcast %cst_53 : f32 to vector<8x128xf32>
    %113 = arith.addf %112, %111 : vector<8x128xf32>
    %114 = arith.divf %112, %113 : vector<8x128xf32>
    %c0_54 = arith.constant 0 : index
    %c0_55 = arith.constant 0 : index
    %115 = vector.load %arg8[%c0_54, %c0_55] : memref<8x128xf32, #tpu.memory_space<vmem>>, vector<8x128xf32>
    %116 = arith.mulf %106, %115 : vector<8x128xf32>
    %117 = arith.mulf %100, %108 : vector<8x128xf32>
    %118 = arith.addf %116, %117 : vector<8x128xf32>
    %119 = math.tanh %118 : vector<8x128xf32>
    %120 = arith.mulf %114, %119 : vector<8x128xf32>
    %c0_56 = arith.constant 0 : index
    %c0_57 = arith.constant 0 : index
    %121 = vector.load %arg8[%c0_56, %c0_57] : memref<8x128xf32, #tpu.memory_space<vmem>>, vector<8x128xf32>
    tpu.vector_store %arg8[%c0_56, %c0_57], %118 {strides = array<i32>} : memref<8x128xf32, #tpu.memory_space<vmem>>, vector<8x128xf32>,
    %c0_58 = arith.constant 0 : index
    %c0_59 = arith.constant 0 : index
    %122 = vector.load %arg7[%c0_58, %c0_59] : memref<8x128xf32, #tpu.memory_space<vmem>>, vector<8x128xf32>
    tpu.vector_store %arg7[%c0_58, %c0_59], %120 {strides = array<i32>} : memref<8x128xf32, #tpu.memory_space<vmem>>, vector<8x128xf32>,
    %123 = arith.index_cast %87 : i32 to index
    %c0_60 = arith.constant 0 : index
    %124 = vector.load %arg9[%123, %c0_60] : memref<64x512xf32, #tpu.memory_space<vmem>>, vector<8x128xf32>
    tpu.vector_store %arg9[%123, %c0_60], %120 {strides = array<i32>} : memref<64x512xf32, #tpu.memory_space<vmem>>, vector<8x128xf32>,
    %c3_i32 = arith.constant 3 : i32
    %c8_i32_61 = arith.constant 8 : i32
    %125 = arith.muli %c3_i32, %c8_i32_61 : i32
    %126 = tpu.assume_multiple %125, 8 : i32
    %127 = arith.index_cast %126 : i32 to index
    %c0_62 = arith.constant 0 : index
    %128 = vector.load %arg9[%127, %c0_62] : memref<64x512xf32, #tpu.memory_space<vmem>>, vector<8x512xf32>
    %c0_63 = arith.constant 0 : index
    %c0_64 = arith.constant 0 : index
    %129 = vector.load %arg7[%c0_63, %c0_64] : memref<8x128xf32, #tpu.memory_space<vmem>>, vector<8x128xf32>
    %130 = arith.truncf %129 : vector<8x128xf32> to vector<8x128xbf16>
    %c0_65 = arith.constant 0 : index
    %c0_66 = arith.constant 0 : index
    %131 = vector.load %arg3[%c0_65, %c0_66] : memref<128x512xbf16, #tpu.memory_space<vmem>>, vector<128x512xbf16>
    %cst_67 = arith.constant dense<0.000000e+00> : vector<8x512xf32>
    %132 = tpu.matmul %130, %131, %cst_67 {dimension_numbers = #tpu.dot_dimension_numbers<[1], [0], [0], [1], [0, 0, 1, 1], [], []>} : vector<8x128xbf16>, vector<128x512xbf16>, vector<8x512xf32> -> vector<8x512xf32>
    %133 = arith.addf %128, %132 : vector<8x512xf32>
    %134 = vector.extract_strided_slice %133 {offsets = [0, 0], sizes = [8, 128], strides = [1, 1]} : vector<8x512xf32> to vector<8x128xf32>
    %135 = arith.negf %134 : vector<8x128xf32>
    %136 = math.exp %135 : vector<8x128xf32>
    %cst_68 = arith.constant 1.000000e+00 : f32
    %137 = vector.broadcast %cst_68 : f32 to vector<8x128xf32>
    %138 = arith.addf %137, %136 : vector<8x128xf32>
    %139 = arith.divf %137, %138 : vector<8x128xf32>
    %140 = vector.extract_strided_slice %133 {offsets = [0, 128], sizes = [8, 128], strides = [1, 1]} : vector<8x512xf32> to vector<8x128xf32>
    %141 = arith.negf %140 : vector<8x128xf32>
    %142 = math.exp %141 : vector<8x128xf32>
    %cst_69 = arith.constant 1.000000e+00 : f32
    %143 = vector.broadcast %cst_69 : f32 to vector<8x128xf32>
    %144 = arith.addf %143, %142 : vector<8x128xf32>
    %145 = arith.divf %143, %144 : vector<8x128xf32>
    %146 = vector.extract_strided_slice %133 {offsets = [0, 256], sizes = [8, 128], strides = [1, 1]} : vector<8x512xf32> to vector<8x128xf32>
    %147 = math.tanh %146 : vector<8x128xf32>
    %148 = vector.extract_strided_slice %133 {offsets = [0, 384], sizes = [8, 128], strides = [1, 1]} : vector<8x512xf32> to vector<8x128xf32>
    %149 = arith.negf %148 : vector<8x128xf32>
    %150 = math.exp %149 : vector<8x128xf32>
    %cst_70 = arith.constant 1.000000e+00 : f32
    %151 = vector.broadcast %cst_70 : f32 to vector<8x128xf32>
    %152 = arith.addf %151, %150 : vector<8x128xf32>
    %153 = arith.divf %151, %152 : vector<8x128xf32>
    %c0_71 = arith.constant 0 : index
    %c0_72 = arith.constant 0 : index
    %154 = vector.load %arg8[%c0_71, %c0_72] : memref<8x128xf32, #tpu.memory_space<vmem>>, vector<8x128xf32>
    %155 = arith.mulf %145, %154 : vector<8x128xf32>
    %156 = arith.mulf %139, %147 : vector<8x128xf32>
    %157 = arith.addf %155, %156 : vector<8x128xf32>
    %158 = math.tanh %157 : vector<8x128xf32>
    %159 = arith.mulf %153, %158 : vector<8x128xf32>
    %c0_73 = arith.constant 0 : index
    %c0_74 = arith.constant 0 : index
    %160 = vector.load %arg8[%c0_73, %c0_74] : memref<8x128xf32, #tpu.memory_space<vmem>>, vector<8x128xf32>
    tpu.vector_store %arg8[%c0_73, %c0_74], %157 {strides = array<i32>} : memref<8x128xf32, #tpu.memory_space<vmem>>, vector<8x128xf32>,
    %c0_75 = arith.constant 0 : index
    %c0_76 = arith.constant 0 : index
    %161 = vector.load %arg7[%c0_75, %c0_76] : memref<8x128xf32, #tpu.memory_space<vmem>>, vector<8x128xf32>
    tpu.vector_store %arg7[%c0_75, %c0_76], %159 {strides = array<i32>} : memref<8x128xf32, #tpu.memory_space<vmem>>, vector<8x128xf32>,
    %162 = arith.index_cast %126 : i32 to index
    %c0_77 = arith.constant 0 : index
    %163 = vector.load %arg9[%162, %c0_77] : memref<64x512xf32, #tpu.memory_space<vmem>>, vector<8x128xf32>
    tpu.vector_store %arg9[%162, %c0_77], %159 {strides = array<i32>} : memref<64x512xf32, #tpu.memory_space<vmem>>, vector<8x128xf32>,
    %c4_i32 = arith.constant 4 : i32
    %c8_i32_78 = arith.constant 8 : i32
    %164 = arith.muli %c4_i32, %c8_i32_78 : i32
    %165 = tpu.assume_multiple %164, 8 : i32
    %166 = arith.index_cast %165 : i32 to index
    %c0_79 = arith.constant 0 : index
    %167 = vector.load %arg9[%166, %c0_79] : memref<64x512xf32, #tpu.memory_space<vmem>>, vector<8x512xf32>
    %c0_80 = arith.constant 0 : index
    %c0_81 = arith.constant 0 : index
    %168 = vector.load %arg7[%c0_80, %c0_81] : memref<8x128xf32, #tpu.memory_space<vmem>>, vector<8x128xf32>
    %169 = arith.truncf %168 : vector<8x128xf32> to vector<8x128xbf16>
    %c0_82 = arith.constant 0 : index
    %c0_83 = arith.constant 0 : index
    %170 = vector.load %arg3[%c0_82, %c0_83] : memref<128x512xbf16, #tpu.memory_space<vmem>>, vector<128x512xbf16>
    %cst_84 = arith.constant dense<0.000000e+00> : vector<8x512xf32>
    %171 = tpu.matmul %169, %170, %cst_84 {dimension_numbers = #tpu.dot_dimension_numbers<[1], [0], [0], [1], [0, 0, 1, 1], [], []>} : vector<8x128xbf16>, vector<128x512xbf16>, vector<8x512xf32> -> vector<8x512xf32>
    %172 = arith.addf %167, %171 : vector<8x512xf32>
    %173 = vector.extract_strided_slice %172 {offsets = [0, 0], sizes = [8, 128], strides = [1, 1]} : vector<8x512xf32> to vector<8x128xf32>
    %174 = arith.negf %173 : vector<8x128xf32>
    %175 = math.exp %174 : vector<8x128xf32>
    %cst_85 = arith.constant 1.000000e+00 : f32
    %176 = vector.broadcast %cst_85 : f32 to vector<8x128xf32>
    %177 = arith.addf %176, %175 : vector<8x128xf32>
    %178 = arith.divf %176, %177 : vector<8x128xf32>
    %179 = vector.extract_strided_slice %172 {offsets = [0, 128], sizes = [8, 128], strides = [1, 1]} : vector<8x512xf32> to vector<8x128xf32>
    %180 = arith.negf %179 : vector<8x128xf32>
    %181 = math.exp %180 : vector<8x128xf32>
    %cst_86 = arith.constant 1.000000e+00 : f32
    %182 = vector.broadcast %cst_86 : f32 to vector<8x128xf32>
    %183 = arith.addf %182, %181 : vector<8x128xf32>
    %184 = arith.divf %182, %183 : vector<8x128xf32>
    %185 = vector.extract_strided_slice %172 {offsets = [0, 256], sizes = [8, 128], strides = [1, 1]} : vector<8x512xf32> to vector<8x128xf32>
    %186 = math.tanh %185 : vector<8x128xf32>
    %187 = vector.extract_strided_slice %172 {offsets = [0, 384], sizes = [8, 128], strides = [1, 1]} : vector<8x512xf32> to vector<8x128xf32>
    %188 = arith.negf %187 : vector<8x128xf32>
    %189 = math.exp %188 : vector<8x128xf32>
    %cst_87 = arith.constant 1.000000e+00 : f32
    %190 = vector.broadcast %cst_87 : f32 to vector<8x128xf32>
    %191 = arith.addf %190, %189 : vector<8x128xf32>
    %192 = arith.divf %190, %191 : vector<8x128xf32>
    %c0_88 = arith.constant 0 : index
    %c0_89 = arith.constant 0 : index
    %193 = vector.load %arg8[%c0_88, %c0_89] : memref<8x128xf32, #tpu.memory_space<vmem>>, vector<8x128xf32>
    %194 = arith.mulf %184, %193 : vector<8x128xf32>
    %195 = arith.mulf %178, %186 : vector<8x128xf32>
    %196 = arith.addf %194, %195 : vector<8x128xf32>
    %197 = math.tanh %196 : vector<8x128xf32>
    %198 = arith.mulf %192, %197 : vector<8x128xf32>
    %c0_90 = arith.constant 0 : index
    %c0_91 = arith.constant 0 : index
    %199 = vector.load %arg8[%c0_90, %c0_91] : memref<8x128xf32, #tpu.memory_space<vmem>>, vector<8x128xf32>
    tpu.vector_store %arg8[%c0_90, %c0_91], %196 {strides = array<i32>} : memref<8x128xf32, #tpu.memory_space<vmem>>, vector<8x128xf32>,
    %c0_92 = arith.constant 0 : index
    %c0_93 = arith.constant 0 : index
    %200 = vector.load %arg7[%c0_92, %c0_93] : memref<8x128xf32, #tpu.memory_space<vmem>>, vector<8x128xf32>
    tpu.vector_store %arg7[%c0_92, %c0_93], %198 {strides = array<i32>} : memref<8x128xf32, #tpu.memory_space<vmem>>, vector<8x128xf32>,
    %201 = arith.index_cast %165 : i32 to index
    %c0_94 = arith.constant 0 : index
    %202 = vector.load %arg9[%201, %c0_94] : memref<64x512xf32, #tpu.memory_space<vmem>>, vector<8x128xf32>
    tpu.vector_store %arg9[%201, %c0_94], %198 {strides = array<i32>} : memref<64x512xf32, #tpu.memory_space<vmem>>, vector<8x128xf32>,
    %c5_i32 = arith.constant 5 : i32
    %c8_i32_95 = arith.constant 8 : i32
    %203 = arith.muli %c5_i32, %c8_i32_95 : i32
    %204 = tpu.assume_multiple %203, 8 : i32
    %205 = arith.index_cast %204 : i32 to index
    %c0_96 = arith.constant 0 : index
    %206 = vector.load %arg9[%205, %c0_96] : memref<64x512xf32, #tpu.memory_space<vmem>>, vector<8x512xf32>
    %c0_97 = arith.constant 0 : index
    %c0_98 = arith.constant 0 : index
    %207 = vector.load %arg7[%c0_97, %c0_98] : memref<8x128xf32, #tpu.memory_space<vmem>>, vector<8x128xf32>
    %208 = arith.truncf %207 : vector<8x128xf32> to vector<8x128xbf16>
    %c0_99 = arith.constant 0 : index
    %c0_100 = arith.constant 0 : index
    %209 = vector.load %arg3[%c0_99, %c0_100] : memref<128x512xbf16, #tpu.memory_space<vmem>>, vector<128x512xbf16>
    %cst_101 = arith.constant dense<0.000000e+00> : vector<8x512xf32>
    %210 = tpu.matmul %208, %209, %cst_101 {dimension_numbers = #tpu.dot_dimension_numbers<[1], [0], [0], [1], [0, 0, 1, 1], [], []>} : vector<8x128xbf16>, vector<128x512xbf16>, vector<8x512xf32> -> vector<8x512xf32>
    %211 = arith.addf %206, %210 : vector<8x512xf32>
    %212 = vector.extract_strided_slice %211 {offsets = [0, 0], sizes = [8, 128], strides = [1, 1]} : vector<8x512xf32> to vector<8x128xf32>
    %213 = arith.negf %212 : vector<8x128xf32>
    %214 = math.exp %213 : vector<8x128xf32>
    %cst_102 = arith.constant 1.000000e+00 : f32
    %215 = vector.broadcast %cst_102 : f32 to vector<8x128xf32>
    %216 = arith.addf %215, %214 : vector<8x128xf32>
    %217 = arith.divf %215, %216 : vector<8x128xf32>
    %218 = vector.extract_strided_slice %211 {offsets = [0, 128], sizes = [8, 128], strides = [1, 1]} : vector<8x512xf32> to vector<8x128xf32>
    %219 = arith.negf %218 : vector<8x128xf32>
    %220 = math.exp %219 : vector<8x128xf32>
    %cst_103 = arith.constant 1.000000e+00 : f32
    %221 = vector.broadcast %cst_103 : f32 to vector<8x128xf32>
    %222 = arith.addf %221, %220 : vector<8x128xf32>
    %223 = arith.divf %221, %222 : vector<8x128xf32>
    %224 = vector.extract_strided_slice %211 {offsets = [0, 256], sizes = [8, 128], strides = [1, 1]} : vector<8x512xf32> to vector<8x128xf32>
    %225 = math.tanh %224 : vector<8x128xf32>
    %226 = vector.extract_strided_slice %211 {offsets = [0, 384], sizes = [8, 128], strides = [1, 1]} : vector<8x512xf32> to vector<8x128xf32>
    %227 = arith.negf %226 : vector<8x128xf32>
    %228 = math.exp %227 : vector<8x128xf32>
    %cst_104 = arith.constant 1.000000e+00 : f32
    %229 = vector.broadcast %cst_104 : f32 to vector<8x128xf32>
    %230 = arith.addf %229, %228 : vector<8x128xf32>
    %231 = arith.divf %229, %230 : vector<8x128xf32>
    %c0_105 = arith.constant 0 : index
    %c0_106 = arith.constant 0 : index
    %232 = vector.load %arg8[%c0_105, %c0_106] : memref<8x128xf32, #tpu.memory_space<vmem>>, vector<8x128xf32>
    %233 = arith.mulf %223, %232 : vector<8x128xf32>
    %234 = arith.mulf %217, %225 : vector<8x128xf32>
    %235 = arith.addf %233, %234 : vector<8x128xf32>
    %236 = math.tanh %235 : vector<8x128xf32>
    %237 = arith.mulf %231, %236 : vector<8x128xf32>
    %c0_107 = arith.constant 0 : index
    %c0_108 = arith.constant 0 : index
    %238 = vector.load %arg8[%c0_107, %c0_108] : memref<8x128xf32, #tpu.memory_space<vmem>>, vector<8x128xf32>
    tpu.vector_store %arg8[%c0_107, %c0_108], %235 {strides = array<i32>} : memref<8x128xf32, #tpu.memory_space<vmem>>, vector<8x128xf32>,
    %c0_109 = arith.constant 0 : index
    %c0_110 = arith.constant 0 : index
    %239 = vector.load %arg7[%c0_109, %c0_110] : memref<8x128xf32, #tpu.memory_space<vmem>>, vector<8x128xf32>
    tpu.vector_store %arg7[%c0_109, %c0_110], %237 {strides = array<i32>} : memref<8x128xf32, #tpu.memory_space<vmem>>, vector<8x128xf32>,
    %240 = arith.index_cast %204 : i32 to index
    %c0_111 = arith.constant 0 : index
    %241 = vector.load %arg9[%240, %c0_111] : memref<64x512xf32, #tpu.memory_space<vmem>>, vector<8x128xf32>
    tpu.vector_store %arg9[%240, %c0_111], %237 {strides = array<i32>} : memref<64x512xf32, #tpu.memory_space<vmem>>, vector<8x128xf32>,
    %c6_i32 = arith.constant 6 : i32
    %c8_i32_112 = arith.constant 8 : i32
    %242 = arith.muli %c6_i32, %c8_i32_112 : i32
    %243 = tpu.assume_multiple %242, 8 : i32
    %244 = arith.index_cast %243 : i32 to index
    %c0_113 = arith.constant 0 : index
    %245 = vector.load %arg9[%244, %c0_113] : memref<64x512xf32, #tpu.memory_space<vmem>>, vector<8x512xf32>
    %c0_114 = arith.constant 0 : index
    %c0_115 = arith.constant 0 : index
    %246 = vector.load %arg7[%c0_114, %c0_115] : memref<8x128xf32, #tpu.memory_space<vmem>>, vector<8x128xf32>
    %247 = arith.truncf %246 : vector<8x128xf32> to vector<8x128xbf16>
    %c0_116 = arith.constant 0 : index
    %c0_117 = arith.constant 0 : index
    %248 = vector.load %arg3[%c0_116, %c0_117] : memref<128x512xbf16, #tpu.memory_space<vmem>>, vector<128x512xbf16>
    %cst_118 = arith.constant dense<0.000000e+00> : vector<8x512xf32>
    %249 = tpu.matmul %247, %248, %cst_118 {dimension_numbers = #tpu.dot_dimension_numbers<[1], [0], [0], [1], [0, 0, 1, 1], [], []>} : vector<8x128xbf16>, vector<128x512xbf16>, vector<8x512xf32> -> vector<8x512xf32>
    %250 = arith.addf %245, %249 : vector<8x512xf32>
    %251 = vector.extract_strided_slice %250 {offsets = [0, 0], sizes = [8, 128], strides = [1, 1]} : vector<8x512xf32> to vector<8x128xf32>
    %252 = arith.negf %251 : vector<8x128xf32>
    %253 = math.exp %252 : vector<8x128xf32>
    %cst_119 = arith.constant 1.000000e+00 : f32
    %254 = vector.broadcast %cst_119 : f32 to vector<8x128xf32>
    %255 = arith.addf %254, %253 : vector<8x128xf32>
    %256 = arith.divf %254, %255 : vector<8x128xf32>
    %257 = vector.extract_strided_slice %250 {offsets = [0, 128], sizes = [8, 128], strides = [1, 1]} : vector<8x512xf32> to vector<8x128xf32>
    %258 = arith.negf %257 : vector<8x128xf32>
    %259 = math.exp %258 : vector<8x128xf32>
    %cst_120 = arith.constant 1.000000e+00 : f32
    %260 = vector.broadcast %cst_120 : f32 to vector<8x128xf32>
    %261 = arith.addf %260, %259 : vector<8x128xf32>
    %262 = arith.divf %260, %261 : vector<8x128xf32>
    %263 = vector.extract_strided_slice %250 {offsets = [0, 256], sizes = [8, 128], strides = [1, 1]} : vector<8x512xf32> to vector<8x128xf32>
    %264 = math.tanh %263 : vector<8x128xf32>
    %265 = vector.extract_strided_slice %250 {offsets = [0, 384], sizes = [8, 128], strides = [1, 1]} : vector<8x512xf32> to vector<8x128xf32>
    %266 = arith.negf %265 : vector<8x128xf32>
    %267 = math.exp %266 : vector<8x128xf32>
    %cst_121 = arith.constant 1.000000e+00 : f32
    %268 = vector.broadcast %cst_121 : f32 to vector<8x128xf32>
    %269 = arith.addf %268, %267 : vector<8x128xf32>
    %270 = arith.divf %268, %269 : vector<8x128xf32>
    %c0_122 = arith.constant 0 : index
    %c0_123 = arith.constant 0 : index
    %271 = vector.load %arg8[%c0_122, %c0_123] : memref<8x128xf32, #tpu.memory_space<vmem>>, vector<8x128xf32>
    %272 = arith.mulf %262, %271 : vector<8x128xf32>
    %273 = arith.mulf %256, %264 : vector<8x128xf32>
    %274 = arith.addf %272, %273 : vector<8x128xf32>
    %275 = math.tanh %274 : vector<8x128xf32>
    %276 = arith.mulf %270, %275 : vector<8x128xf32>
    %c0_124 = arith.constant 0 : index
    %c0_125 = arith.constant 0 : index
    %277 = vector.load %arg8[%c0_124, %c0_125] : memref<8x128xf32, #tpu.memory_space<vmem>>, vector<8x128xf32>
    tpu.vector_store %arg8[%c0_124, %c0_125], %274 {strides = array<i32>} : memref<8x128xf32, #tpu.memory_space<vmem>>, vector<8x128xf32>,
    %c0_126 = arith.constant 0 : index
    %c0_127 = arith.constant 0 : index
    %278 = vector.load %arg7[%c0_126, %c0_127] : memref<8x128xf32, #tpu.memory_space<vmem>>, vector<8x128xf32>
    tpu.vector_store %arg7[%c0_126, %c0_127], %276 {strides = array<i32>} : memref<8x128xf32, #tpu.memory_space<vmem>>, vector<8x128xf32>,
    %279 = arith.index_cast %243 : i32 to index
    %c0_128 = arith.constant 0 : index
    %280 = vector.load %arg9[%279, %c0_128] : memref<64x512xf32, #tpu.memory_space<vmem>>, vector<8x128xf32>
    tpu.vector_store %arg9[%279, %c0_128], %276 {strides = array<i32>} : memref<64x512xf32, #tpu.memory_space<vmem>>, vector<8x128xf32>,
    %c7_i32 = arith.constant 7 : i32
    %c8_i32_129 = arith.constant 8 : i32
    %281 = arith.muli %c7_i32, %c8_i32_129 : i32
    %282 = tpu.assume_multiple %281, 8 : i32
    %283 = arith.index_cast %282 : i32 to index
    %c0_130 = arith.constant 0 : index
    %284 = vector.load %arg9[%283, %c0_130] : memref<64x512xf32, #tpu.memory_space<vmem>>, vector<8x512xf32>
    %c0_131 = arith.constant 0 : index
    %c0_132 = arith.constant 0 : index
    %285 = vector.load %arg7[%c0_131, %c0_132] : memref<8x128xf32, #tpu.memory_space<vmem>>, vector<8x128xf32>
    %286 = arith.truncf %285 : vector<8x128xf32> to vector<8x128xbf16>
    %c0_133 = arith.constant 0 : index
    %c0_134 = arith.constant 0 : index
    %287 = vector.load %arg3[%c0_133, %c0_134] : memref<128x512xbf16, #tpu.memory_space<vmem>>, vector<128x512xbf16>
    %cst_135 = arith.constant dense<0.000000e+00> : vector<8x512xf32>
    %288 = tpu.matmul %286, %287, %cst_135 {dimension_numbers = #tpu.dot_dimension_numbers<[1], [0], [0], [1], [0, 0, 1, 1], [], []>} : vector<8x128xbf16>, vector<128x512xbf16>, vector<8x512xf32> -> vector<8x512xf32>
    %289 = arith.addf %284, %288 : vector<8x512xf32>
    %290 = vector.extract_strided_slice %289 {offsets = [0, 0], sizes = [8, 128], strides = [1, 1]} : vector<8x512xf32> to vector<8x128xf32>
    %291 = arith.negf %290 : vector<8x128xf32>
    %292 = math.exp %291 : vector<8x128xf32>
    %cst_136 = arith.constant 1.000000e+00 : f32
    %293 = vector.broadcast %cst_136 : f32 to vector<8x128xf32>
    %294 = arith.addf %293, %292 : vector<8x128xf32>
    %295 = arith.divf %293, %294 : vector<8x128xf32>
    %296 = vector.extract_strided_slice %289 {offsets = [0, 128], sizes = [8, 128], strides = [1, 1]} : vector<8x512xf32> to vector<8x128xf32>
    %297 = arith.negf %296 : vector<8x128xf32>
    %298 = math.exp %297 : vector<8x128xf32>
    %cst_137 = arith.constant 1.000000e+00 : f32
    %299 = vector.broadcast %cst_137 : f32 to vector<8x128xf32>
    %300 = arith.addf %299, %298 : vector<8x128xf32>
    %301 = arith.divf %299, %300 : vector<8x128xf32>
    %302 = vector.extract_strided_slice %289 {offsets = [0, 256], sizes = [8, 128], strides = [1, 1]} : vector<8x512xf32> to vector<8x128xf32>
    %303 = math.tanh %302 : vector<8x128xf32>
    %304 = vector.extract_strided_slice %289 {offsets = [0, 384], sizes = [8, 128], strides = [1, 1]} : vector<8x512xf32> to vector<8x128xf32>
    %305 = arith.negf %304 : vector<8x128xf32>
    %306 = math.exp %305 : vector<8x128xf32>
    %cst_138 = arith.constant 1.000000e+00 : f32
    %307 = vector.broadcast %cst_138 : f32 to vector<8x128xf32>
    %308 = arith.addf %307, %306 : vector<8x128xf32>
    %309 = arith.divf %307, %308 : vector<8x128xf32>
    %c0_139 = arith.constant 0 : index
    %c0_140 = arith.constant 0 : index
    %310 = vector.load %arg8[%c0_139, %c0_140] : memref<8x128xf32, #tpu.memory_space<vmem>>, vector<8x128xf32>
    %311 = arith.mulf %301, %310 : vector<8x128xf32>
    %312 = arith.mulf %295, %303 : vector<8x128xf32>
    %313 = arith.addf %311, %312 : vector<8x128xf32>
    %314 = math.tanh %313 : vector<8x128xf32>
    %315 = arith.mulf %309, %314 : vector<8x128xf32>
    %c0_141 = arith.constant 0 : index
    %c0_142 = arith.constant 0 : index
    %316 = vector.load %arg8[%c0_141, %c0_142] : memref<8x128xf32, #tpu.memory_space<vmem>>, vector<8x128xf32>
    tpu.vector_store %arg8[%c0_141, %c0_142], %313 {strides = array<i32>} : memref<8x128xf32, #tpu.memory_space<vmem>>, vector<8x128xf32>,
    %c0_143 = arith.constant 0 : index
    %c0_144 = arith.constant 0 : index
    %317 = vector.load %arg7[%c0_143, %c0_144] : memref<8x128xf32, #tpu.memory_space<vmem>>, vector<8x128xf32>
    tpu.vector_store %arg7[%c0_143, %c0_144], %315 {strides = array<i32>} : memref<8x128xf32, #tpu.memory_space<vmem>>, vector<8x128xf32>,
    %318 = arith.index_cast %282 : i32 to index
    %c0_145 = arith.constant 0 : index
    %319 = vector.load %arg9[%318, %c0_145] : memref<64x512xf32, #tpu.memory_space<vmem>>, vector<8x128xf32>
    tpu.vector_store %arg9[%318, %c0_145], %315 {strides = array<i32>} : memref<64x512xf32, #tpu.memory_space<vmem>>, vector<8x128xf32>,
    %c8_i32_146 = arith.constant 8 : i32
    %c0_147 = arith.constant 0 : index
    %c0_148 = arith.constant 0 : index
    %320 = vector.load %arg4[%c0_147, %c0_148] : memref<128x128xf32, #tpu.memory_space<vmem>>, vector<128x128xf32>
    %c0_149 = arith.constant 0 : index
    %c0_150 = arith.constant 0 : index
    %321 = vector.load %arg5[%c0_149, %c0_150] : memref<1x128xf32, #tpu.memory_space<vmem>>, vector<1x128xf32>
    %c0_i32_151 = arith.constant 0 : i32
    %c64_i32 = arith.constant 64 : i32
    %322 = arith.muli %c0_i32_151, %c64_i32 : i32
    %323 = tpu.assume_multiple %322, 64 : i32
    %324 = arith.index_cast %323 : i32 to index
    %c0_152 = arith.constant 0 : index
    %325 = vector.load %arg9[%324, %c0_152] : memref<64x512xf32, #tpu.memory_space<vmem>>, vector<64x128xf32>
    %cst_153 = arith.constant dense<0.000000e+00> : vector<64x128xf32>
    %326 = tpu.matmul %325, %320, %cst_153 {dimension_numbers = #tpu.dot_dimension_numbers<[1], [0], [0], [1], [0, 0, 1, 1], [], []>} : vector<64x128xf32>, vector<128x128xf32>, vector<64x128xf32> -> vector<64x128xf32>
    %327 = vector.broadcast %321 : vector<1x128xf32> to vector<64x128xf32>
    %328 = arith.addf %326, %327 : vector<64x128xf32>
    %329 = arith.index_cast %323 : i32 to index
    %c0_154 = arith.constant 0 : index
    %330 = vector.load %arg6[%329, %c0_154] : memref<64x128xf32, #tpu.memory_space<vmem>>, vector<64x128xf32>
    tpu.vector_store %arg6[%329, %c0_154], %328 {strides = array<i32>} : memref<64x128xf32, #tpu.memory_space<vmem>>, vector<64x128xf32>,
    %c1_i32_155 = arith.constant 1 : i32
    return
  }
  func.func @transform_0(%arg0: i32) -> (i32, i32) {
    %c0_i32 = arith.constant 0 : i32
    %c0_i32_0 = arith.constant 0 : i32
    %c0_i32_1 = arith.constant 0 : i32
    return %c0_i32, %c0_i32_0 : i32, i32
  }
  func.func @transform_1(%arg0: i32) -> (i32, i32) {
    %c0_i32 = arith.constant 0 : i32
    %c0_i32_0 = arith.constant 0 : i32
    %c0_i32_1 = arith.constant 0 : i32
    return %c0_i32, %c0_i32_0 : i32, i32
  }
  func.func @transform_2(%arg0: i32) -> (i32, i32) {
    %c0_i32 = arith.constant 0 : i32
    %c0_i32_0 = arith.constant 0 : i32
    %c0_i32_1 = arith.constant 0 : i32
    return %c0_i32, %c0_i32_0 : i32, i32
  }
  func.func @transform_3(%arg0: i32) -> (i32, i32) {
    %c0_i32 = arith.constant 0 : i32
    %c0_i32_0 = arith.constant 0 : i32
    %c0_i32_1 = arith.constant 0 : i32
    return %c0_i32, %c0_i32_0 : i32, i32
  }
  func.func @transform_4(%arg0: i32) -> (i32, i32) {
    %c0_i32 = arith.constant 0 : i32
    %c0_i32_0 = arith.constant 0 : i32
    %c0_i32_1 = arith.constant 0 : i32
    return %c0_i32, %c0_i32_0 : i32, i32
  }
  func.func @transform_5(%arg0: i32) -> (i32, i32) {
    %c0_i32 = arith.constant 0 : i32
    %c0_i32_0 = arith.constant 0 : i32
    %c0_i32_1 = arith.constant 0 : i32
    return %c0_i32, %c0_i32_0 : i32, i32
  }
}

</mosaic_0001>

<llo_original>
// kernel: joint_model_apply.1
$region0: #{joint_model_apply.1}
  #allocation0 [shape = 'u32[]', space=smem, size = 0x4, offset = 0x4, fixed_abs, tag = 'smem constant byte address 0x4 - core index']
  #allocation1 [shape = 'u32[144,128]{1,0:T(1,128)}', space=vmem, size = 0x12000, scoped, tag = 'internal scratch']
  #allocation2 [shape = 'f32[8,128]{1,0:T(8,128)}', space=vmem, size = 0x1000, scoped, tag = 'scratch operand']
  #allocation3 [shape = 'f32[8,128]{1,0:T(8,128)}', space=vmem, size = 0x1000, scoped, tag = 'scratch operand']
  #allocation4 [shape = 'f32[64,512]{1,0:T(8,128)}', space=vmem, size = 0x20000, scoped, tag = 'scratch operand']
  %s0 = inlined_call_operand.vmem [shape: f32[64,16], index: 0, kind: input, shape index: {}]
  %s1 = inlined_call_operand.vmem [shape: f32[16,512], index: 1, kind: input, shape index: {}]
  %s2 = inlined_call_operand.hbm [shape: bf16[128,512], index: 2, kind: input, shape index: {}]
  %s3 = inlined_call_operand.hbm [shape: f32[128,128], index: 3, kind: input, shape index: {}]
  %s4 = inlined_call_operand.vmem [shape: f32[1,128], index: 4, kind: input, shape index: {}]
  %s5 = inlined_call_operand.vmem [shape: f32[64,128], index: 5, kind: output, shape index: {}]
  %s6 = sld [smem:[#allocation0]]
  $region38: #{joint_model_apply.1} parent=0
    _
  %s8 = ssub.s32 1, %s6
  %s9 = scalar_select 0, %s8, %s6
  $region1: #{joint_model_apply.1} parent=0
    #allocation5 [shape = 'u8[131072]{0}', space=vmem, size = 0x20000, scoped, tag = 'input window, operand 2, single buffered']
    #allocation6 [shape = 's32[1]{0}', space=sflag, size = 0x4, scoped, tag = 'scoped memory for joint_model_apply.1']
    #allocation7 [shape = 'u8[65536]{0}', space=vmem, size = 0x10000, scoped, tag = 'input window, operand 3, single buffered']
    #allocation8 [shape = 's32[1]{0}', space=sflag, size = 0x4, scoped, tag = 'scoped memory for joint_model_apply.1']
    %10 = vsyncpa [#allocation6], 0
    %11 = vsyncpa [#allocation8], 0
    // Predicated region
    $region2: #{joint_model_apply.1} parent=1 // pred_check
      _
    $region3: #{joint_model_apply.1} parent=1 // pred_check_branch
      %13 = sbr.rel (0) target = $region5
    $region4: #{joint_model_apply.1} parent=1 // pred_region
      _
    $region5: #{joint_model_apply.1} parent=1 // pred_fallthru
      _
    // Predicated region
    $region6: #{joint_model_apply.1} parent=1 // pred_check
      _
    $region7: #{joint_model_apply.1} parent=1 // pred_check_branch
      %15 = sbr.rel (0) target = $region9
    $region8: #{joint_model_apply.1} parent=1 // pred_region
      _
    $region9: #{joint_model_apply.1} parent=1 // pred_fallthru
      _
    // Predicated region
    $region10: #{joint_model_apply.1} parent=1 // pred_check
      _
    $region11: #{joint_model_apply.1} parent=1 // pred_check_branch
      %17 = sbr.rel (0) target = $region13
    $region12: #{joint_model_apply.1} parent=1 // pred_region
      %s19 = ssub.s32 4096, 4096
      %20 = vsyncadd [#allocation6], %s19
      %s21 = sshll.u32 [#allocation5], 4
      %s22 = int_to_ptr.vmem [resolvable:$true] %s21
      %27 = dma.hbm_to_vmem [thread:$0]  %s2, 4096, %s22, [#allocation6], 256, 256, 16
    $region13: #{joint_model_apply.1} parent=1 // pred_fallthru
      _
    // Predicated region
    $region14: #{joint_model_apply.1} parent=1 // pred_check
      _
    $region15: #{joint_model_apply.1} parent=1 // pred_check_branch
      %29 = sbr.rel (0) target = $region17
    $region16: #{joint_model_apply.1} parent=1 // pred_region
      %s31 = ssub.s32 2048, 2048
      %32 = vsyncadd [#allocation8], %s31
      %s33 = sshll.u32 [#allocation7], 4
      %s34 = int_to_ptr.vmem [resolvable:$true] %s33
      %39 = dma.hbm_to_vmem [thread:$0]  %s3, 2048, %s34, [#allocation8], 128, 128, 8
    $region17: #{joint_model_apply.1} parent=1 // pred_fallthru
      _
    // Predicated region
    $region18: #{joint_model_apply.1} parent=1 // pred_check
      _
    $region19: #{joint_model_apply.1} parent=1 // pred_check_branch
      %41 = sbr.rel (0) target = $region21
    $region20: #{joint_model_apply.1} parent=1 // pred_region
      _
    $region21: #{joint_model_apply.1} parent=1 // pred_fallthru
      _
    // Predicated region
    $region22: #{joint_model_apply.1} parent=1 // pred_check
      _
    $region23: #{joint_model_apply.1} parent=1 // pred_check_branch
      %43 = sbr.rel (0) target = $region25
    $region24: #{joint_model_apply.1} parent=1 // pred_region
      %44 = dma.done [#allocation6], 4096
    $region25: #{joint_model_apply.1} parent=1 // pred_fallthru
      _
    // Predicated region
    $region26: #{joint_model_apply.1} parent=1 // pred_check
      _
    $region27: #{joint_model_apply.1} parent=1 // pred_check_branch
      %46 = sbr.rel (0) target = $region29
    $region28: #{joint_model_apply.1} parent=1 // pred_region
      %47 = dma.done [#allocation8], 2048
    $region29: #{joint_model_apply.1} parent=1 // pred_fallthru
      _
    %v49 = vld [vmem:[%s0] sm:$0xff]
    %v50 = vld [vmem:[%s0 + $0x8] sm:$0xff]
    %v51 = vld [vmem:[%s0 + $0x10] sm:$0xff]
    %v52 = vld [vmem:[%s0 + $0x18] sm:$0xff]
    %v53 = vld [vmem:[%s0 + $0x20] sm:$0xff]
    %v54 = vld [vmem:[%s0 + $0x28] sm:$0xff]
    %v55 = vld [vmem:[%s0 + $0x30] sm:$0xff]
    %v56 = vld [vmem:[%s0 + $0x38] sm:$0xff]
    %v57 = vld [vmem:[%s1] sm:$0xff]
    %v58 = vld [vmem:[%s1 + $0x8] sm:$0xff]
    %v59 = vld [vmem:[%s1 + $0x10] sm:$0xff]
    %v60 = vld [vmem:[%s1 + $0x18] sm:$0xff]
    %v61 = vld [vmem:[%s1 + $0x20] sm:$0xff]
    %v62 = vld [vmem:[%s1 + $0x28] sm:$0xff]
    %v63 = vld [vmem:[%s1 + $0x30] sm:$0xff]
    %v64 = vld [vmem:[%s1 + $0x38] sm:$0xff]
    %vm65 = vcmask 130048
    %v67 = vsel %vm65, %v49, 0
    %v70 = vsel %vm65, %v50, 0
    %v73 = vsel %vm65, %v51, 0
    %v76 = vsel %vm65, %v52, 0
    %v79 = vsel %vm65, %v53, 0
    %v82 = vsel %vm65, %v54, 0
    %v85 = vsel %vm65, %v55, 0
    %v88 = vsel %vm65, %v56, 0
    %90 = vmatprep.subr.mxu0 %v58
    %91 = vmatpush1.msra.mxu0 %v57
    %92 = vmatprep.subr.mxu0 %v62
    %93 = vmatpush1.msra.mxu0 %v61
    %94 = vmatprep.subr.mxu0 0.0
    %95 = vmatpush1.msra.mxu0 0.0
    %96 = vmatprep.subr.mxu0 0.0
    %97 = vmatpush1.msra.mxu0 0.0
    %98 = vmatprep.subr.mxu0 0.0
    %99 = vmatpush1.msra.mxu0 0.0
    %100 = vmatprep.subr.mxu0 0.0
    %101 = vmatpush1.msra.mxu0 0.0
    %102 = vmatprep.subr.mxu0 0.0
    %103 = vmatpush1.msra.mxu0 0.0
    %104 = vmatprep.subr.mxu0 0.0
    %105 = vmatpush1.msra.mxu0 0.0
    %106 = vmatprep.subr.mxu0 0.0
    %107 = vmatpush1.msra.mxu0 0.0
    %108 = vmatprep.subr.mxu0 0.0
    %109 = vmatpush1.msra.mxu0 0.0
    %110 = vmatprep.subr.mxu0 0.0
    %111 = vmatpush1.msra.mxu0 0.0
    %112 = vmatprep.subr.mxu0 0.0
    %113 = vmatpush1.msra.mxu0 0.0
    %114 = vmatprep.subr.mxu0 0.0
    %115 = vmatpush1.msra.mxu0 0.0
    %116 = vmatprep.subr.mxu0 0.0
    %117 = vmatpush1.msra.mxu0 0.0
    %118 = vmatprep.subr.mxu0 0.0
    %119 = vmatpush1.msra.mxu0 0.0
    %120 = vmatprep.subr.mxu0 0.0
    %121 = vmatpush1.msra.mxu0 0.0
    %122 = vmatprep.subr.mxu0 0.0
    %123 = vmatpush1.msra.mxu0 0.0
    %124 = vmatprep.subr.mxu0 0.0
    %125 = vmatpush1.msra.mxu0 0.0
    %126 = vmatprep.subr.mxu0 0.0
    %127 = vmatpush1.msra.mxu0 0.0
    %128 = vmatprep.subr.mxu0 0.0
    %129 = vmatpush1.msra.mxu0 0.0
    %130 = vmatprep.subr.mxu0 0.0
    %131 = vmatpush1.msra.mxu0 0.0
    %132 = vmatprep.subr.mxu0 0.0
    %133 = vmatpush1.msra.mxu0 0.0
    %134 = vmatprep.subr.mxu0 0.0
    %135 = vmatpush1.msra.mxu0 0.0
    %136 = vmatprep.subr.mxu0 0.0
    %137 = vmatpush1.msra.mxu0 0.0
    %138 = vmatprep.subr.mxu0 0.0
    %139 = vmatpush1.msra.mxu0 0.0
    %140 = vmatprep.subr.mxu0 0.0
    %141 = vmatpush1.msra.mxu0 0.0
    %142 = vmatprep.subr.mxu0 0.0
    %143 = vmatpush1.msra.mxu0 0.0
    %144 = vmatprep.subr.mxu0 0.0
    %145 = vmatpush1.msra.mxu0 0.0
    %146 = vmatprep.subr.mxu0 0.0
    %147 = vmatpush1.msra.mxu0 0.0
    %148 = vmatprep.subr.mxu0 0.0
    %149 = vmatpush1.msra.mxu0 0.0
    %150 = vmatprep.subr.mxu0 0.0
    %151 = vmatpush1.msra.mxu0 0.0
    %152 = vmatprep.subr.mxu0 0.0
    %153 = vmatpush1.msra.mxu0 0.0
    %154 = vmatprep.mubr.f32.mxu0 0.0
    %155 = vmatmul.mubr.f32.gmra.mrb[0].mxu0 %v67
    %v156 = vpop.f32.mrb[0].mxu0
    %v157 = vadd.f32 0.0, %v156
    %v158 = vpop.f32.mrb[0].mxu0
    %v159 = vadd.f32 0.0, %v158
    %160 = vmatprep.mubr.f32.mxu0 0.0
    %161 = vmatmul.mubr.f32.gmra.mrb[0].mxu0 %v70
    %v162 = vpop.f32.mrb[0].mxu0
    %v163 = vadd.f32 0.0, %v162
    %v164 = vpop.f32.mrb[0].mxu0
    %v165 = vadd.f32 0.0, %v164
    %166 = vmatprep.mubr.f32.mxu0 0.0
    %167 = vmatmul.mubr.f32.gmra.mrb[0].mxu0 %v73
    %v168 = vpop.f32.mrb[0].mxu0
    %v169 = vadd.f32 0.0, %v168
    %v170 = vpop.f32.mrb[0].mxu0
    %v171 = vadd.f32 0.0, %v170
    %172 = vmatprep.mubr.f32.mxu0 0.0
    %173 = vmatmul.mubr.f32.gmra.mrb[0].mxu0 %v76
    %v174 = vpop.f32.mrb[0].mxu0
    %v175 = vadd.f32 0.0, %v174
    %v176 = vpop.f32.mrb[0].mxu0
    %v177 = vadd.f32 0.0, %v176
    %178 = vmatprep.mubr.f32.mxu0 0.0
    %179 = vmatmul.mubr.f32.gmra.mrb[0].mxu0 %v79
    %v180 = vpop.f32.mrb[0].mxu0
    %v181 = vadd.f32 0.0, %v180
    %v182 = vpop.f32.mrb[0].mxu0
    %v183 = vadd.f32 0.0, %v182
    %184 = vmatprep.mubr.f32.mxu0 0.0
    %185 = vmatmul.mubr.f32.gmra.mrb[0].mxu0 %v82
    %v186 = vpop.f32.mrb[0].mxu0
    %v187 = vadd.f32 0.0, %v186
    %v188 = vpop.f32.mrb[0].mxu0
    %v189 = vadd.f32 0.0, %v188
    %190 = vmatprep.mubr.f32.mxu0 0.0
    %191 = vmatmul.mubr.f32.gmra.mrb[0].mxu0 %v85
    %v192 = vpop.f32.mrb[0].mxu0
    %v193 = vadd.f32 0.0, %v192
    %v194 = vpop.f32.mrb[0].mxu0
    %v195 = vadd.f32 0.0, %v194
    %196 = vmatprep.mubr.f32.mxu0 0.0
    %197 = vmatmul.mubr.f32.gmra.mrb[0].mxu0 %v88
    %v198 = vpop.f32.mrb[0].mxu0
    %v199 = vadd.f32 0.0, %v198
    %v200 = vpop.f32.mrb[0].mxu0
    %v201 = vadd.f32 0.0, %v200
    %202 = vdwg.mxu0
    %203 = vmatprep.subr.mxu0 %v60
    %204 = vmatpush1.msra.mxu0 %v59
    %205 = vmatprep.subr.mxu0 %v64
    %206 = vmatpush1.msra.mxu0 %v63
    %207 = vmatprep.subr.mxu0 0.0
    %208 = vmatpush1.msra.mxu0 0.0
    %209 = vmatprep.subr.mxu0 0.0
    %210 = vmatpush1.msra.mxu0 0.0
    %211 = vmatprep.subr.mxu0 0.0
    %212 = vmatpush1.msra.mxu0 0.0
    %213 = vmatprep.subr.mxu0 0.0
    %214 = vmatpush1.msra.mxu0 0.0
    %215 = vmatprep.subr.mxu0 0.0
    %216 = vmatpush1.msra.mxu0 0.0
    %217 = vmatprep.subr.mxu0 0.0
    %218 = vmatpush1.msra.mxu0 0.0
    %219 = vmatprep.subr.mxu0 0.0
    %220 = vmatpush1.msra.mxu0 0.0
    %221 = vmatprep.subr.mxu0 0.0
    %222 = vmatpush1.msra.mxu0 0.0
    %223 = vmatprep.subr.mxu0 0.0
    %224 = vmatpush1.msra.mxu0 0.0
    %225 = vmatprep.subr.mxu0 0.0
    %226 = vmatpush1.msra.mxu0 0.0
    %227 = vmatprep.subr.mxu0 0.0
    %228 = vmatpush1.msra.mxu0 0.0
    %229 = vmatprep.subr.mxu0 0.0
    %230 = vmatpush1.msra.mxu0 0.0
    %231 = vmatprep.subr.mxu0 0.0
    %232 = vmatpush1.msra.mxu0 0.0
    %233 = vmatprep.subr.mxu0 0.0
    %234 = vmatpush1.msra.mxu0 0.0
    %235 = vmatprep.subr.mxu0 0.0
    %236 = vmatpush1.msra.mxu0 0.0
    %237 = vmatprep.subr.mxu0 0.0
    %238 = vmatpush1.msra.mxu0 0.0
    %239 = vmatprep.subr.mxu0 0.0
    %240 = vmatpush1.msra.mxu0 0.0
    %241 = vmatprep.subr.mxu0 0.0
    %242 = vmatpush1.msra.mxu0 0.0
    %243 = vmatprep.subr.mxu0 0.0
    %244 = vmatpush1.msra.mxu0 0.0
    %245 = vmatprep.subr.mxu0 0.0
    %246 = vmatpush1.msra.mxu0 0.0
    %247 = vmatprep.subr.mxu0 0.0
    %248 = vmatpush1.msra.mxu0 0.0
    %249 = vmatprep.subr.mxu0 0.0
    %250 = vmatpush1.msra.mxu0 0.0
    %251 = vmatprep.subr.mxu0 0.0
    %252 = vmatpush1.msra.mxu0 0.0
    %253 = vmatprep.subr.mxu0 0.0
    %254 = vmatpush1.msra.mxu0 0.0
    %255 = vmatprep.subr.mxu0 0.0
    %256 = vmatpush1.msra.mxu0 0.0
    %257 = vmatprep.subr.mxu0 0.0
    %258 = vmatpush1.msra.mxu0 0.0
    %259 = vmatprep.subr.mxu0 0.0
    %260 = vmatpush1.msra.mxu0 0.0
    %261 = vmatprep.subr.mxu0 0.0
    %262 = vmatpush1.msra.mxu0 0.0
    %263 = vmatprep.subr.mxu0 0.0
    %264 = vmatpush1.msra.mxu0 0.0
    %265 = vmatprep.subr.mxu0 0.0
    %266 = vmatpush1.msra.mxu0 0.0
    %267 = vmatprep.mubr.f32.mxu0 0.0
    %268 = vmatmul.mubr.f32.gmra.mrb[0].mxu0 %v67
    %v269 = vpop.f32.mrb[0].mxu0
    %v270 = vadd.f32 0.0, %v269
    %v271 = vpop.f32.mrb[0].mxu0
    %v272 = vadd.f32 0.0, %v271
    %273 = vmatprep.mubr.f32.mxu0 0.0
    %274 = vmatmul.mubr.f32.gmra.mrb[0].mxu0 %v70
    %v275 = vpop.f32.mrb[0].mxu0
    %v276 = vadd.f32 0.0, %v275
    %v277 = vpop.f32.mrb[0].mxu0
    %v278 = vadd.f32 0.0, %v277
    %279 = vmatprep.mubr.f32.mxu0 0.0
    %280 = vmatmul.mubr.f32.gmra.mrb[0].mxu0 %v73
    %v281 = vpop.f32.mrb[0].mxu0
    %v282 = vadd.f32 0.0, %v281
    %v283 = vpop.f32.mrb[0].mxu0
    %v284 = vadd.f32 0.0, %v283
    %285 = vmatprep.mubr.f32.mxu0 0.0
    %286 = vmatmul.mubr.f32.gmra.mrb[0].mxu0 %v76
    %v287 = vpop.f32.mrb[0].mxu0
    %v288 = vadd.f32 0.0, %v287
    %v289 = vpop.f32.mrb[0].mxu0
    %v290 = vadd.f32 0.0, %v289
    %291 = vmatprep.mubr.f32.mxu0 0.0
    %292 = vmatmul.mubr.f32.gmra.mrb[0].mxu0 %v79
    %v293 = vpop.f32.mrb[0].mxu0
    %v294 = vadd.f32 0.0, %v293
    %v295 = vpop.f32.mrb[0].mxu0
    %v296 = vadd.f32 0.0, %v295
    %297 = vmatprep.mubr.f32.mxu0 0.0
    %298 = vmatmul.mubr.f32.gmra.mrb[0].mxu0 %v82
    %v299 = vpop.f32.mrb[0].mxu0
    %v300 = vadd.f32 0.0, %v299
    %v301 = vpop.f32.mrb[0].mxu0
    %v302 = vadd.f32 0.0, %v301
    %303 = vmatprep.mubr.f32.mxu0 0.0
    %304 = vmatmul.mubr.f32.gmra.mrb[0].mxu0 %v85
    %v305 = vpop.f32.mrb[0].mxu0
    %v306 = vadd.f32 0.0, %v305
    %v307 = vpop.f32.mrb[0].mxu0
    %v308 = vadd.f32 0.0, %v307
    %309 = vmatprep.mubr.f32.mxu0 0.0
    %310 = vmatmul.mubr.f32.gmra.mrb[0].mxu0 %v88
    %v311 = vpop.f32.mrb[0].mxu0
    %v312 = vadd.f32 0.0, %v311
    %v313 = vpop.f32.mrb[0].mxu0
    %v314 = vadd.f32 0.0, %v313
    %315 = vdwg.mxu0
    %316 = vst [vmem:[#allocation4] sm:$0xff] %v157
    %317 = vst [vmem:[#allocation4 + $0x8] sm:$0xff] %v159
    %318 = vst [vmem:[#allocation4 + $0x10] sm:$0xff] %v270
    %319 = vst [vmem:[#allocation4 + $0x18] sm:$0xff] %v272
    %320 = vst [vmem:[#allocation4 + $0x20] sm:$0xff] %v163
    %321 = vst [vmem:[#allocation4 + $0x28] sm:$0xff] %v165
    %322 = vst [vmem:[#allocation4 + $0x30] sm:$0xff] %v276
    %323 = vst [vmem:[#allocation4 + $0x38] sm:$0xff] %v278
    %324 = vst [vmem:[#allocation4 + $0x40] sm:$0xff] %v169
    %325 = vst [vmem:[#allocation4 + $0x48] sm:$0xff] %v171
    %326 = vst [vmem:[#allocation4 + $0x50] sm:$0xff] %v282
    %327 = vst [vmem:[#allocation4 + $0x58] sm:$0xff] %v284
    %328 = vst [vmem:[#allocation4 + $0x60] sm:$0xff] %v175
    %329 = vst [vmem:[#allocation4 + $0x68] sm:$0xff] %v177
    %330 = vst [vmem:[#allocation4 + $0x70] sm:$0xff] %v288
    %331 = vst [vmem:[#allocation4 + $0x78] sm:$0xff] %v290
    %332 = vst [vmem:[#allocation4 + $0x80] sm:$0xff] %v181
    %333 = vst [vmem:[#allocation4 + $0x88] sm:$0xff] %v183
    %334 = vst [vmem:[#allocation4 + $0x90] sm:$0xff] %v294
    %335 = vst [vmem:[#allocation4 + $0x98] sm:$0xff] %v296
    %336 = vst [vmem:[#allocation4 + $0xa0] sm:$0xff] %v187
    %337 = vst [vmem:[#allocation4 + $0xa8] sm:$0xff] %v189
    %338 = vst [vmem:[#allocation4 + $0xb0] sm:$0xff] %v300
    %339 = vst [vmem:[#allocation4 + $0xb8] sm:$0xff] %v302
    %340 = vst [vmem:[#allocation4 + $0xc0] sm:$0xff] %v193
    %341 = vst [vmem:[#allocation4 + $0xc8] sm:$0xff] %v195
    %342 = vst [vmem:[#allocation4 + $0xd0] sm:$0xff] %v306
    %343 = vst [vmem:[#allocation4 + $0xd8] sm:$0xff] %v308
    %344 = vst [vmem:[#allocation4 + $0xe0] sm:$0xff] %v199
    %345 = vst [vmem:[#allocation4 + $0xe8] sm:$0xff] %v201
    %346 = vst [vmem:[#allocation4 + $0xf0] sm:$0xff] %v312
    %347 = vst [vmem:[#allocation4 + $0xf8] sm:$0xff] %v314
    %348 = vst [vmem:[#allocation2] sm:$0xff] 0.0
    %349 = vst [vmem:[#allocation3] sm:$0xff] 0.0
    %s350 = smul.u32 0, 4
    %s351 = smul.addr %s350, 8
    %s352 = scalar_lea.vmem [#allocation4], %s351
    %v353 = vld [vmem:[%s352] sm:$0xff]
    %v354 = vld [vmem:[%s352 + $0x8] sm:$0xff]
    %v355 = vld [vmem:[%s352 + $0x10] sm:$0xff]
    %v356 = vld [vmem:[%s352 + $0x18] sm:$0xff]
    %v357 = vld [vmem:[#allocation2] sm:$0xff]
    %v358 = vpack.c.bf16 %v357, %v357
    %v359 = vld [vmem:[#allocation5] sm:$0xff]
    %v360 = vld [vmem:[#allocation5 + $0x8] sm:$0xff]
    %v361 = vld [vmem:[#allocation5 + $0x10] sm:$0xff]
    %v362 = vld [vmem:[#allocation5 + $0x18] sm:$0xff]
    %v363 = vld [vmem:[#allocation5 + $0x20] sm:$0xff]
    %v364 = vld [vmem:[#allocation5 + $0x28] sm:$0xff]
    %v365 = vld [vmem:[#allocation5 + $0x30] sm:$0xff]
    %v366 = vld [vmem:[#allocation5 + $0x38] sm:$0xff]
    %v367 = vld [vmem:[#allocation5 + $0x40] sm:$0xff]
    %v368 = vld [vmem:[#allocation5 + $0x48] sm:$0xff]
    %v369 = vld [vmem:[#allocation5 + $0x50] sm:$0xff]
    %v370 = vld [vmem:[#allocation5 + $0x58] sm:$0xff]
    %v371 = vld [vmem:[#allocation5 + $0x60] sm:$0xff]
    %v372 = vld [vmem:[#allocation5 + $0x68] sm:$0xff]
    %v373 = vld [vmem:[#allocation5 + $0x70] sm:$0xff]
    %v374 = vld [vmem:[#allocation5 + $0x78] sm:$0xff]
    %v375 = vld [vmem:[#allocation5 + $0x80] sm:$0xff]
    %v376 = vld [vmem:[#allocation5 + $0x88] sm:$0xff]
    %v377 = vld [vmem:[#allocation5 + $0x90] sm:$0xff]
    %v378 = vld [vmem:[#allocation5 + $0x98] sm:$0xff]
    %v379 = vld [vmem:[#allocation5 + $0xa0] sm:$0xff]
    %v380 = vld [vmem:[#allocation5 + $0xa8] sm:$0xff]
    %v381 = vld [vmem:[#allocation5 + $0xb0] sm:$0xff]
    %v382 = vld [vmem:[#allocation5 + $0xb8] sm:$0xff]
    %v383 = vld [vmem:[#allocation5 + $0xc0] sm:$0xff]
    %v384 = vld [vmem:[#allocation5 + $0xc8] sm:$0xff]
    %v385 = vld [vmem:[#allocation5 + $0xd0] sm:$0xff]
    %v386 = vld [vmem:[#allocation5 + $0xd8] sm:$0xff]
    %v387 = vld [vmem:[#allocation5 + $0xe0] sm:$0xff]
    %v388 = vld [vmem:[#allocation5 + $0xe8] sm:$0xff]
    %v389 = vld [vmem:[#allocation5 + $0xf0] sm:$0xff]
    %v390 = vld [vmem:[#allocation5 + $0xf8] sm:$0xff]
    %v423 = vunpack.c.l.b16 %v359
    %v424 = vunpack.c.h.b16 %v359
    %v425 = vunpack.c.l.b16 %v360
    %v426 = vunpack.c.h.b16 %v360
    %v427 = vunpack.c.l.b16 %v361
    %v428 = vunpack.c.h.b16 %v361
    %v429 = vunpack.c.l.b16 %v362
    %v430 = vunpack.c.h.b16 %v362
    %v431 = vunpack.c.l.b16 %v363
    %v432 = vunpack.c.h.b16 %v363
    %v433 = vunpack.c.l.b16 %v364
    %v434 = vunpack.c.h.b16 %v364
    %v435 = vunpack.c.l.b16 %v365
    %v436 = vunpack.c.h.b16 %v365
    %v437 = vunpack.c.l.b16 %v366
    %v438 = vunpack.c.h.b16 %v366
    %v439 = vunpack.c.l.b16 %v367
    %v440 = vunpack.c.h.b16 %v367
    %v441 = vunpack.c.l.b16 %v368
    %v442 = vunpack.c.h.b16 %v368
    %v443 = vunpack.c.l.b16 %v369
    %v444 = vunpack.c.h.b16 %v369
    %v445 = vunpack.c.l.b16 %v370
    %v446 = vunpack.c.h.b16 %v370
    %v447 = vunpack.c.l.b16 %v371
    %v448 = vunpack.c.h.b16 %v371
    %v449 = vunpack.c.l.b16 %v372
    %v450 = vunpack.c.h.b16 %v372
    %v451 = vunpack.c.l.b16 %v373
    %v452 = vunpack.c.h.b16 %v373
    %v453 = vunpack.c.l.b16 %v374
    %v454 = vunpack.c.h.b16 %v374
    %v455 = vunpack.c.l.b16 %v375
    %v456 = vunpack.c.h.b16 %v375
    %v457 = vunpack.c.l.b16 %v376
    %v458 = vunpack.c.h.b16 %v376
    %v459 = vunpack.c.l.b16 %v377
    %v460 = vunpack.c.h.b16 %v377
    %v461 = vunpack.c.l.b16 %v378
    %v462 = vunpack.c.h.b16 %v378
    %v463 = vunpack.c.l.b16 %v379
    %v464 = vunpack.c.h.b16 %v379
    %v465 = vunpack.c.l.b16 %v380
    %v466 = vunpack.c.h.b16 %v380
    %v467 = vunpack.c.l.b16 %v381
    %v468 = vunpack.c.h.b16 %v381
    %v469 = vunpack.c.l.b16 %v382
    %v470 = vunpack.c.h.b16 %v382
    %v471 = vunpack.c.l.b16 %v383
    %v472 = vunpack.c.h.b16 %v383
    %v473 = vunpack.c.l.b16 %v384
    %v474 = vunpack.c.h.b16 %v384
    %v475 = vunpack.c.l.b16 %v385
    %v476 = vunpack.c.h.b16 %v385
    %v477 = vunpack.c.l.b16 %v386
    %v478 = vunpack.c.h.b16 %v386
    %v479 = vunpack.c.l.b16 %v387
    %v480 = vunpack.c.h.b16 %v387
    %v481 = vunpack.c.l.b16 %v388
    %v482 = vunpack.c.h.b16 %v388
    %v483 = vunpack.c.l.b16 %v389
    %v484 = vunpack.c.h.b16 %v389
    %v485 = vunpack.c.l.b16 %v390
    %v486 = vunpack.c.h.b16 %v390
    %v487 = vpack.c.b16 %v427, %v423
    %v488 = vpack.c.b16 %v428, %v424
    %v489 = vpack.c.b16 %v429, %v425
    %v490 = vpack.c.b16 %v430, %v426
    %v491 = vpack.c.b16 %v435, %v431
    %v492 = vpack.c.b16 %v436, %v432
    %v493 = vpack.c.b16 %v437, %v433
    %v494 = vpack.c.b16 %v438, %v434
    %v495 = vpack.c.b16 %v443, %v439
    %v496 = vpack.c.b16 %v444, %v440
    %v497 = vpack.c.b16 %v445, %v441
    %v498 = vpack.c.b16 %v446, %v442
    %v499 = vpack.c.b16 %v451, %v447
    %v500 = vpack.c.b16 %v452, %v448
    %v501 = vpack.c.b16 %v453, %v449
    %v502 = vpack.c.b16 %v454, %v450
    %v503 = vpack.c.b16 %v459, %v455
    %v504 = vpack.c.b16 %v460, %v456
    %v505 = vpack.c.b16 %v461, %v457
    %v506 = vpack.c.b16 %v462, %v458
    %v507 = vpack.c.b16 %v467, %v463
    %v508 = vpack.c.b16 %v468, %v464
    %v509 = vpack.c.b16 %v469, %v465
    %v510 = vpack.c.b16 %v470, %v466
    %v511 = vpack.c.b16 %v475, %v471
    %v512 = vpack.c.b16 %v476, %v472
    %v513 = vpack.c.b16 %v477, %v473
    %v514 = vpack.c.b16 %v478, %v474
    %v515 = vpack.c.b16 %v483, %v479
    %v516 = vpack.c.b16 %v484, %v480
    %v517 = vpack.c.b16 %v485, %v481
    %v518 = vpack.c.b16 %v486, %v482
    %551 = vmatprep.subr.bf16.mxu0 %v488
    %552 = vmatpush1.bf16.msra.mxu0 %v487
    %553 = vmatprep.subr.bf16.mxu0 %v492
    %554 = vmatpush1.bf16.msra.mxu0 %v491
    %555 = vmatprep.subr.bf16.mxu0 %v496
    %556 = vmatpush1.bf16.msra.mxu0 %v495
    %557 = vmatprep.subr.bf16.mxu0 %v500
    %558 = vmatpush1.bf16.msra.mxu0 %v499
    %559 = vmatprep.subr.bf16.mxu0 %v504
    %560 = vmatpush1.bf16.msra.mxu0 %v503
    %561 = vmatprep.subr.bf16.mxu0 %v508
    %562 = vmatpush1.bf16.msra.mxu0 %v507
    %563 = vmatprep.subr.bf16.mxu0 %v512
    %564 = vmatpush1.bf16.msra.mxu0 %v511
    %565 = vmatprep.subr.bf16.mxu0 %v516
    %566 = vmatpush1.bf16.msra.mxu0 %v515
    %567 = vmatprep.subr.bf16.mxu0 0
    %568 = vmatpush1.bf16.msra.mxu0 0
    %569 = vmatprep.subr.bf16.mxu0 0
    %570 = vmatpush1.bf16.msra.mxu0 0
    %571 = vmatprep.subr.bf16.mxu0 0
    %572 = vmatpush1.bf16.msra.mxu0 0
    %573 = vmatprep.subr.bf16.mxu0 0
    %574 = vmatpush1.bf16.msra.mxu0 0
    %575 = vmatprep.subr.bf16.mxu0 0
    %576 = vmatpush1.bf16.msra.mxu0 0
    %577 = vmatprep.subr.bf16.mxu0 0
    %578 = vmatpush1.bf16.msra.mxu0 0
    %579 = vmatprep.subr.bf16.mxu0 0
    %580 = vmatpush1.bf16.msra.mxu0 0
    %581 = vmatprep.subr.bf16.mxu0 0
    %582 = vmatpush1.bf16.msra.mxu0 0
    %583 = vmatprep.mubr.bf16.mxu0 0
    %584 = vmatmul.mubr.bf16.gmra.mrb[0].mxu0 %v358
    %v585 = vpop.f32.mrb[0].mxu0
    %v586 = vadd.f32 0.0, %v585
    %v587 = vpop.f32.mrb[0].mxu0
    %v588 = vadd.f32 0.0, %v587
    %v589 = vpop.f32.mrb[0].mxu0
    %v590 = vpop.f32.mrb[0].mxu0
    %591 = vdwg.mxu0
    %592 = vmatprep.subr.bf16.mxu0 %v490
    %593 = vmatpush1.bf16.msra.mxu0 %v489
    %594 = vmatprep.subr.bf16.mxu0 %v494
    %595 = vmatpush1.bf16.msra.mxu0 %v493
    %596 = vmatprep.subr.bf16.mxu0 %v498
    %597 = vmatpush1.bf16.msra.mxu0 %v497
    %598 = vmatprep.subr.bf16.mxu0 %v502
    %599 = vmatpush1.bf16.msra.mxu0 %v501
    %600 = vmatprep.subr.bf16.mxu0 %v506
    %601 = vmatpush1.bf16.msra.mxu0 %v505
    %602 = vmatprep.subr.bf16.mxu0 %v510
    %603 = vmatpush1.bf16.msra.mxu0 %v509
    %604 = vmatprep.subr.bf16.mxu0 %v514
    %605 = vmatpush1.bf16.msra.mxu0 %v513
    %606 = vmatprep.subr.bf16.mxu0 %v518
    %607 = vmatpush1.bf16.msra.mxu0 %v517
    %608 = vmatprep.subr.bf16.mxu0 0
    %609 = vmatpush1.bf16.msra.mxu0 0
    %610 = vmatprep.subr.bf16.mxu0 0
    %611 = vmatpush1.bf16.msra.mxu0 0
    %612 = vmatprep.subr.bf16.mxu0 0
    %613 = vmatpush1.bf16.msra.mxu0 0
    %614 = vmatprep.subr.bf16.mxu0 0
    %615 = vmatpush1.bf16.msra.mxu0 0
    %616 = vmatprep.subr.bf16.mxu0 0
    %617 = vmatpush1.bf16.msra.mxu0 0
    %618 = vmatprep.subr.bf16.mxu0 0
    %619 = vmatpush1.bf16.msra.mxu0 0
    %620 = vmatprep.subr.bf16.mxu0 0
    %621 = vmatpush1.bf16.msra.mxu0 0
    %622 = vmatprep.subr.bf16.mxu0 0
    %623 = vmatpush1.bf16.msra.mxu0 0
    %624 = vmatprep.mubr.bf16.mxu0 0
    %625 = vmatmul.mubr.bf16.gmra.mrb[0].mxu0 %v358
    %v626 = vpop.f32.mrb[0].mxu0
    %v627 = vadd.f32 0.0, %v626
    %v628 = vpop.f32.mrb[0].mxu0
    %v629 = vadd.f32 0.0, %v628
    %v630 = vpop.f32.mrb[0].mxu0
    %v631 = vpop.f32.mrb[0].mxu0
    %632 = vdwg.mxu0
    %v633 = vadd.f32 %v353, %v586
    %v634 = vadd.f32 %v354, %v588
    %v635 = vadd.f32 %v355, %v627
    %v636 = vadd.f32 %v356, %v629
    %v637 = vxor.u32 %v633, 2147483648
    %v638 = vmul.f32 %v637, 1.442695
    %v639 = vpow.pop %v638
    %v640 = vadd.f32 %v639, 1.0
    %v641 = vrcp.pop %v640
    %v642 = vmul.f32 1.0, %v641
    %v643 = vxor.u32 %v634, 2147483648
    %v644 = vmul.f32 %v643, 1.442695
    %v645 = vpow.pop %v644
    %v646 = vadd.f32 %v645, 1.0
    %v647 = vrcp.pop %v646
    %v648 = vmul.f32 1.0, %v647
    %v649 = vtanh.pop %v635
    %v650 = vxor.u32 %v636, 2147483648
    %v651 = vmul.f32 %v650, 1.442695
    %v652 = vpow.pop %v651
    %v653 = vadd.f32 %v652, 1.0
    %v654 = vrcp.pop %v653
    %v655 = vmul.f32 1.0, %v654
    %v656 = vld [vmem:[#allocation3] sm:$0xff]
    %v657 = vmul.f32 %v648, %v656
    %v658 = vmul.f32 %v642, %v649
    %v659 = vadd.f32 %v657, %v658
    %v660 = vtanh.pop %v659
    %v661 = vmul.f32 %v655, %v660
    %662 = vst [vmem:[#allocation3] sm:$0xff] %v659
    %663 = vst [vmem:[#allocation2] sm:$0xff] %v661
    %664 = vst [vmem:[%s352] sm:$0xff] %v661
    %s665 = smul.u32 1, 4
    %s666 = smul.addr %s665, 8
    %s667 = scalar_lea.vmem [#allocation4], %s666
    %v668 = vld [vmem:[%s667] sm:$0xff]
    %v669 = vld [vmem:[%s667 + $0x8] sm:$0xff]
    %v670 = vld [vmem:[%s667 + $0x10] sm:$0xff]
    %v671 = vld [vmem:[%s667 + $0x18] sm:$0xff]
    %v672 = vld [vmem:[#allocation2] sm:$0xff]
    %v673 = vpack.c.bf16 %v672, %v672
    %v674 = vld [vmem:[#allocation5] sm:$0xff]
    %v675 = vld [vmem:[#allocation5 + $0x8] sm:$0xff]
    %v676 = vld [vmem:[#allocation5 + $0x10] sm:$0xff]
    %v677 = vld [vmem:[#allocation5 + $0x18] sm:$0xff]
    %v678 = vld [vmem:[#allocation5 + $0x20] sm:$0xff]
    %v679 = vld [vmem:[#allocation5 + $0x28] sm:$0xff]
    %v680 = vld [vmem:[#allocation5 + $0x30] sm:$0xff]
    %v681 = vld [vmem:[#allocation5 + $0x38] sm:$0xff]
    %v682 = vld [vmem:[#allocation5 + $0x40] sm:$0xff]
    %v683 = vld [vmem:[#allocation5 + $0x48] sm:$0xff]
    %v684 = vld [vmem:[#allocation5 + $0x50] sm:$0xff]
    %v685 = vld [vmem:[#allocation5 + $0x58] sm:$0xff]
    %v686 = vld [vmem:[#allocation5 + $0x60] sm:$0xff]
    %v687 = vld [vmem:[#allocation5 + $0x68] sm:$0xff]
    %v688 = vld [vmem:[#allocation5 + $0x70] sm:$0xff]
    %v689 = vld [vmem:[#allocation5 + $0x78] sm:$0xff]
    %v690 = vld [vmem:[#allocation5 + $0x80] sm:$0xff]
    %v691 = vld [vmem:[#allocation5 + $0x88] sm:$0xff]
    %v692 = vld [vmem:[#allocation5 + $0x90] sm:$0xff]
    %v693 = vld [vmem:[#allocation5 + $0x98] sm:$0xff]
    %v694 = vld [vmem:[#allocation5 + $0xa0] sm:$0xff]
    %v695 = vld [vmem:[#allocation5 + $0xa8] sm:$0xff]
    %v696 = vld [vmem:[#allocation5 + $0xb0] sm:$0xff]
    %v697 = vld [vmem:[#allocation5 + $0xb8] sm:$0xff]
    %v698 = vld [vmem:[#allocation5 + $0xc0] sm:$0xff]
    %v699 = vld [vmem:[#allocation5 + $0xc8] sm:$0xff]
    %v700 = vld [vmem:[#allocation5 + $0xd0] sm:$0xff]
    %v701 = vld [vmem:[#allocation5 + $0xd8] sm:$0xff]
    %v702 = vld [vmem:[#allocation5 + $0xe0] sm:$0xff]
    %v703 = vld [vmem:[#allocation5 + $0xe8] sm:$0xff]
    %v704 = vld [vmem:[#allocation5 + $0xf0] sm:$0xff]
    %v705 = vld [vmem:[#allocation5 + $0xf8] sm:$0xff]
    %v738 = vunpack.c.l.b16 %v674
    %v739 = vunpack.c.h.b16 %v674
    %v740 = vunpack.c.l.b16 %v675
    %v741 = vunpack.c.h.b16 %v675
    %v742 = vunpack.c.l.b16 %v676
    %v743 = vunpack.c.h.b16 %v676
    %v744 = vunpack.c.l.b16 %v677
    %v745 = vunpack.c.h.b16 %v677
    %v746 = vunpack.c.l.b16 %v678
    %v747 = vunpack.c.h.b16 %v678
    %v748 = vunpack.c.l.b16 %v679
    %v749 = vunpack.c.h.b16 %v679
    %v750 = vunpack.c.l.b16 %v680
    %v751 = vunpack.c.h.b16 %v680
    %v752 = vunpack.c.l.b16 %v681
    %v753 = vunpack.c.h.b16 %v681
    %v754 = vunpack.c.l.b16 %v682
    %v755 = vunpack.c.h.b16 %v682
    %v756 = vunpack.c.l.b16 %v683
    %v757 = vunpack.c.h.b16 %v683
    %v758 = vunpack.c.l.b16 %v684
    %v759 = vunpack.c.h.b16 %v684
    %v760 = vunpack.c.l.b16 %v685
    %v761 = vunpack.c.h.b16 %v685
    %v762 = vunpack.c.l.b16 %v686
    %v763 = vunpack.c.h.b16 %v686
    %v764 = vunpack.c.l.b16 %v687
    %v765 = vunpack.c.h.b16 %v687
    %v766 = vunpack.c.l.b16 %v688
    %v767 = vunpack.c.h.b16 %v688
    %v768 = vunpack.c.l.b16 %v689
    %v769 = vunpack.c.h.b16 %v689
    %v770 = vunpack.c.l.b16 %v690
    %v771 = vunpack.c.h.b16 %v690
    %v772 = vunpack.c.l.b16 %v691
    %v773 = vunpack.c.h.b16 %v691
    %v774 = vunpack.c.l.b16 %v692
    %v775 = vunpack.c.h.b16 %v692
    %v776 = vunpack.c.l.b16 %v693
    %v777 = vunpack.c.h.b16 %v693
    %v778 = vunpack.c.l.b16 %v694
    %v779 = vunpack.c.h.b16 %v694
    %v780 = vunpack.c.l.b16 %v695
    %v781 = vunpack.c.h.b16 %v695
    %v782 = vunpack.c.l.b16 %v696
    %v783 = vunpack.c.h.b16 %v696
    %v784 = vunpack.c.l.b16 %v697
    %v785 = vunpack.c.h.b16 %v697
    %v786 = vunpack.c.l.b16 %v698
    %v787 = vunpack.c.h.b16 %v698
    %v788 = vunpack.c.l.b16 %v699
    %v789 = vunpack.c.h.b16 %v699
    %v790 = vunpack.c.l.b16 %v700
    %v791 = vunpack.c.h.b16 %v700
    %v792 = vunpack.c.l.b16 %v701
    %v793 = vunpack.c.h.b16 %v701
    %v794 = vunpack.c.l.b16 %v702
    %v795 = vunpack.c.h.b16 %v702
    %v796 = vunpack.c.l.b16 %v703
    %v797 = vunpack.c.h.b16 %v703
    %v798 = vunpack.c.l.b16 %v704
    %v799 = vunpack.c.h.b16 %v704
    %v800 = vunpack.c.l.b16 %v705
    %v801 = vunpack.c.h.b16 %v705
    %v802 = vpack.c.b16 %v742, %v738
    %v803 = vpack.c.b16 %v743, %v739
    %v804 = vpack.c.b16 %v744, %v740
    %v805 = vpack.c.b16 %v745, %v741
    %v806 = vpack.c.b16 %v750, %v746
    %v807 = vpack.c.b16 %v751, %v747
    %v808 = vpack.c.b16 %v752, %v748
    %v809 = vpack.c.b16 %v753, %v749
    %v810 = vpack.c.b16 %v758, %v754
    %v811 = vpack.c.b16 %v759, %v755
    %v812 = vpack.c.b16 %v760, %v756
    %v813 = vpack.c.b16 %v761, %v757
    %v814 = vpack.c.b16 %v766, %v762
    %v815 = vpack.c.b16 %v767, %v763
    %v816 = vpack.c.b16 %v768, %v764
    %v817 = vpack.c.b16 %v769, %v765
    %v818 = vpack.c.b16 %v774, %v770
    %v819 = vpack.c.b16 %v775, %v771
    %v820 = vpack.c.b16 %v776, %v772
    %v821 = vpack.c.b16 %v777, %v773
    %v822 = vpack.c.b16 %v782, %v778
    %v823 = vpack.c.b16 %v783, %v779
    %v824 = vpack.c.b16 %v784, %v780
    %v825 = vpack.c.b16 %v785, %v781
    %v826 = vpack.c.b16 %v790, %v786
    %v827 = vpack.c.b16 %v791, %v787
    %v828 = vpack.c.b16 %v792, %v788
    %v829 = vpack.c.b16 %v793, %v789
    %v830 = vpack.c.b16 %v798, %v794
    %v831 = vpack.c.b16 %v799, %v795
    %v832 = vpack.c.b16 %v800, %v796
    %v833 = vpack.c.b16 %v801, %v797
    %866 = vmatprep.subr.bf16.mxu0 %v803
    %867 = vmatpush1.bf16.msra.mxu0 %v802
    %868 = vmatprep.subr.bf16.mxu0 %v807
    %869 = vmatpush1.bf16.msra.mxu0 %v806
    %870 = vmatprep.subr.bf16.mxu0 %v811
    %871 = vmatpush1.bf16.msra.mxu0 %v810
    %872 = vmatprep.subr.bf16.mxu0 %v815
    %873 = vmatpush1.bf16.msra.mxu0 %v814
    %874 = vmatprep.subr.bf16.mxu0 %v819
    %875 = vmatpush1.bf16.msra.mxu0 %v818
    %876 = vmatprep.subr.bf16.mxu0 %v823
    %877 = vmatpush1.bf16.msra.mxu0 %v822
    %878 = vmatprep.subr.bf16.mxu0 %v827
    %879 = vmatpush1.bf16.msra.mxu0 %v826
    %880 = vmatprep.subr.bf16.mxu0 %v831
    %881 = vmatpush1.bf16.msra.mxu0 %v830
    %882 = vmatprep.subr.bf16.mxu0 0
    %883 = vmatpush1.bf16.msra.mxu0 0
    %884 = vmatprep.subr.bf16.mxu0 0
    %885 = vmatpush1.bf16.msra.mxu0 0
    %886 = vmatprep.subr.bf16.mxu0 0
    %887 = vmatpush1.bf16.msra.mxu0 0
    %888 = vmatprep.subr.bf16.mxu0 0
    %889 = vmatpush1.bf16.msra.mxu0 0
    %890 = vmatprep.subr.bf16.mxu0 0
    %891 = vmatpush1.bf16.msra.mxu0 0
    %892 = vmatprep.subr.bf16.mxu0 0
    %893 = vmatpush1.bf16.msra.mxu0 0
    %894 = vmatprep.subr.bf16.mxu0 0
    %895 = vmatpush1.bf16.msra.mxu0 0
    %896 = vmatprep.subr.bf16.mxu0 0
    %897 = vmatpush1.bf16.msra.mxu0 0
    %898 = vmatprep.mubr.bf16.mxu0 0
    %899 = vmatmul.mubr.bf16.gmra.mrb[0].mxu0 %v673
    %v900 = vpop.f32.mrb[0].mxu0
    %v901 = vadd.f32 0.0, %v900
    %v902 = vpop.f32.mrb[0].mxu0
    %v903 = vadd.f32 0.0, %v902
    %v904 = vpop.f32.mrb[0].mxu0
    %v905 = vpop.f32.mrb[0].mxu0
    %906 = vdwg.mxu0
    %907 = vmatprep.subr.bf16.mxu0 %v805
    %908 = vmatpush1.bf16.msra.mxu0 %v804
    %909 = vmatprep.subr.bf16.mxu0 %v809
    %910 = vmatpush1.bf16.msra.mxu0 %v808
    %911 = vmatprep.subr.bf16.mxu0 %v813
    %912 = vmatpush1.bf16.msra.mxu0 %v812
    %913 = vmatprep.subr.bf16.mxu0 %v817
    %914 = vmatpush1.bf16.msra.mxu0 %v816
    %915 = vmatprep.subr.bf16.mxu0 %v821
    %916 = vmatpush1.bf16.msra.mxu0 %v820
    %917 = vmatprep.subr.bf16.mxu0 %v825
    %918 = vmatpush1.bf16.msra.mxu0 %v824
    %919 = vmatprep.subr.bf16.mxu0 %v829
    %920 = vmatpush1.bf16.msra.mxu0 %v828
    %921 = vmatprep.subr.bf16.mxu0 %v833
    %922 = vmatpush1.bf16.msra.mxu0 %v832
    %923 = vmatprep.subr.bf16.mxu0 0
    %924 = vmatpush1.bf16.msra.mxu0 0
    %925 = vmatprep.subr.bf16.mxu0 0
    %926 = vmatpush1.bf16.msra.mxu0 0
    %927 = vmatprep.subr.bf16.mxu0 0
    %928 = vmatpush1.bf16.msra.mxu0 0
    %929 = vmatprep.subr.bf16.mxu0 0
    %930 = vmatpush1.bf16.msra.mxu0 0
    %931 = vmatprep.subr.bf16.mxu0 0
    %932 = vmatpush1.bf16.msra.mxu0 0
    %933 = vmatprep.subr.bf16.mxu0 0
    %934 = vmatpush1.bf16.msra.mxu0 0
    %935 = vmatprep.subr.bf16.mxu0 0
    %936 = vmatpush1.bf16.msra.mxu0 0
    %937 = vmatprep.subr.bf16.mxu0 0
    %938 = vmatpush1.bf16.msra.mxu0 0
    %939 = vmatprep.mubr.bf16.mxu0 0
    %940 = vmatmul.mubr.bf16.gmra.mrb[0].mxu0 %v673
    %v941 = vpop.f32.mrb[0].mxu0
    %v942 = vadd.f32 0.0, %v941
    %v943 = vpop.f32.mrb[0].mxu0
    %v944 = vadd.f32 0.0, %v943
    %v945 = vpop.f32.mrb[0].mxu0
    %v946 = vpop.f32.mrb[0].mxu0
    %947 = vdwg.mxu0
    %v948 = vadd.f32 %v668, %v901
    %v949 = vadd.f32 %v669, %v903
    %v950 = vadd.f32 %v670, %v942
    %v951 = vadd.f32 %v671, %v944
    %v952 = vxor.u32 %v948, 2147483648
    %v953 = vmul.f32 %v952, 1.442695
    %v954 = vpow.pop %v953
    %v955 = vadd.f32 %v954, 1.0
    %v956 = vrcp.pop %v955
    %v957 = vmul.f32 1.0, %v956
    %v958 = vxor.u32 %v949, 2147483648
    %v959 = vmul.f32 %v958, 1.442695
    %v960 = vpow.pop %v959
    %v961 = vadd.f32 %v960, 1.0
    %v962 = vrcp.pop %v961
    %v963 = vmul.f32 1.0, %v962
    %v964 = vtanh.pop %v950
    %v965 = vxor.u32 %v951, 2147483648
    %v966 = vmul.f32 %v965, 1.442695
    %v967 = vpow.pop %v966
    %v968 = vadd.f32 %v967, 1.0
    %v969 = vrcp.pop %v968
    %v970 = vmul.f32 1.0, %v969
    %v971 = vld [vmem:[#allocation3] sm:$0xff]
    %v972 = vmul.f32 %v963, %v971
    %v973 = vmul.f32 %v957, %v964
    %v974 = vadd.f32 %v972, %v973
    %v975 = vtanh.pop %v974
    %v976 = vmul.f32 %v970, %v975
    %977 = vst [vmem:[#allocation3] sm:$0xff] %v974
    %978 = vst [vmem:[#allocation2] sm:$0xff] %v976
    %979 = vst [vmem:[%s667] sm:$0xff] %v976
    %s980 = smul.u32 2, 4
    %s981 = smul.addr %s980, 8
    %s982 = scalar_lea.vmem [#allocation4], %s981
    %v983 = vld [vmem:[%s982] sm:$0xff]
    %v984 = vld [vmem:[%s982 + $0x8] sm:$0xff]
    %v985 = vld [vmem:[%s982 + $0x10] sm:$0xff]
    %v986 = vld [vmem:[%s982 + $0x18] sm:$0xff]
    %v987 = vld [vmem:[#allocation2] sm:$0xff]
    %v988 = vpack.c.bf16 %v987, %v987
    %v989 = vld [vmem:[#allocation5] sm:$0xff]
    %v990 = vld [vmem:[#allocation5 + $0x8] sm:$0xff]
    %v991 = vld [vmem:[#allocation5 + $0x10] sm:$0xff]
    %v992 = vld [vmem:[#allocation5 + $0x18] sm:$0xff]
    %v993 = vld [vmem:[#allocation5 + $0x20] sm:$0xff]
    %v994 = vld [vmem:[#allocation5 + $0x28] sm:$0xff]
    %v995 = vld [vmem:[#allocation5 + $0x30] sm:$0xff]
    %v996 = vld [vmem:[#allocation5 + $0x38] sm:$0xff]
    %v997 = vld [vmem:[#allocation5 + $0x40] sm:$0xff]
    %v998 = vld [vmem:[#allocation5 + $0x48] sm:$0xff]
    %v999 = vld [vmem:[#allocation5 + $0x50] sm:$0xff]
    %v1000 = vld [vmem:[#allocation5 + $0x58] sm:$0xff]
    %v1001 = vld [vmem:[#allocation5 + $0x60] sm:$0xff]
    %v1002 = vld [vmem:[#allocation5 + $0x68] sm:$0xff]
    %v1003 = vld [vmem:[#allocation5 + $0x70] sm:$0xff]
    %v1004 = vld [vmem:[#allocation5 + $0x78] sm:$0xff]
    %v1005 = vld [vmem:[#allocation5 + $0x80] sm:$0xff]
    %v1006 = vld [vmem:[#allocation5 + $0x88] sm:$0xff]
    %v1007 = vld [vmem:[#allocation5 + $0x90] sm:$0xff]
    %v1008 = vld [vmem:[#allocation5 + $0x98] sm:$0xff]
    %v1009 = vld [vmem:[#allocation5 + $0xa0] sm:$0xff]
    %v1010 = vld [vmem:[#allocation5 + $0xa8] sm:$0xff]
    %v1011 = vld [vmem:[#allocation5 + $0xb0] sm:$0xff]
    %v1012 = vld [vmem:[#allocation5 + $0xb8] sm:$0xff]
    %v1013 = vld [vmem:[#allocation5 + $0xc0] sm:$0xff]
    %v1014 = vld [vmem:[#allocation5 + $0xc8] sm:$0xff]
    %v1015 = vld [vmem:[#allocation5 + $0xd0] sm:$0xff]
    %v1016 = vld [vmem:[#allocation5 + $0xd8] sm:$0xff]
    %v1017 = vld [vmem:[#allocation5 + $0xe0] sm:$0xff]
    %v1018 = vld [vmem:[#allocation5 + $0xe8] sm:$0xff]
    %v1019 = vld [vmem:[#allocation5 + $0xf0] sm:$0xff]
    %v1020 = vld [vmem:[#allocation5 + $0xf8] sm:$0xff]
    %v1053 = vunpack.c.l.b16 %v989
    %v1054 = vunpack.c.h.b16 %v989
    %v1055 = vunpack.c.l.b16 %v990
    %v1056 = vunpack.c.h.b16 %v990
    %v1057 = vunpack.c.l.b16 %v991
    %v1058 = vunpack.c.h.b16 %v991
    %v1059 = vunpack.c.l.b16 %v992
    %v1060 = vunpack.c.h.b16 %v992
    %v1061 = vunpack.c.l.b16 %v993
    %v1062 = vunpack.c.h.b16 %v993
    %v1063 = vunpack.c.l.b16 %v994
    %v1064 = vunpack.c.h.b16 %v994
    %v1065 = vunpack.c.l.b16 %v995
    %v1066 = vunpack.c.h.b16 %v995
    %v1067 = vunpack.c.l.b16 %v996
    %v1068 = vunpack.c.h.b16 %v996
    %v1069 = vunpack.c.l.b16 %v997
    %v1070 = vunpack.c.h.b16 %v997
    %v1071 = vunpack.c.l.b16 %v998
    %v1072 = vunpack.c.h.b16 %v998
    %v1073 = vunpack.c.l.b16 %v999
    %v1074 = vunpack.c.h.b16 %v999
    %v1075 = vunpack.c.l.b16 %v1000
    %v1076 = vunpack.c.h.b16 %v1000
    %v1077 = vunpack.c.l.b16 %v1001
    %v1078 = vunpack.c.h.b16 %v1001
    %v1079 = vunpack.c.l.b16 %v1002
    %v1080 = vunpack.c.h.b16 %v1002
    %v1081 = vunpack.c.l.b16 %v1003
    %v1082 = vunpack.c.h.b16 %v1003
    %v1083 = vunpack.c.l.b16 %v1004
    %v1084 = vunpack.c.h.b16 %v1004
    %v1085 = vunpack.c.l.b16 %v1005
    %v1086 = vunpack.c.h.b16 %v1005
    %v1087 = vunpack.c.l.b16 %v1006
    %v1088 = vunpack.c.h.b16 %v1006
    %v1089 = vunpack.c.l.b16 %v1007
    %v1090 = vunpack.c.h.b16 %v1007
    %v1091 = vunpack.c.l.b16 %v1008
    %v1092 = vunpack.c.h.b16 %v1008
    %v1093 = vunpack.c.l.b16 %v1009
    %v1094 = vunpack.c.h.b16 %v1009
    %v1095 = vunpack.c.l.b16 %v1010
    %v1096 = vunpack.c.h.b16 %v1010
    %v1097 = vunpack.c.l.b16 %v1011
    %v1098 = vunpack.c.h.b16 %v1011
    %v1099 = vunpack.c.l.b16 %v1012
    %v1100 = vunpack.c.h.b16 %v1012
    %v1101 = vunpack.c.l.b16 %v1013
    %v1102 = vunpack.c.h.b16 %v1013
    %v1103 = vunpack.c.l.b16 %v1014
    %v1104 = vunpack.c.h.b16 %v1014
    %v1105 = vunpack.c.l.b16 %v1015
    %v1106 = vunpack.c.h.b16 %v1015
    %v1107 = vunpack.c.l.b16 %v1016
    %v1108 = vunpack.c.h.b16 %v1016
    %v1109 = vunpack.c.l.b16 %v1017
    %v1110 = vunpack.c.h.b16 %v1017
    %v1111 = vunpack.c.l.b16 %v1018
    %v1112 = vunpack.c.h.b16 %v1018
    %v1113 = vunpack.c.l.b16 %v1019
    %v1114 = vunpack.c.h.b16 %v1019
    %v1115 = vunpack.c.l.b16 %v1020
    %v1116 = vunpack.c.h.b16 %v1020
    %v1117 = vpack.c.b16 %v1057, %v1053
    %v1118 = vpack.c.b16 %v1058, %v1054
    %v1119 = vpack.c.b16 %v1059, %v1055
    %v1120 = vpack.c.b16 %v1060, %v1056
    %v1121 = vpack.c.b16 %v1065, %v1061
    %v1122 = vpack.c.b16 %v1066, %v1062
    %v1123 = vpack.c.b16 %v1067, %v1063
    %v1124 = vpack.c.b16 %v1068, %v1064
    %v1125 = vpack.c.b16 %v1073, %v1069
    %v1126 = vpack.c.b16 %v1074, %v1070
    %v1127 = vpack.c.b16 %v1075, %v1071
    %v1128 = vpack.c.b16 %v1076, %v1072
    %v1129 = vpack.c.b16 %v1081, %v1077
    %v1130 = vpack.c.b16 %v1082, %v1078
    %v1131 = vpack.c.b16 %v1083, %v1079
    %v1132 = vpack.c.b16 %v1084, %v1080
    %v1133 = vpack.c.b16 %v1089, %v1085
    %v1134 = vpack.c.b16 %v1090, %v1086
    %v1135 = vpack.c.b16 %v1091, %v1087
    %v1136 = vpack.c.b16 %v1092, %v1088
    %v1137 = vpack.c.b16 %v1097, %v1093
    %v1138 = vpack.c.b16 %v1098, %v1094
    %v1139 = vpack.c.b16 %v1099, %v1095
    %v1140 = vpack.c.b16 %v1100, %v1096
    %v1141 = vpack.c.b16 %v1105, %v1101
    %v1142 = vpack.c.b16 %v1106, %v1102
    %v1143 = vpack.c.b16 %v1107, %v1103
    %v1144 = vpack.c.b16 %v1108, %v1104
    %v1145 = vpack.c.b16 %v1113, %v1109
    %v1146 = vpack.c.b16 %v1114, %v1110
    %v1147 = vpack.c.b16 %v1115, %v1111
    %v1148 = vpack.c.b16 %v1116, %v1112
    %1181 = vmatprep.subr.bf16.mxu0 %v1118
    %1182 = vmatpush1.bf16.msra.mxu0 %v1117
    %1183 = vmatprep.subr.bf16.mxu0 %v1122
    %1184 = vmatpush1.bf16.msra.mxu0 %v1121
    %1185 = vmatprep.subr.bf16.mxu0 %v1126
    %1186 = vmatpush1.bf16.msra.mxu0 %v1125
    %1187 = vmatprep.subr.bf16.mxu0 %v1130
    %1188 = vmatpush1.bf16.msra.mxu0 %v1129
    %1189 = vmatprep.subr.bf16.mxu0 %v1134
    %1190 = vmatpush1.bf16.msra.mxu0 %v1133
    %1191 = vmatprep.subr.bf16.mxu0 %v1138
    %1192 = vmatpush1.bf16.msra.mxu0 %v1137
    %1193 = vmatprep.subr.bf16.mxu0 %v1142
    %1194 = vmatpush1.bf16.msra.mxu0 %v1141
    %1195 = vmatprep.subr.bf16.mxu0 %v1146
    %1196 = vmatpush1.bf16.msra.mxu0 %v1145
    %1197 = vmatprep.subr.bf16.mxu0 0
    %1198 = vmatpush1.bf16.msra.mxu0 0
    %1199 = vmatprep.subr.bf16.mxu0 0
    %1200 = vmatpush1.bf16.msra.mxu0 0
    %1201 = vmatprep.subr.bf16.mxu0 0
    %1202 = vmatpush1.bf16.msra.mxu0 0
    %1203 = vmatprep.subr.bf16.mxu0 0
    %1204 = vmatpush1.bf16.msra.mxu0 0
    %1205 = vmatprep.subr.bf16.mxu0 0
    %1206 = vmatpush1.bf16.msra.mxu0 0
    %1207 = vmatprep.subr.bf16.mxu0 0
    %1208 = vmatpush1.bf16.msra.mxu0 0
    %1209 = vmatprep.subr.bf16.mxu0 0
    %1210 = vmatpush1.bf16.msra.mxu0 0
    %1211 = vmatprep.subr.bf16.mxu0 0
    %1212 = vmatpush1.bf16.msra.mxu0 0
    %1213 = vmatprep.mubr.bf16.mxu0 0
    %1214 = vmatmul.mubr.bf16.gmra.mrb[0].mxu0 %v988
    %v1215 = vpop.f32.mrb[0].mxu0
    %v1216 = vadd.f32 0.0, %v1215
    %v1217 = vpop.f32.mrb[0].mxu0
    %v1218 = vadd.f32 0.0, %v1217
    %v1219 = vpop.f32.mrb[0].mxu0
    %v1220 = vpop.f32.mrb[0].mxu0
    %1221 = vdwg.mxu0
    %1222 = vmatprep.subr.bf16.mxu0 %v1120
    %1223 = vmatpush1.bf16.msra.mxu0 %v1119
    %1224 = vmatprep.subr.bf16.mxu0 %v1124
    %1225 = vmatpush1.bf16.msra.mxu0 %v1123
    %1226 = vmatprep.subr.bf16.mxu0 %v1128
    %1227 = vmatpush1.bf16.msra.mxu0 %v1127
    %1228 = vmatprep.subr.bf16.mxu0 %v1132
    %1229 = vmatpush1.bf16.msra.mxu0 %v1131
    %1230 = vmatprep.subr.bf16.mxu0 %v1136
    %1231 = vmatpush1.bf16.msra.mxu0 %v1135
    %1232 = vmatprep.subr.bf16.mxu0 %v1140
    %1233 = vmatpush1.bf16.msra.mxu0 %v1139
    %1234 = vmatprep.subr.bf16.mxu0 %v1144
    %1235 = vmatpush1.bf16.msra.mxu0 %v1143
    %1236 = vmatprep.subr.bf16.mxu0 %v1148
    %1237 = vmatpush1.bf16.msra.mxu0 %v1147
    %1238 = vmatprep.subr.bf16.mxu0 0
    %1239 = vmatpush1.bf16.msra.mxu0 0
    %1240 = vmatprep.subr.bf16.mxu0 0
    %1241 = vmatpush1.bf16.msra.mxu0 0
    %1242 = vmatprep.subr.bf16.mxu0 0
    %1243 = vmatpush1.bf16.msra.mxu0 0
    %1244 = vmatprep.subr.bf16.mxu0 0
    %1245 = vmatpush1.bf16.msra.mxu0 0
    %1246 = vmatprep.subr.bf16.mxu0 0
    %1247 = vmatpush1.bf16.msra.mxu0 0
    %1248 = vmatprep.subr.bf16.mxu0 0
    %1249 = vmatpush1.bf16.msra.mxu0 0
    %1250 = vmatprep.subr.bf16.mxu0 0
    %1251 = vmatpush1.bf16.msra.mxu0 0
    %1252 = vmatprep.subr.bf16.mxu0 0
    %1253 = vmatpush1.bf16.msra.mxu0 0
    %1254 = vmatprep.mubr.bf16.mxu0 0
    %1255 = vmatmul.mubr.bf16.gmra.mrb[0].mxu0 %v988
    %v1256 = vpop.f32.mrb[0].mxu0
    %v1257 = vadd.f32 0.0, %v1256
    %v1258 = vpop.f32.mrb[0].mxu0
    %v1259 = vadd.f32 0.0, %v1258
    %v1260 = vpop.f32.mrb[0].mxu0
    %v1261 = vpop.f32.mrb[0].mxu0
    %1262 = vdwg.mxu0
    %v1263 = vadd.f32 %v983, %v1216
    %v1264 = vadd.f32 %v984, %v1218
    %v1265 = vadd.f32 %v985, %v1257
    %v1266 = vadd.f32 %v986, %v1259
    %v1267 = vxor.u32 %v1263, 2147483648
    %v1268 = vmul.f32 %v1267, 1.442695
    %v1269 = vpow.pop %v1268
    %v1270 = vadd.f32 %v1269, 1.0
    %v1271 = vrcp.pop %v1270
    %v1272 = vmul.f32 1.0, %v1271
    %v1273 = vxor.u32 %v1264, 2147483648
    %v1274 = vmul.f32 %v1273, 1.442695
    %v1275 = vpow.pop %v1274
    %v1276 = vadd.f32 %v1275, 1.0
    %v1277 = vrcp.pop %v1276
    %v1278 = vmul.f32 1.0, %v1277
    %v1279 = vtanh.pop %v1265
    %v1280 = vxor.u32 %v1266, 2147483648
    %v1281 = vmul.f32 %v1280, 1.442695
    %v1282 = vpow.pop %v1281
    %v1283 = vadd.f32 %v1282, 1.0
    %v1284 = vrcp.pop %v1283
    %v1285 = vmul.f32 1.0, %v1284
    %v1286 = vld [vmem:[#allocation3] sm:$0xff]
    %v1287 = vmul.f32 %v1278, %v1286
    %v1288 = vmul.f32 %v1272, %v1279
    %v1289 = vadd.f32 %v1287, %v1288
    %v1290 = vtanh.pop %v1289
    %v1291 = vmul.f32 %v1285, %v1290
    %1292 = vst [vmem:[#allocation3] sm:$0xff] %v1289
    %1293 = vst [vmem:[#allocation2] sm:$0xff] %v1291
    %1294 = vst [vmem:[%s982] sm:$0xff] %v1291
    %s1295 = smul.u32 3, 4
    %s1296 = smul.addr %s1295, 8
    %s1297 = scalar_lea.vmem [#allocation4], %s1296
    %v1298 = vld [vmem:[%s1297] sm:$0xff]
    %v1299 = vld [vmem:[%s1297 + $0x8] sm:$0xff]
    %v1300 = vld [vmem:[%s1297 + $0x10] sm:$0xff]
    %v1301 = vld [vmem:[%s1297 + $0x18] sm:$0xff]
    %v1302 = vld [vmem:[#allocation2] sm:$0xff]
    %v1303 = vpack.c.bf16 %v1302, %v1302
    %v1304 = vld [vmem:[#allocation5] sm:$0xff]
    %v1305 = vld [vmem:[#allocation5 + $0x8] sm:$0xff]
    %v1306 = vld [vmem:[#allocation5 + $0x10] sm:$0xff]
    %v1307 = vld [vmem:[#allocation5 + $0x18] sm:$0xff]
    %v1308 = vld [vmem:[#allocation5 + $0x20] sm:$0xff]
    %v1309 = vld [vmem:[#allocation5 + $0x28] sm:$0xff]
    %v1310 = vld [vmem:[#allocation5 + $0x30] sm:$0xff]
    %v1311 = vld [vmem:[#allocation5 + $0x38] sm:$0xff]
    %v1312 = vld [vmem:[#allocation5 + $0x40] sm:$0xff]
    %v1313 = vld [vmem:[#allocation5 + $0x48] sm:$0xff]
    %v1314 = vld [vmem:[#allocation5 + $0x50] sm:$0xff]
    %v1315 = vld [vmem:[#allocation5 + $0x58] sm:$0xff]
    %v1316 = vld [vmem:[#allocation5 + $0x60] sm:$0xff]
    %v1317 = vld [vmem:[#allocation5 + $0x68] sm:$0xff]
    %v1318 = vld [vmem:[#allocation5 + $0x70] sm:$0xff]
    %v1319 = vld [vmem:[#allocation5 + $0x78] sm:$0xff]
    %v1320 = vld [vmem:[#allocation5 + $0x80] sm:$0xff]
    %v1321 = vld [vmem:[#allocation5 + $0x88] sm:$0xff]
    %v1322 = vld [vmem:[#allocation5 + $0x90] sm:$0xff]
    %v1323 = vld [vmem:[#allocation5 + $0x98] sm:$0xff]
    %v1324 = vld [vmem:[#allocation5 + $0xa0] sm:$0xff]
    %v1325 = vld [vmem:[#allocation5 + $0xa8] sm:$0xff]
    %v1326 = vld [vmem:[#allocation5 + $0xb0] sm:$0xff]
    %v1327 = vld [vmem:[#allocation5 + $0xb8] sm:$0xff]
    %v1328 = vld [vmem:[#allocation5 + $0xc0] sm:$0xff]
    %v1329 = vld [vmem:[#allocation5 + $0xc8] sm:$0xff]
    %v1330 = vld [vmem:[#allocation5 + $0xd0] sm:$0xff]
    %v1331 = vld [vmem:[#allocation5 + $0xd8] sm:$0xff]
    %v1332 = vld [vmem:[#allocation5 + $0xe0] sm:$0xff]
    %v1333 = vld [vmem:[#allocation5 + $0xe8] sm:$0xff]
    %v1334 = vld [vmem:[#allocation5 + $0xf0] sm:$0xff]
    %v1335 = vld [vmem:[#allocation5 + $0xf8] sm:$0xff]
    %v1368 = vunpack.c.l.b16 %v1304
    %v1369 = vunpack.c.h.b16 %v1304
    %v1370 = vunpack.c.l.b16 %v1305
    %v1371 = vunpack.c.h.b16 %v1305
    %v1372 = vunpack.c.l.b16 %v1306
    %v1373 = vunpack.c.h.b16 %v1306
    %v1374 = vunpack.c.l.b16 %v1307
    %v1375 = vunpack.c.h.b16 %v1307
    %v1376 = vunpack.c.l.b16 %v1308
    %v1377 = vunpack.c.h.b16 %v1308
    %v1378 = vunpack.c.l.b16 %v1309
    %v1379 = vunpack.c.h.b16 %v1309
    %v1380 = vunpack.c.l.b16 %v1310
    %v1381 = vunpack.c.h.b16 %v1310
    %v1382 = vunpack.c.l.b16 %v1311
    %v1383 = vunpack.c.h.b16 %v1311
    %v1384 = vunpack.c.l.b16 %v1312
    %v1385 = vunpack.c.h.b16 %v1312
    %v1386 = vunpack.c.l.b16 %v1313
    %v1387 = vunpack.c.h.b16 %v1313
    %v1388 = vunpack.c.l.b16 %v1314
    %v1389 = vunpack.c.h.b16 %v1314
    %v1390 = vunpack.c.l.b16 %v1315
    %v1391 = vunpack.c.h.b16 %v1315
    %v1392 = vunpack.c.l.b16 %v1316
    %v1393 = vunpack.c.h.b16 %v1316
    %v1394 = vunpack.c.l.b16 %v1317
    %v1395 = vunpack.c.h.b16 %v1317
    %v1396 = vunpack.c.l.b16 %v1318
    %v1397 = vunpack.c.h.b16 %v1318
    %v1398 = vunpack.c.l.b16 %v1319
    %v1399 = vunpack.c.h.b16 %v1319
    %v1400 = vunpack.c.l.b16 %v1320
    %v1401 = vunpack.c.h.b16 %v1320
    %v1402 = vunpack.c.l.b16 %v1321
    %v1403 = vunpack.c.h.b16 %v1321
    %v1404 = vunpack.c.l.b16 %v1322
    %v1405 = vunpack.c.h.b16 %v1322
    %v1406 = vunpack.c.l.b16 %v1323
    %v1407 = vunpack.c.h.b16 %v1323
    %v1408 = vunpack.c.l.b16 %v1324
    %v1409 = vunpack.c.h.b16 %v1324
    %v1410 = vunpack.c.l.b16 %v1325
    %v1411 = vunpack.c.h.b16 %v1325
    %v1412 = vunpack.c.l.b16 %v1326
    %v1413 = vunpack.c.h.b16 %v1326
    %v1414 = vunpack.c.l.b16 %v1327
    %v1415 = vunpack.c.h.b16 %v1327
    %v1416 = vunpack.c.l.b16 %v1328
    %v1417 = vunpack.c.h.b16 %v1328
    %v1418 = vunpack.c.l.b16 %v1329
    %v1419 = vunpack.c.h.b16 %v1329
    %v1420 = vunpack.c.l.b16 %v1330
    %v1421 = vunpack.c.h.b16 %v1330
    %v1422 = vunpack.c.l.b16 %v1331
    %v1423 = vunpack.c.h.b16 %v1331
    %v1424 = vunpack.c.l.b16 %v1332
    %v1425 = vunpack.c.h.b16 %v1332
    %v1426 = vunpack.c.l.b16 %v1333
    %v1427 = vunpack.c.h.b16 %v1333
    %v1428 = vunpack.c.l.b16 %v1334
    %v1429 = vunpack.c.h.b16 %v1334
    %v1430 = vunpack.c.l.b16 %v1335
    %v1431 = vunpack.c.h.b16 %v1335
    %v1432 = vpack.c.b16 %v1372, %v1368
    %v1433 = vpack.c.b16 %v1373, %v1369
    %v1434 = vpack.c.b16 %v1374, %v1370
    %v1435 = vpack.c.b16 %v1375, %v1371
    %v1436 = vpack.c.b16 %v1380, %v1376
    %v1437 = vpack.c.b16 %v1381, %v1377
    %v1438 = vpack.c.b16 %v1382, %v1378
    %v1439 = vpack.c.b16 %v1383, %v1379
    %v1440 = vpack.c.b16 %v1388, %v1384
    %v1441 = vpack.c.b16 %v1389, %v1385
    %v1442 = vpack.c.b16 %v1390, %v1386
    %v1443 = vpack.c.b16 %v1391, %v1387
    %v1444 = vpack.c.b16 %v1396, %v1392
    %v1445 = vpack.c.b16 %v1397, %v1393
    %v1446 = vpack.c.b16 %v1398, %v1394
    %v1447 = vpack.c.b16 %v1399, %v1395
    %v1448 = vpack.c.b16 %v1404, %v1400
    %v1449 = vpack.c.b16 %v1405, %v1401
    %v1450 = vpack.c.b16 %v1406, %v1402
    %v1451 = vpack.c.b16 %v1407, %v1403
    %v1452 = vpack.c.b16 %v1412, %v1408
    %v1453 = vpack.c.b16 %v1413, %v1409
    %v1454 = vpack.c.b16 %v1414, %v1410
    %v1455 = vpack.c.b16 %v1415, %v1411
    %v1456 = vpack.c.b16 %v1420, %v1416
    %v1457 = vpack.c.b16 %v1421, %v1417
    %v1458 = vpack.c.b16 %v1422, %v1418
    %v1459 = vpack.c.b16 %v1423, %v1419
    %v1460 = vpack.c.b16 %v1428, %v1424
    %v1461 = vpack.c.b16 %v1429, %v1425
    %v1462 = vpack.c.b16 %v1430, %v1426
    %v1463 = vpack.c.b16 %v1431, %v1427
    %1496 = vmatprep.subr.bf16.mxu0 %v1433
    %1497 = vmatpush1.bf16.msra.mxu0 %v1432
    %1498 = vmatprep.subr.bf16.mxu0 %v1437
    %1499 = vmatpush1.bf16.msra.mxu0 %v1436
    %1500 = vmatprep.subr.bf16.mxu0 %v1441
    %1501 = vmatpush1.bf16.msra.mxu0 %v1440
    %1502 = vmatprep.subr.bf16.mxu0 %v1445
    %1503 = vmatpush1.bf16.msra.mxu0 %v1444
    %1504 = vmatprep.subr.bf16.mxu0 %v1449
    %1505 = vmatpush1.bf16.msra.mxu0 %v1448
    %1506 = vmatprep.subr.bf16.mxu0 %v1453
    %1507 = vmatpush1.bf16.msra.mxu0 %v1452
    %1508 = vmatprep.subr.bf16.mxu0 %v1457
    %1509 = vmatpush1.bf16.msra.mxu0 %v1456
    %1510 = vmatprep.subr.bf16.mxu0 %v1461
    %1511 = vmatpush1.bf16.msra.mxu0 %v1460
    %1512 = vmatprep.subr.bf16.mxu0 0
    %1513 = vmatpush1.bf16.msra.mxu0 0
    %1514 = vmatprep.subr.bf16.mxu0 0
    %1515 = vmatpush1.bf16.msra.mxu0 0
    %1516 = vmatprep.subr.bf16.mxu0 0
    %1517 = vmatpush1.bf16.msra.mxu0 0
    %1518 = vmatprep.subr.bf16.mxu0 0
    %1519 = vmatpush1.bf16.msra.mxu0 0
    %1520 = vmatprep.subr.bf16.mxu0 0
    %1521 = vmatpush1.bf16.msra.mxu0 0
    %1522 = vmatprep.subr.bf16.mxu0 0
    %1523 = vmatpush1.bf16.msra.mxu0 0
    %1524 = vmatprep.subr.bf16.mxu0 0
    %1525 = vmatpush1.bf16.msra.mxu0 0
    %1526 = vmatprep.subr.bf16.mxu0 0
    %1527 = vmatpush1.bf16.msra.mxu0 0
    %1528 = vmatprep.mubr.bf16.mxu0 0
    %1529 = vmatmul.mubr.bf16.gmra.mrb[0].mxu0 %v1303
    %v1530 = vpop.f32.mrb[0].mxu0
    %v1531 = vadd.f32 0.0, %v1530
    %v1532 = vpop.f32.mrb[0].mxu0
    %v1533 = vadd.f32 0.0, %v1532
    %v1534 = vpop.f32.mrb[0].mxu0
    %v1535 = vpop.f32.mrb[0].mxu0
    %1536 = vdwg.mxu0
    %1537 = vmatprep.subr.bf16.mxu0 %v1435
    %1538 = vmatpush1.bf16.msra.mxu0 %v1434
    %1539 = vmatprep.subr.bf16.mxu0 %v1439
    %1540 = vmatpush1.bf16.msra.mxu0 %v1438
    %1541 = vmatprep.subr.bf16.mxu0 %v1443
    %1542 = vmatpush1.bf16.msra.mxu0 %v1442
    %1543 = vmatprep.subr.bf16.mxu0 %v1447
    %1544 = vmatpush1.bf16.msra.mxu0 %v1446
    %1545 = vmatprep.subr.bf16.mxu0 %v1451
    %1546 = vmatpush1.bf16.msra.mxu0 %v1450
    %1547 = vmatprep.subr.bf16.mxu0 %v1455
    %1548 = vmatpush1.bf16.msra.mxu0 %v1454
    %1549 = vmatprep.subr.bf16.mxu0 %v1459
    %1550 = vmatpush1.bf16.msra.mxu0 %v1458
    %1551 = vmatprep.subr.bf16.mxu0 %v1463
    %1552 = vmatpush1.bf16.msra.mxu0 %v1462
    %1553 = vmatprep.subr.bf16.mxu0 0
    %1554 = vmatpush1.bf16.msra.mxu0 0
    %1555 = vmatprep.subr.bf16.mxu0 0
    %1556 = vmatpush1.bf16.msra.mxu0 0
    %1557 = vmatprep.subr.bf16.mxu0 0
    %1558 = vmatpush1.bf16.msra.mxu0 0
    %1559 = vmatprep.subr.bf16.mxu0 0
    %1560 = vmatpush1.bf16.msra.mxu0 0
    %1561 = vmatprep.subr.bf16.mxu0 0
    %1562 = vmatpush1.bf16.msra.mxu0 0
    %1563 = vmatprep.subr.bf16.mxu0 0
    %1564 = vmatpush1.bf16.msra.mxu0 0
    %1565 = vmatprep.subr.bf16.mxu0 0
    %1566 = vmatpush1.bf16.msra.mxu0 0
    %1567 = vmatprep.subr.bf16.mxu0 0
    %1568 = vmatpush1.bf16.msra.mxu0 0
    %1569 = vmatprep.mubr.bf16.mxu0 0
    %1570 = vmatmul.mubr.bf16.gmra.mrb[0].mxu0 %v1303
    %v1571 = vpop.f32.mrb[0].mxu0
    %v1572 = vadd.f32 0.0, %v1571
    %v1573 = vpop.f32.mrb[0].mxu0
    %v1574 = vadd.f32 0.0, %v1573
    %v1575 = vpop.f32.mrb[0].mxu0
    %v1576 = vpop.f32.mrb[0].mxu0
    %1577 = vdwg.mxu0
    %v1578 = vadd.f32 %v1298, %v1531
    %v1579 = vadd.f32 %v1299, %v1533
    %v1580 = vadd.f32 %v1300, %v1572
    %v1581 = vadd.f32 %v1301, %v1574
    %v1582 = vxor.u32 %v1578, 2147483648
    %v1583 = vmul.f32 %v1582, 1.442695
    %v1584 = vpow.pop %v1583
    %v1585 = vadd.f32 %v1584, 1.0
    %v1586 = vrcp.pop %v1585
    %v1587 = vmul.f32 1.0, %v1586
    %v1588 = vxor.u32 %v1579, 2147483648
    %v1589 = vmul.f32 %v1588, 1.442695
    %v1590 = vpow.pop %v1589
    %v1591 = vadd.f32 %v1590, 1.0
    %v1592 = vrcp.pop %v1591
    %v1593 = vmul.f32 1.0, %v1592
    %v1594 = vtanh.pop %v1580
    %v1595 = vxor.u32 %v1581, 2147483648
    %v1596 = vmul.f32 %v1595, 1.442695
    %v1597 = vpow.pop %v1596
    %v1598 = vadd.f32 %v1597, 1.0
    %v1599 = vrcp.pop %v1598
    %v1600 = vmul.f32 1.0, %v1599
    %v1601 = vld [vmem:[#allocation3] sm:$0xff]
    %v1602 = vmul.f32 %v1593, %v1601
    %v1603 = vmul.f32 %v1587, %v1594
    %v1604 = vadd.f32 %v1602, %v1603
    %v1605 = vtanh.pop %v1604
    %v1606 = vmul.f32 %v1600, %v1605
    %1607 = vst [vmem:[#allocation3] sm:$0xff] %v1604
    %1608 = vst [vmem:[#allocation2] sm:$0xff] %v1606
    %1609 = vst [vmem:[%s1297] sm:$0xff] %v1606
    %s1610 = smul.u32 4, 4
    %s1611 = smul.addr %s1610, 8
    %s1612 = scalar_lea.vmem [#allocation4], %s1611
    %v1613 = vld [vmem:[%s1612] sm:$0xff]
    %v1614 = vld [vmem:[%s1612 + $0x8] sm:$0xff]
    %v1615 = vld [vmem:[%s1612 + $0x10] sm:$0xff]
    %v1616 = vld [vmem:[%s1612 + $0x18] sm:$0xff]
    %v1617 = vld [vmem:[#allocation2] sm:$0xff]
    %v1618 = vpack.c.bf16 %v1617, %v1617
    %v1619 = vld [vmem:[#allocation5] sm:$0xff]
    %v1620 = vld [vmem:[#allocation5 + $0x8] sm:$0xff]
    %v1621 = vld [vmem:[#allocation5 + $0x10] sm:$0xff]
    %v1622 = vld [vmem:[#allocation5 + $0x18] sm:$0xff]
    %v1623 = vld [vmem:[#allocation5 + $0x20] sm:$0xff]
    %v1624 = vld [vmem:[#allocation5 + $0x28] sm:$0xff]
    %v1625 = vld [vmem:[#allocation5 + $0x30] sm:$0xff]
    %v1626 = vld [vmem:[#allocation5 + $0x38] sm:$0xff]
    %v1627 = vld [vmem:[#allocation5 + $0x40] sm:$0xff]
    %v1628 = vld [vmem:[#allocation5 + $0x48] sm:$0xff]
    %v1629 = vld [vmem:[#allocation5 + $0x50] sm:$0xff]
    %v1630 = vld [vmem:[#allocation5 + $0x58] sm:$0xff]
    %v1631 = vld [vmem:[#allocation5 + $0x60] sm:$0xff]
    %v1632 = vld [vmem:[#allocation5 + $0x68] sm:$0xff]
    %v1633 = vld [vmem:[#allocation5 + $0x70] sm:$0xff]
    %v1634 = vld [vmem:[#allocation5 + $0x78] sm:$0xff]
    %v1635 = vld [vmem:[#allocation5 + $0x80] sm:$0xff]
    %v1636 = vld [vmem:[#allocation5 + $0x88] sm:$0xff]
    %v1637 = vld [vmem:[#allocation5 + $0x90] sm:$0xff]
    %v1638 = vld [vmem:[#allocation5 + $0x98] sm:$0xff]
    %v1639 = vld [vmem:[#allocation5 + $0xa0] sm:$0xff]
    %v1640 = vld [vmem:[#allocation5 + $0xa8] sm:$0xff]
    %v1641 = vld [vmem:[#allocation5 + $0xb0] sm:$0xff]
    %v1642 = vld [vmem:[#allocation5 + $0xb8] sm:$0xff]
    %v1643 = vld [vmem:[#allocation5 + $0xc0] sm:$0xff]
    %v1644 = vld [vmem:[#allocation5 + $0xc8] sm:$0xff]
    %v1645 = vld [vmem:[#allocation5 + $0xd0] sm:$0xff]
    %v1646 = vld [vmem:[#allocation5 + $0xd8] sm:$0xff]
    %v1647 = vld [vmem:[#allocation5 + $0xe0] sm:$0xff]
    %v1648 = vld [vmem:[#allocation5 + $0xe8] sm:$0xff]
    %v1649 = vld [vmem:[#allocation5 + $0xf0] sm:$0xff]
    %v1650 = vld [vmem:[#allocation5 + $0xf8] sm:$0xff]
    %v1683 = vunpack.c.l.b16 %v1619
    %v1684 = vunpack.c.h.b16 %v1619
    %v1685 = vunpack.c.l.b16 %v1620
    %v1686 = vunpack.c.h.b16 %v1620
    %v1687 = vunpack.c.l.b16 %v1621
    %v1688 = vunpack.c.h.b16 %v1621
    %v1689 = vunpack.c.l.b16 %v1622
    %v1690 = vunpack.c.h.b16 %v1622
    %v1691 = vunpack.c.l.b16 %v1623
    %v1692 = vunpack.c.h.b16 %v1623
    %v1693 = vunpack.c.l.b16 %v1624
    %v1694 = vunpack.c.h.b16 %v1624
    %v1695 = vunpack.c.l.b16 %v1625
    %v1696 = vunpack.c.h.b16 %v1625
    %v1697 = vunpack.c.l.b16 %v1626
    %v1698 = vunpack.c.h.b16 %v1626
    %v1699 = vunpack.c.l.b16 %v1627
    %v1700 = vunpack.c.h.b16 %v1627
    %v1701 = vunpack.c.l.b16 %v1628
    %v1702 = vunpack.c.h.b16 %v1628
    %v1703 = vunpack.c.l.b16 %v1629
    %v1704 = vunpack.c.h.b16 %v1629
    %v1705 = vunpack.c.l.b16 %v1630
    %v1706 = vunpack.c.h.b16 %v1630
    %v1707 = vunpack.c.l.b16 %v1631
    %v1708 = vunpack.c.h.b16 %v1631
    %v1709 = vunpack.c.l.b16 %v1632
    %v1710 = vunpack.c.h.b16 %v1632
    %v1711 = vunpack.c.l.b16 %v1633
    %v1712 = vunpack.c.h.b16 %v1633
    %v1713 = vunpack.c.l.b16 %v1634
    %v1714 = vunpack.c.h.b16 %v1634
    %v1715 = vunpack.c.l.b16 %v1635
    %v1716 = vunpack.c.h.b16 %v1635
    %v1717 = vunpack.c.l.b16 %v1636
    %v1718 = vunpack.c.h.b16 %v1636
    %v1719 = vunpack.c.l.b16 %v1637
    %v1720 = vunpack.c.h.b16 %v1637
    %v1721 = vunpack.c.l.b16 %v1638
    %v1722 = vunpack.c.h.b16 %v1638
    %v1723 = vunpack.c.l.b16 %v1639
    %v1724 = vunpack.c.h.b16 %v1639
    %v1725 = vunpack.c.l.b16 %v1640
    %v1726 = vunpack.c.h.b16 %v1640
    %v1727 = vunpack.c.l.b16 %v1641
    %v1728 = vunpack.c.h.b16 %v1641
    %v1729 = vunpack.c.l.b16 %v1642
    %v1730 = vunpack.c.h.b16 %v1642
    %v1731 = vunpack.c.l.b16 %v1643
    %v1732 = vunpack.c.h.b16 %v1643
    %v1733 = vunpack.c.l.b16 %v1644
    %v1734 = vunpack.c.h.b16 %v1644
    %v1735 = vunpack.c.l.b16 %v1645
    %v1736 = vunpack.c.h.b16 %v1645
    %v1737 = vunpack.c.l.b16 %v1646
    %v1738 = vunpack.c.h.b16 %v1646
    %v1739 = vunpack.c.l.b16 %v1647
    %v1740 = vunpack.c.h.b16 %v1647
    %v1741 = vunpack.c.l.b16 %v1648
    %v1742 = vunpack.c.h.b16 %v1648
    %v1743 = vunpack.c.l.b16 %v1649
    %v1744 = vunpack.c.h.b16 %v1649
    %v1745 = vunpack.c.l.b16 %v1650
    %v1746 = vunpack.c.h.b16 %v1650
    %v1747 = vpack.c.b16 %v1687, %v1683
    %v1748 = vpack.c.b16 %v1688, %v1684
    %v1749 = vpack.c.b16 %v1689, %v1685
    %v1750 = vpack.c.b16 %v1690, %v1686
    %v1751 = vpack.c.b16 %v1695, %v1691
    %v1752 = vpack.c.b16 %v1696, %v1692
    %v1753 = vpack.c.b16 %v1697, %v1693
    %v1754 = vpack.c.b16 %v1698, %v1694
    %v1755 = vpack.c.b16 %v1703, %v1699
    %v1756 = vpack.c.b16 %v1704, %v1700
    %v1757 = vpack.c.b16 %v1705, %v1701
    %v1758 = vpack.c.b16 %v1706, %v1702
    %v1759 = vpack.c.b16 %v1711, %v1707
    %v1760 = vpack.c.b16 %v1712, %v1708
    %v1761 = vpack.c.b16 %v1713, %v1709
    %v1762 = vpack.c.b16 %v1714, %v1710
    %v1763 = vpack.c.b16 %v1719, %v1715
    %v1764 = vpack.c.b16 %v1720, %v1716
    %v1765 = vpack.c.b16 %v1721, %v1717
    %v1766 = vpack.c.b16 %v1722, %v1718
    %v1767 = vpack.c.b16 %v1727, %v1723
    %v1768 = vpack.c.b16 %v1728, %v1724
    %v1769 = vpack.c.b16 %v1729, %v1725
    %v1770 = vpack.c.b16 %v1730, %v1726
    %v1771 = vpack.c.b16 %v1735, %v1731
    %v1772 = vpack.c.b16 %v1736, %v1732
    %v1773 = vpack.c.b16 %v1737, %v1733
    %v1774 = vpack.c.b16 %v1738, %v1734
    %v1775 = vpack.c.b16 %v1743, %v1739
    %v1776 = vpack.c.b16 %v1744, %v1740
    %v1777 = vpack.c.b16 %v1745, %v1741
    %v1778 = vpack.c.b16 %v1746, %v1742
    %1811 = vmatprep.subr.bf16.mxu0 %v1748
    %1812 = vmatpush1.bf16.msra.mxu0 %v1747
    %1813 = vmatprep.subr.bf16.mxu0 %v1752
    %1814 = vmatpush1.bf16.msra.mxu0 %v1751
    %1815 = vmatprep.subr.bf16.mxu0 %v1756
    %1816 = vmatpush1.bf16.msra.mxu0 %v1755
    %1817 = vmatprep.subr.bf16.mxu0 %v1760
    %1818 = vmatpush1.bf16.msra.mxu0 %v1759
    %1819 = vmatprep.subr.bf16.mxu0 %v1764
    %1820 = vmatpush1.bf16.msra.mxu0 %v1763
    %1821 = vmatprep.subr.bf16.mxu0 %v1768
    %1822 = vmatpush1.bf16.msra.mxu0 %v1767
    %1823 = vmatprep.subr.bf16.mxu0 %v1772
    %1824 = vmatpush1.bf16.msra.mxu0 %v1771
    %1825 = vmatprep.subr.bf16.mxu0 %v1776
    %1826 = vmatpush1.bf16.msra.mxu0 %v1775
    %1827 = vmatprep.subr.bf16.mxu0 0
    %1828 = vmatpush1.bf16.msra.mxu0 0
    %1829 = vmatprep.subr.bf16.mxu0 0
    %1830 = vmatpush1.bf16.msra.mxu0 0
    %1831 = vmatprep.subr.bf16.mxu0 0
    %1832 = vmatpush1.bf16.msra.mxu0 0
    %1833 = vmatprep.subr.bf16.mxu0 0
    %1834 = vmatpush1.bf16.msra.mxu0 0
    %1835 = vmatprep.subr.bf16.mxu0 0
    %1836 = vmatpush1.bf16.msra.mxu0 0
    %1837 = vmatprep.subr.bf16.mxu0 0
    %1838 = vmatpush1.bf16.msra.mxu0 0
    %1839 = vmatprep.subr.bf16.mxu0 0
    %1840 = vmatpush1.bf16.msra.mxu0 0
    %1841 = vmatprep.subr.bf16.mxu0 0
    %1842 = vmatpush1.bf16.msra.mxu0 0
    %1843 = vmatprep.mubr.bf16.mxu0 0
    %1844 = vmatmul.mubr.bf16.gmra.mrb[0].mxu0 %v1618
    %v1845 = vpop.f32.mrb[0].mxu0
    %v1846 = vadd.f32 0.0, %v1845
    %v1847 = vpop.f32.mrb[0].mxu0
    %v1848 = vadd.f32 0.0, %v1847
    %v1849 = vpop.f32.mrb[0].mxu0
    %v1850 = vpop.f32.mrb[0].mxu0
    %1851 = vdwg.mxu0
    %1852 = vmatprep.subr.bf16.mxu0 %v1750
    %1853 = vmatpush1.bf16.msra.mxu0 %v1749
    %1854 = vmatprep.subr.bf16.mxu0 %v1754
    %1855 = vmatpush1.bf16.msra.mxu0 %v1753
    %1856 = vmatprep.subr.bf16.mxu0 %v1758
    %1857 = vmatpush1.bf16.msra.mxu0 %v1757
    %1858 = vmatprep.subr.bf16.mxu0 %v1762
    %1859 = vmatpush1.bf16.msra.mxu0 %v1761
    %1860 = vmatprep.subr.bf16.mxu0 %v1766
    %1861 = vmatpush1.bf16.msra.mxu0 %v1765
    %1862 = vmatprep.subr.bf16.mxu0 %v1770
    %1863 = vmatpush1.bf16.msra.mxu0 %v1769
    %1864 = vmatprep.subr.bf16.mxu0 %v1774
    %1865 = vmatpush1.bf16.msra.mxu0 %v1773
    %1866 = vmatprep.subr.bf16.mxu0 %v1778
    %1867 = vmatpush1.bf16.msra.mxu0 %v1777
    %1868 = vmatprep.subr.bf16.mxu0 0
    %1869 = vmatpush1.bf16.msra.mxu0 0
    %1870 = vmatprep.subr.bf16.mxu0 0
    %1871 = vmatpush1.bf16.msra.mxu0 0
    %1872 = vmatprep.subr.bf16.mxu0 0
    %1873 = vmatpush1.bf16.msra.mxu0 0
    %1874 = vmatprep.subr.bf16.mxu0 0
    %1875 = vmatpush1.bf16.msra.mxu0 0
    %1876 = vmatprep.subr.bf16.mxu0 0
    %1877 = vmatpush1.bf16.msra.mxu0 0
    %1878 = vmatprep.subr.bf16.mxu0 0
    %1879 = vmatpush1.bf16.msra.mxu0 0
    %1880 = vmatprep.subr.bf16.mxu0 0
    %1881 = vmatpush1.bf16.msra.mxu0 0
    %1882 = vmatprep.subr.bf16.mxu0 0
    %1883 = vmatpush1.bf16.msra.mxu0 0
    %1884 = vmatprep.mubr.bf16.mxu0 0
    %1885 = vmatmul.mubr.bf16.gmra.mrb[0].mxu0 %v1618
    %v1886 = vpop.f32.mrb[0].mxu0
    %v1887 = vadd.f32 0.0, %v1886
    %v1888 = vpop.f32.mrb[0].mxu0
    %v1889 = vadd.f32 0.0, %v1888
    %v1890 = vpop.f32.mrb[0].mxu0
    %v1891 = vpop.f32.mrb[0].mxu0
    %1892 = vdwg.mxu0
    %v1893 = vadd.f32 %v1613, %v1846
    %v1894 = vadd.f32 %v1614, %v1848
    %v1895 = vadd.f32 %v1615, %v1887
    %v1896 = vadd.f32 %v1616, %v1889
    %v1897 = vxor.u32 %v1893, 2147483648
    %v1898 = vmul.f32 %v1897, 1.442695
    %v1899 = vpow.pop %v1898
    %v1900 = vadd.f32 %v1899, 1.0
    %v1901 = vrcp.pop %v1900
    %v1902 = vmul.f32 1.0, %v1901
    %v1903 = vxor.u32 %v1894, 2147483648
    %v1904 = vmul.f32 %v1903, 1.442695
    %v1905 = vpow.pop %v1904
    %v1906 = vadd.f32 %v1905, 1.0
    %v1907 = vrcp.pop %v1906
    %v1908 = vmul.f32 1.0, %v1907
    %v1909 = vtanh.pop %v1895
    %v1910 = vxor.u32 %v1896, 2147483648
    %v1911 = vmul.f32 %v1910, 1.442695
    %v1912 = vpow.pop %v1911
    %v1913 = vadd.f32 %v1912, 1.0
    %v1914 = vrcp.pop %v1913
    %v1915 = vmul.f32 1.0, %v1914
    %v1916 = vld [vmem:[#allocation3] sm:$0xff]
    %v1917 = vmul.f32 %v1908, %v1916
    %v1918 = vmul.f32 %v1902, %v1909
    %v1919 = vadd.f32 %v1917, %v1918
    %v1920 = vtanh.pop %v1919
    %v1921 = vmul.f32 %v1915, %v1920
    %1922 = vst [vmem:[#allocation3] sm:$0xff] %v1919
    %1923 = vst [vmem:[#allocation2] sm:$0xff] %v1921
    %1924 = vst [vmem:[%s1612] sm:$0xff] %v1921
    %s1925 = smul.u32 5, 4
    %s1926 = smul.addr %s1925, 8
    %s1927 = scalar_lea.vmem [#allocation4], %s1926
    %v1928 = vld [vmem:[%s1927] sm:$0xff]
    %v1929 = vld [vmem:[%s1927 + $0x8] sm:$0xff]
    %v1930 = vld [vmem:[%s1927 + $0x10] sm:$0xff]
    %v1931 = vld [vmem:[%s1927 + $0x18] sm:$0xff]
    %v1932 = vld [vmem:[#allocation2] sm:$0xff]
    %v1933 = vpack.c.bf16 %v1932, %v1932
    %v1934 = vld [vmem:[#allocation5] sm:$0xff]
    %v1935 = vld [vmem:[#allocation5 + $0x8] sm:$0xff]
    %v1936 = vld [vmem:[#allocation5 + $0x10] sm:$0xff]
    %v1937 = vld [vmem:[#allocation5 + $0x18] sm:$0xff]
    %v1938 = vld [vmem:[#allocation5 + $0x20] sm:$0xff]
    %v1939 = vld [vmem:[#allocation5 + $0x28] sm:$0xff]
    %v1940 = vld [vmem:[#allocation5 + $0x30] sm:$0xff]
    %v1941 = vld [vmem:[#allocation5 + $0x38] sm:$0xff]
    %v1942 = vld [vmem:[#allocation5 + $0x40] sm:$0xff]
    %v1943 = vld [vmem:[#allocation5 + $0x48] sm:$0xff]
    %v1944 = vld [vmem:[#allocation5 + $0x50] sm:$0xff]
    %v1945 = vld [vmem:[#allocation5 + $0x58] sm:$0xff]
    %v1946 = vld [vmem:[#allocation5 + $0x60] sm:$0xff]
    %v1947 = vld [vmem:[#allocation5 + $0x68] sm:$0xff]
    %v1948 = vld [vmem:[#allocation5 + $0x70] sm:$0xff]
    %v1949 = vld [vmem:[#allocation5 + $0x78] sm:$0xff]
    %v1950 = vld [vmem:[#allocation5 + $0x80] sm:$0xff]
    %v1951 = vld [vmem:[#allocation5 + $0x88] sm:$0xff]
    %v1952 = vld [vmem:[#allocation5 + $0x90] sm:$0xff]
    %v1953 = vld [vmem:[#allocation5 + $0x98] sm:$0xff]
    %v1954 = vld [vmem:[#allocation5 + $0xa0] sm:$0xff]
    %v1955 = vld [vmem:[#allocation5 + $0xa8] sm:$0xff]
    %v1956 = vld [vmem:[#allocation5 + $0xb0] sm:$0xff]
    %v1957 = vld [vmem:[#allocation5 + $0xb8] sm:$0xff]
    %v1958 = vld [vmem:[#allocation5 + $0xc0] sm:$0xff]
    %v1959 = vld [vmem:[#allocation5 + $0xc8] sm:$0xff]
    %v1960 = vld [vmem:[#allocation5 + $0xd0] sm:$0xff]
    %v1961 = vld [vmem:[#allocation5 + $0xd8] sm:$0xff]
    %v1962 = vld [vmem:[#allocation5 + $0xe0] sm:$0xff]
    %v1963 = vld [vmem:[#allocation5 + $0xe8] sm:$0xff]
    %v1964 = vld [vmem:[#allocation5 + $0xf0] sm:$0xff]
    %v1965 = vld [vmem:[#allocation5 + $0xf8] sm:$0xff]
    %v1998 = vunpack.c.l.b16 %v1934
    %v1999 = vunpack.c.h.b16 %v1934
    %v2000 = vunpack.c.l.b16 %v1935
    %v2001 = vunpack.c.h.b16 %v1935
    %v2002 = vunpack.c.l.b16 %v1936
    %v2003 = vunpack.c.h.b16 %v1936
    %v2004 = vunpack.c.l.b16 %v1937
    %v2005 = vunpack.c.h.b16 %v1937
    %v2006 = vunpack.c.l.b16 %v1938
    %v2007 = vunpack.c.h.b16 %v1938
    %v2008 = vunpack.c.l.b16 %v1939
    %v2009 = vunpack.c.h.b16 %v1939
    %v2010 = vunpack.c.l.b16 %v1940
    %v2011 = vunpack.c.h.b16 %v1940
    %v2012 = vunpack.c.l.b16 %v1941
    %v2013 = vunpack.c.h.b16 %v1941
    %v2014 = vunpack.c.l.b16 %v1942
    %v2015 = vunpack.c.h.b16 %v1942
    %v2016 = vunpack.c.l.b16 %v1943
    %v2017 = vunpack.c.h.b16 %v1943
    %v2018 = vunpack.c.l.b16 %v1944
    %v2019 = vunpack.c.h.b16 %v1944
    %v2020 = vunpack.c.l.b16 %v1945
    %v2021 = vunpack.c.h.b16 %v1945
    %v2022 = vunpack.c.l.b16 %v1946
    %v2023 = vunpack.c.h.b16 %v1946
    %v2024 = vunpack.c.l.b16 %v1947
    %v2025 = vunpack.c.h.b16 %v1947
    %v2026 = vunpack.c.l.b16 %v1948
    %v2027 = vunpack.c.h.b16 %v1948
    %v2028 = vunpack.c.l.b16 %v1949
    %v2029 = vunpack.c.h.b16 %v1949
    %v2030 = vunpack.c.l.b16 %v1950
    %v2031 = vunpack.c.h.b16 %v1950
    %v2032 = vunpack.c.l.b16 %v1951
    %v2033 = vunpack.c.h.b16 %v1951
    %v2034 = vunpack.c.l.b16 %v1952
    %v2035 = vunpack.c.h.b16 %v1952
    %v2036 = vunpack.c.l.b16 %v1953
    %v2037 = vunpack.c.h.b16 %v1953
    %v2038 = vunpack.c.l.b16 %v1954
    %v2039 = vunpack.c.h.b16 %v1954
    %v2040 = vunpack.c.l.b16 %v1955
    %v2041 = vunpack.c.h.b16 %v1955
    %v2042 = vunpack.c.l.b16 %v1956
    %v2043 = vunpack.c.h.b16 %v1956
    %v2044 = vunpack.c.l.b16 %v1957
    %v2045 = vunpack.c.h.b16 %v1957
    %v2046 = vunpack.c.l.b16 %v1958
    %v2047 = vunpack.c.h.b16 %v1958
    %v2048 = vunpack.c.l.b16 %v1959
    %v2049 = vunpack.c.h.b16 %v1959
    %v2050 = vunpack.c.l.b16 %v1960
    %v2051 = vunpack.c.h.b16 %v1960
    %v2052 = vunpack.c.l.b16 %v1961
    %v2053 = vunpack.c.h.b16 %v1961
    %v2054 = vunpack.c.l.b16 %v1962
    %v2055 = vunpack.c.h.b16 %v1962
    %v2056 = vunpack.c.l.b16 %v1963
    %v2057 = vunpack.c.h.b16 %v1963
    %v2058 = vunpack.c.l.b16 %v1964
    %v2059 = vunpack.c.h.b16 %v1964
    %v2060 = vunpack.c.l.b16 %v1965
    %v2061 = vunpack.c.h.b16 %v1965
    %v2062 = vpack.c.b16 %v2002, %v1998
    %v2063 = vpack.c.b16 %v2003, %v1999
    %v2064 = vpack.c.b16 %v2004, %v2000
    %v2065 = vpack.c.b16 %v2005, %v2001
    %v2066 = vpack.c.b16 %v2010, %v2006
    %v2067 = vpack.c.b16 %v2011, %v2007
    %v2068 = vpack.c.b16 %v2012, %v2008
    %v2069 = vpack.c.b16 %v2013, %v2009
    %v2070 = vpack.c.b16 %v2018, %v2014
    %v2071 = vpack.c.b16 %v2019, %v2015
    %v2072 = vpack.c.b16 %v2020, %v2016
    %v2073 = vpack.c.b16 %v2021, %v2017
    %v2074 = vpack.c.b16 %v2026, %v2022
    %v2075 = vpack.c.b16 %v2027, %v2023
    %v2076 = vpack.c.b16 %v2028, %v2024
    %v2077 = vpack.c.b16 %v2029, %v2025
    %v2078 = vpack.c.b16 %v2034, %v2030
    %v2079 = vpack.c.b16 %v2035, %v2031
    %v2080 = vpack.c.b16 %v2036, %v2032
    %v2081 = vpack.c.b16 %v2037, %v2033
    %v2082 = vpack.c.b16 %v2042, %v2038
    %v2083 = vpack.c.b16 %v2043, %v2039
    %v2084 = vpack.c.b16 %v2044, %v2040
    %v2085 = vpack.c.b16 %v2045, %v2041
    %v2086 = vpack.c.b16 %v2050, %v2046
    %v2087 = vpack.c.b16 %v2051, %v2047
    %v2088 = vpack.c.b16 %v2052, %v2048
    %v2089 = vpack.c.b16 %v2053, %v2049
    %v2090 = vpack.c.b16 %v2058, %v2054
    %v2091 = vpack.c.b16 %v2059, %v2055
    %v2092 = vpack.c.b16 %v2060, %v2056
    %v2093 = vpack.c.b16 %v2061, %v2057
    %2126 = vmatprep.subr.bf16.mxu0 %v2063
    %2127 = vmatpush1.bf16.msra.mxu0 %v2062
    %2128 = vmatprep.subr.bf16.mxu0 %v2067
    %2129 = vmatpush1.bf16.msra.mxu0 %v2066
    %2130 = vmatprep.subr.bf16.mxu0 %v2071
    %2131 = vmatpush1.bf16.msra.mxu0 %v2070
    %2132 = vmatprep.subr.bf16.mxu0 %v2075
    %2133 = vmatpush1.bf16.msra.mxu0 %v2074
    %2134 = vmatprep.subr.bf16.mxu0 %v2079
    %2135 = vmatpush1.bf16.msra.mxu0 %v2078
    %2136 = vmatprep.subr.bf16.mxu0 %v2083
    %2137 = vmatpush1.bf16.msra.mxu0 %v2082
    %2138 = vmatprep.subr.bf16.mxu0 %v2087
    %2139 = vmatpush1.bf16.msra.mxu0 %v2086
    %2140 = vmatprep.subr.bf16.mxu0 %v2091
    %2141 = vmatpush1.bf16.msra.mxu0 %v2090
    %2142 = vmatprep.subr.bf16.mxu0 0
    %2143 = vmatpush1.bf16.msra.mxu0 0
    %2144 = vmatprep.subr.bf16.mxu0 0
    %2145 = vmatpush1.bf16.msra.mxu0 0
    %2146 = vmatprep.subr.bf16.mxu0 0
    %2147 = vmatpush1.bf16.msra.mxu0 0
    %2148 = vmatprep.subr.bf16.mxu0 0
    %2149 = vmatpush1.bf16.msra.mxu0 0
    %2150 = vmatprep.subr.bf16.mxu0 0
    %2151 = vmatpush1.bf16.msra.mxu0 0
    %2152 = vmatprep.subr.bf16.mxu0 0
    %2153 = vmatpush1.bf16.msra.mxu0 0
    %2154 = vmatprep.subr.bf16.mxu0 0
    %2155 = vmatpush1.bf16.msra.mxu0 0
    %2156 = vmatprep.subr.bf16.mxu0 0
    %2157 = vmatpush1.bf16.msra.mxu0 0
    %2158 = vmatprep.mubr.bf16.mxu0 0
    %2159 = vmatmul.mubr.bf16.gmra.mrb[0].mxu0 %v1933
    %v2160 = vpop.f32.mrb[0].mxu0
    %v2161 = vadd.f32 0.0, %v2160
    %v2162 = vpop.f32.mrb[0].mxu0
    %v2163 = vadd.f32 0.0, %v2162
    %v2164 = vpop.f32.mrb[0].mxu0
    %v2165 = vpop.f32.mrb[0].mxu0
    %2166 = vdwg.mxu0
    %2167 = vmatprep.subr.bf16.mxu0 %v2065
    %2168 = vmatpush1.bf16.msra.mxu0 %v2064
    %2169 = vmatprep.subr.bf16.mxu0 %v2069
    %2170 = vmatpush1.bf16.msra.mxu0 %v2068
    %2171 = vmatprep.subr.bf16.mxu0 %v2073
    %2172 = vmatpush1.bf16.msra.mxu0 %v2072
    %2173 = vmatprep.subr.bf16.mxu0 %v2077
    %2174 = vmatpush1.bf16.msra.mxu0 %v2076
    %2175 = vmatprep.subr.bf16.mxu0 %v2081
    %2176 = vmatpush1.bf16.msra.mxu0 %v2080
    %2177 = vmatprep.subr.bf16.mxu0 %v2085
    %2178 = vmatpush1.bf16.msra.mxu0 %v2084
    %2179 = vmatprep.subr.bf16.mxu0 %v2089
    %2180 = vmatpush1.bf16.msra.mxu0 %v2088
    %2181 = vmatprep.subr.bf16.mxu0 %v2093
    %2182 = vmatpush1.bf16.msra.mxu0 %v2092
    %2183 = vmatprep.subr.bf16.mxu0 0
    %2184 = vmatpush1.bf16.msra.mxu0 0
    %2185 = vmatprep.subr.bf16.mxu0 0
    %2186 = vmatpush1.bf16.msra.mxu0 0
    %2187 = vmatprep.subr.bf16.mxu0 0
    %2188 = vmatpush1.bf16.msra.mxu0 0
    %2189 = vmatprep.subr.bf16.mxu0 0
    %2190 = vmatpush1.bf16.msra.mxu0 0
    %2191 = vmatprep.subr.bf16.mxu0 0
    %2192 = vmatpush1.bf16.msra.mxu0 0
    %2193 = vmatprep.subr.bf16.mxu0 0
    %2194 = vmatpush1.bf16.msra.mxu0 0
    %2195 = vmatprep.subr.bf16.mxu0 0
    %2196 = vmatpush1.bf16.msra.mxu0 0
    %2197 = vmatprep.subr.bf16.mxu0 0
    %2198 = vmatpush1.bf16.msra.mxu0 0
    %2199 = vmatprep.mubr.bf16.mxu0 0
    %2200 = vmatmul.mubr.bf16.gmra.mrb[0].mxu0 %v1933
    %v2201 = vpop.f32.mrb[0].mxu0
    %v2202 = vadd.f32 0.0, %v2201
    %v2203 = vpop.f32.mrb[0].mxu0
    %v2204 = vadd.f32 0.0, %v2203
    %v2205 = vpop.f32.mrb[0].mxu0
    %v2206 = vpop.f32.mrb[0].mxu0
    %2207 = vdwg.mxu0
    %v2208 = vadd.f32 %v1928, %v2161
    %v2209 = vadd.f32 %v1929, %v2163
    %v2210 = vadd.f32 %v1930, %v2202
    %v2211 = vadd.f32 %v1931, %v2204
    %v2212 = vxor.u32 %v2208, 2147483648
    %v2213 = vmul.f32 %v2212, 1.442695
    %v2214 = vpow.pop %v2213
    %v2215 = vadd.f32 %v2214, 1.0
    %v2216 = vrcp.pop %v2215
    %v2217 = vmul.f32 1.0, %v2216
    %v2218 = vxor.u32 %v2209, 2147483648
    %v2219 = vmul.f32 %v2218, 1.442695
    %v2220 = vpow.pop %v2219
    %v2221 = vadd.f32 %v2220, 1.0
    %v2222 = vrcp.pop %v2221
    %v2223 = vmul.f32 1.0, %v2222
    %v2224 = vtanh.pop %v2210
    %v2225 = vxor.u32 %v2211, 2147483648
    %v2226 = vmul.f32 %v2225, 1.442695
    %v2227 = vpow.pop %v2226
    %v2228 = vadd.f32 %v2227, 1.0
    %v2229 = vrcp.pop %v2228
    %v2230 = vmul.f32 1.0, %v2229
    %v2231 = vld [vmem:[#allocation3] sm:$0xff]
    %v2232 = vmul.f32 %v2223, %v2231
    %v2233 = vmul.f32 %v2217, %v2224
    %v2234 = vadd.f32 %v2232, %v2233
    %v2235 = vtanh.pop %v2234
    %v2236 = vmul.f32 %v2230, %v2235
    %2237 = vst [vmem:[#allocation3] sm:$0xff] %v2234
    %2238 = vst [vmem:[#allocation2] sm:$0xff] %v2236
    %2239 = vst [vmem:[%s1927] sm:$0xff] %v2236
    %s2240 = smul.u32 6, 4
    %s2241 = smul.addr %s2240, 8
    %s2242 = scalar_lea.vmem [#allocation4], %s2241
    %v2243 = vld [vmem:[%s2242] sm:$0xff]
    %v2244 = vld [vmem:[%s2242 + $0x8] sm:$0xff]
    %v2245 = vld [vmem:[%s2242 + $0x10] sm:$0xff]
    %v2246 = vld [vmem:[%s2242 + $0x18] sm:$0xff]
    %v2247 = vld [vmem:[#allocation2] sm:$0xff]
    %v2248 = vpack.c.bf16 %v2247, %v2247
    %v2249 = vld [vmem:[#allocation5] sm:$0xff]
    %v2250 = vld [vmem:[#allocation5 + $0x8] sm:$0xff]
    %v2251 = vld [vmem:[#allocation5 + $0x10] sm:$0xff]
    %v2252 = vld [vmem:[#allocation5 + $0x18] sm:$0xff]
    %v2253 = vld [vmem:[#allocation5 + $0x20] sm:$0xff]
    %v2254 = vld [vmem:[#allocation5 + $0x28] sm:$0xff]
    %v2255 = vld [vmem:[#allocation5 + $0x30] sm:$0xff]
    %v2256 = vld [vmem:[#allocation5 + $0x38] sm:$0xff]
    %v2257 = vld [vmem:[#allocation5 + $0x40] sm:$0xff]
    %v2258 = vld [vmem:[#allocation5 + $0x48] sm:$0xff]
    %v2259 = vld [vmem:[#allocation5 + $0x50] sm:$0xff]
    %v2260 = vld [vmem:[#allocation5 + $0x58] sm:$0xff]
    %v2261 = vld [vmem:[#allocation5 + $0x60] sm:$0xff]
    %v2262 = vld [vmem:[#allocation5 + $0x68] sm:$0xff]
    %v2263 = vld [vmem:[#allocation5 + $0x70] sm:$0xff]
    %v2264 = vld [vmem:[#allocation5 + $0x78] sm:$0xff]
    %v2265 = vld [vmem:[#allocation5 + $0x80] sm:$0xff]
    %v2266 = vld [vmem:[#allocation5 + $0x88] sm:$0xff]
    %v2267 = vld [vmem:[#allocation5 + $0x90] sm:$0xff]
    %v2268 = vld [vmem:[#allocation5 + $0x98] sm:$0xff]
    %v2269 = vld [vmem:[#allocation5 + $0xa0] sm:$0xff]
    %v2270 = vld [vmem:[#allocation5 + $0xa8] sm:$0xff]
    %v2271 = vld [vmem:[#allocation5 + $0xb0] sm:$0xff]
    %v2272 = vld [vmem:[#allocation5 + $0xb8] sm:$0xff]
    %v2273 = vld [vmem:[#allocation5 + $0xc0] sm:$0xff]
    %v2274 = vld [vmem:[#allocation5 + $0xc8] sm:$0xff]
    %v2275 = vld [vmem:[#allocation5 + $0xd0] sm:$0xff]
    %v2276 = vld [vmem:[#allocation5 + $0xd8] sm:$0xff]
    %v2277 = vld [vmem:[#allocation5 + $0xe0] sm:$0xff]
    %v2278 = vld [vmem:[#allocation5 + $0xe8] sm:$0xff]
    %v2279 = vld [vmem:[#allocation5 + $0xf0] sm:$0xff]
    %v2280 = vld [vmem:[#allocation5 + $0xf8] sm:$0xff]
    %v2313 = vunpack.c.l.b16 %v2249
    %v2314 = vunpack.c.h.b16 %v2249
    %v2315 = vunpack.c.l.b16 %v2250
    %v2316 = vunpack.c.h.b16 %v2250
    %v2317 = vunpack.c.l.b16 %v2251
    %v2318 = vunpack.c.h.b16 %v2251
    %v2319 = vunpack.c.l.b16 %v2252
    %v2320 = vunpack.c.h.b16 %v2252
    %v2321 = vunpack.c.l.b16 %v2253
    %v2322 = vunpack.c.h.b16 %v2253
    %v2323 = vunpack.c.l.b16 %v2254
    %v2324 = vunpack.c.h.b16 %v2254
    %v2325 = vunpack.c.l.b16 %v2255
    %v2326 = vunpack.c.h.b16 %v2255
    %v2327 = vunpack.c.l.b16 %v2256
    %v2328 = vunpack.c.h.b16 %v2256
    %v2329 = vunpack.c.l.b16 %v2257
    %v2330 = vunpack.c.h.b16 %v2257
    %v2331 = vunpack.c.l.b16 %v2258
    %v2332 = vunpack.c.h.b16 %v2258
    %v2333 = vunpack.c.l.b16 %v2259
    %v2334 = vunpack.c.h.b16 %v2259
    %v2335 = vunpack.c.l.b16 %v2260
    %v2336 = vunpack.c.h.b16 %v2260
    %v2337 = vunpack.c.l.b16 %v2261
    %v2338 = vunpack.c.h.b16 %v2261
    %v2339 = vunpack.c.l.b16 %v2262
    %v2340 = vunpack.c.h.b16 %v2262
    %v2341 = vunpack.c.l.b16 %v2263
    %v2342 = vunpack.c.h.b16 %v2263
    %v2343 = vunpack.c.l.b16 %v2264
    %v2344 = vunpack.c.h.b16 %v2264
    %v2345 = vunpack.c.l.b16 %v2265
    %v2346 = vunpack.c.h.b16 %v2265
    %v2347 = vunpack.c.l.b16 %v2266
    %v2348 = vunpack.c.h.b16 %v2266
    %v2349 = vunpack.c.l.b16 %v2267
    %v2350 = vunpack.c.h.b16 %v2267
    %v2351 = vunpack.c.l.b16 %v2268
    %v2352 = vunpack.c.h.b16 %v2268
    %v2353 = vunpack.c.l.b16 %v2269
    %v2354 = vunpack.c.h.b16 %v2269
    %v2355 = vunpack.c.l.b16 %v2270
    %v2356 = vunpack.c.h.b16 %v2270
    %v2357 = vunpack.c.l.b16 %v2271
    %v2358 = vunpack.c.h.b16 %v2271
    %v2359 = vunpack.c.l.b16 %v2272
    %v2360 = vunpack.c.h.b16 %v2272
    %v2361 = vunpack.c.l.b16 %v2273
    %v2362 = vunpack.c.h.b16 %v2273
    %v2363 = vunpack.c.l.b16 %v2274
    %v2364 = vunpack.c.h.b16 %v2274
    %v2365 = vunpack.c.l.b16 %v2275
    %v2366 = vunpack.c.h.b16 %v2275
    %v2367 = vunpack.c.l.b16 %v2276
    %v2368 = vunpack.c.h.b16 %v2276
    %v2369 = vunpack.c.l.b16 %v2277
    %v2370 = vunpack.c.h.b16 %v2277
    %v2371 = vunpack.c.l.b16 %v2278
    %v2372 = vunpack.c.h.b16 %v2278
    %v2373 = vunpack.c.l.b16 %v2279
    %v2374 = vunpack.c.h.b16 %v2279
    %v2375 = vunpack.c.l.b16 %v2280
    %v2376 = vunpack.c.h.b16 %v2280
    %v2377 = vpack.c.b16 %v2317, %v2313
    %v2378 = vpack.c.b16 %v2318, %v2314
    %v2379 = vpack.c.b16 %v2319, %v2315
    %v2380 = vpack.c.b16 %v2320, %v2316
    %v2381 = vpack.c.b16 %v2325, %v2321
    %v2382 = vpack.c.b16 %v2326, %v2322
    %v2383 = vpack.c.b16 %v2327, %v2323
    %v2384 = vpack.c.b16 %v2328, %v2324
    %v2385 = vpack.c.b16 %v2333, %v2329
    %v2386 = vpack.c.b16 %v2334, %v2330
    %v2387 = vpack.c.b16 %v2335, %v2331
    %v2388 = vpack.c.b16 %v2336, %v2332
    %v2389 = vpack.c.b16 %v2341, %v2337
    %v2390 = vpack.c.b16 %v2342, %v2338
    %v2391 = vpack.c.b16 %v2343, %v2339
    %v2392 = vpack.c.b16 %v2344, %v2340
    %v2393 = vpack.c.b16 %v2349, %v2345
    %v2394 = vpack.c.b16 %v2350, %v2346
    %v2395 = vpack.c.b16 %v2351, %v2347
    %v2396 = vpack.c.b16 %v2352, %v2348
    %v2397 = vpack.c.b16 %v2357, %v2353
    %v2398 = vpack.c.b16 %v2358, %v2354
    %v2399 = vpack.c.b16 %v2359, %v2355
    %v2400 = vpack.c.b16 %v2360, %v2356
    %v2401 = vpack.c.b16 %v2365, %v2361
    %v2402 = vpack.c.b16 %v2366, %v2362
    %v2403 = vpack.c.b16 %v2367, %v2363
    %v2404 = vpack.c.b16 %v2368, %v2364
    %v2405 = vpack.c.b16 %v2373, %v2369
    %v2406 = vpack.c.b16 %v2374, %v2370
    %v2407 = vpack.c.b16 %v2375, %v2371
    %v2408 = vpack.c.b16 %v2376, %v2372
    %2441 = vmatprep.subr.bf16.mxu0 %v2378
    %2442 = vmatpush1.bf16.msra.mxu0 %v2377
    %2443 = vmatprep.subr.bf16.mxu0 %v2382
    %2444 = vmatpush1.bf16.msra.mxu0 %v2381
    %2445 = vmatprep.subr.bf16.mxu0 %v2386
    %2446 = vmatpush1.bf16.msra.mxu0 %v2385
    %2447 = vmatprep.subr.bf16.mxu0 %v2390
    %2448 = vmatpush1.bf16.msra.mxu0 %v2389
    %2449 = vmatprep.subr.bf16.mxu0 %v2394
    %2450 = vmatpush1.bf16.msra.mxu0 %v2393
    %2451 = vmatprep.subr.bf16.mxu0 %v2398
    %2452 = vmatpush1.bf16.msra.mxu0 %v2397
    %2453 = vmatprep.subr.bf16.mxu0 %v2402
    %2454 = vmatpush1.bf16.msra.mxu0 %v2401
    %2455 = vmatprep.subr.bf16.mxu0 %v2406
    %2456 = vmatpush1.bf16.msra.mxu0 %v2405
    %2457 = vmatprep.subr.bf16.mxu0 0
    %2458 = vmatpush1.bf16.msra.mxu0 0
    %2459 = vmatprep.subr.bf16.mxu0 0
    %2460 = vmatpush1.bf16.msra.mxu0 0
    %2461 = vmatprep.subr.bf16.mxu0 0
    %2462 = vmatpush1.bf16.msra.mxu0 0
    %2463 = vmatprep.subr.bf16.mxu0 0
    %2464 = vmatpush1.bf16.msra.mxu0 0
    %2465 = vmatprep.subr.bf16.mxu0 0
    %2466 = vmatpush1.bf16.msra.mxu0 0
    %2467 = vmatprep.subr.bf16.mxu0 0
    %2468 = vmatpush1.bf16.msra.mxu0 0
    %2469 = vmatprep.subr.bf16.mxu0 0
    %2470 = vmatpush1.bf16.msra.mxu0 0
    %2471 = vmatprep.subr.bf16.mxu0 0
    %2472 = vmatpush1.bf16.msra.mxu0 0
    %2473 = vmatprep.mubr.bf16.mxu0 0
    %2474 = vmatmul.mubr.bf16.gmra.mrb[0].mxu0 %v2248
    %v2475 = vpop.f32.mrb[0].mxu0
    %v2476 = vadd.f32 0.0, %v2475
    %v2477 = vpop.f32.mrb[0].mxu0
    %v2478 = vadd.f32 0.0, %v2477
    %v2479 = vpop.f32.mrb[0].mxu0
    %v2480 = vpop.f32.mrb[0].mxu0
    %2481 = vdwg.mxu0
    %2482 = vmatprep.subr.bf16.mxu0 %v2380
    %2483 = vmatpush1.bf16.msra.mxu0 %v2379
    %2484 = vmatprep.subr.bf16.mxu0 %v2384
    %2485 = vmatpush1.bf16.msra.mxu0 %v2383
    %2486 = vmatprep.subr.bf16.mxu0 %v2388
    %2487 = vmatpush1.bf16.msra.mxu0 %v2387
    %2488 = vmatprep.subr.bf16.mxu0 %v2392
    %2489 = vmatpush1.bf16.msra.mxu0 %v2391
    %2490 = vmatprep.subr.bf16.mxu0 %v2396
    %2491 = vmatpush1.bf16.msra.mxu0 %v2395
    %2492 = vmatprep.subr.bf16.mxu0 %v2400
    %2493 = vmatpush1.bf16.msra.mxu0 %v2399
    %2494 = vmatprep.subr.bf16.mxu0 %v2404
    %2495 = vmatpush1.bf16.msra.mxu0 %v2403
    %2496 = vmatprep.subr.bf16.mxu0 %v2408
    %2497 = vmatpush1.bf16.msra.mxu0 %v2407
    %2498 = vmatprep.subr.bf16.mxu0 0
    %2499 = vmatpush1.bf16.msra.mxu0 0
    %2500 = vmatprep.subr.bf16.mxu0 0
    %2501 = vmatpush1.bf16.msra.mxu0 0
    %2502 = vmatprep.subr.bf16.mxu0 0
    %2503 = vmatpush1.bf16.msra.mxu0 0
    %2504 = vmatprep.subr.bf16.mxu0 0
    %2505 = vmatpush1.bf16.msra.mxu0 0
    %2506 = vmatprep.subr.bf16.mxu0 0
    %2507 = vmatpush1.bf16.msra.mxu0 0
    %2508 = vmatprep.subr.bf16.mxu0 0
    %2509 = vmatpush1.bf16.msra.mxu0 0
    %2510 = vmatprep.subr.bf16.mxu0 0
    %2511 = vmatpush1.bf16.msra.mxu0 0
    %2512 = vmatprep.subr.bf16.mxu0 0
    %2513 = vmatpush1.bf16.msra.mxu0 0
    %2514 = vmatprep.mubr.bf16.mxu0 0
    %2515 = vmatmul.mubr.bf16.gmra.mrb[0].mxu0 %v2248
    %v2516 = vpop.f32.mrb[0].mxu0
    %v2517 = vadd.f32 0.0, %v2516
    %v2518 = vpop.f32.mrb[0].mxu0
    %v2519 = vadd.f32 0.0, %v2518
    %v2520 = vpop.f32.mrb[0].mxu0
    %v2521 = vpop.f32.mrb[0].mxu0
    %2522 = vdwg.mxu0
    %v2523 = vadd.f32 %v2243, %v2476
    %v2524 = vadd.f32 %v2244, %v2478
    %v2525 = vadd.f32 %v2245, %v2517
    %v2526 = vadd.f32 %v2246, %v2519
    %v2527 = vxor.u32 %v2523, 2147483648
    %v2528 = vmul.f32 %v2527, 1.442695
    %v2529 = vpow.pop %v2528
    %v2530 = vadd.f32 %v2529, 1.0
    %v2531 = vrcp.pop %v2530
    %v2532 = vmul.f32 1.0, %v2531
    %v2533 = vxor.u32 %v2524, 2147483648
    %v2534 = vmul.f32 %v2533, 1.442695
    %v2535 = vpow.pop %v2534
    %v2536 = vadd.f32 %v2535, 1.0
    %v2537 = vrcp.pop %v2536
    %v2538 = vmul.f32 1.0, %v2537
    %v2539 = vtanh.pop %v2525
    %v2540 = vxor.u32 %v2526, 2147483648
    %v2541 = vmul.f32 %v2540, 1.442695
    %v2542 = vpow.pop %v2541
    %v2543 = vadd.f32 %v2542, 1.0
    %v2544 = vrcp.pop %v2543
    %v2545 = vmul.f32 1.0, %v2544
    %v2546 = vld [vmem:[#allocation3] sm:$0xff]
    %v2547 = vmul.f32 %v2538, %v2546
    %v2548 = vmul.f32 %v2532, %v2539
    %v2549 = vadd.f32 %v2547, %v2548
    %v2550 = vtanh.pop %v2549
    %v2551 = vmul.f32 %v2545, %v2550
    %2552 = vst [vmem:[#allocation3] sm:$0xff] %v2549
    %2553 = vst [vmem:[#allocation2] sm:$0xff] %v2551
    %2554 = vst [vmem:[%s2242] sm:$0xff] %v2551
    %s2555 = smul.u32 7, 4
    %s2556 = smul.addr %s2555, 8
    %s2557 = scalar_lea.vmem [#allocation4], %s2556
    %v2558 = vld [vmem:[%s2557] sm:$0xff]
    %v2559 = vld [vmem:[%s2557 + $0x8] sm:$0xff]
    %v2560 = vld [vmem:[%s2557 + $0x10] sm:$0xff]
    %v2561 = vld [vmem:[%s2557 + $0x18] sm:$0xff]
    %v2562 = vld [vmem:[#allocation2] sm:$0xff]
    %v2563 = vpack.c.bf16 %v2562, %v2562
    %v2564 = vld [vmem:[#allocation5] sm:$0xff]
    %v2565 = vld [vmem:[#allocation5 + $0x8] sm:$0xff]
    %v2566 = vld [vmem:[#allocation5 + $0x10] sm:$0xff]
    %v2567 = vld [vmem:[#allocation5 + $0x18] sm:$0xff]
    %v2568 = vld [vmem:[#allocation5 + $0x20] sm:$0xff]
    %v2569 = vld [vmem:[#allocation5 + $0x28] sm:$0xff]
    %v2570 = vld [vmem:[#allocation5 + $0x30] sm:$0xff]
    %v2571 = vld [vmem:[#allocation5 + $0x38] sm:$0xff]
    %v2572 = vld [vmem:[#allocation5 + $0x40] sm:$0xff]
    %v2573 = vld [vmem:[#allocation5 + $0x48] sm:$0xff]
    %v2574 = vld [vmem:[#allocation5 + $0x50] sm:$0xff]
    %v2575 = vld [vmem:[#allocation5 + $0x58] sm:$0xff]
    %v2576 = vld [vmem:[#allocation5 + $0x60] sm:$0xff]
    %v2577 = vld [vmem:[#allocation5 + $0x68] sm:$0xff]
    %v2578 = vld [vmem:[#allocation5 + $0x70] sm:$0xff]
    %v2579 = vld [vmem:[#allocation5 + $0x78] sm:$0xff]
    %v2580 = vld [vmem:[#allocation5 + $0x80] sm:$0xff]
    %v2581 = vld [vmem:[#allocation5 + $0x88] sm:$0xff]
    %v2582 = vld [vmem:[#allocation5 + $0x90] sm:$0xff]
    %v2583 = vld [vmem:[#allocation5 + $0x98] sm:$0xff]
    %v2584 = vld [vmem:[#allocation5 + $0xa0] sm:$0xff]
    %v2585 = vld [vmem:[#allocation5 + $0xa8] sm:$0xff]
    %v2586 = vld [vmem:[#allocation5 + $0xb0] sm:$0xff]
    %v2587 = vld [vmem:[#allocation5 + $0xb8] sm:$0xff]
    %v2588 = vld [vmem:[#allocation5 + $0xc0] sm:$0xff]
    %v2589 = vld [vmem:[#allocation5 + $0xc8] sm:$0xff]
    %v2590 = vld [vmem:[#allocation5 + $0xd0] sm:$0xff]
    %v2591 = vld [vmem:[#allocation5 + $0xd8] sm:$0xff]
    %v2592 = vld [vmem:[#allocation5 + $0xe0] sm:$0xff]
    %v2593 = vld [vmem:[#allocation5 + $0xe8] sm:$0xff]
    %v2594 = vld [vmem:[#allocation5 + $0xf0] sm:$0xff]
    %v2595 = vld [vmem:[#allocation5 + $0xf8] sm:$0xff]
    %v2628 = vunpack.c.l.b16 %v2564
    %v2629 = vunpack.c.h.b16 %v2564
    %v2630 = vunpack.c.l.b16 %v2565
    %v2631 = vunpack.c.h.b16 %v2565
    %v2632 = vunpack.c.l.b16 %v2566
    %v2633 = vunpack.c.h.b16 %v2566
    %v2634 = vunpack.c.l.b16 %v2567
    %v2635 = vunpack.c.h.b16 %v2567
    %v2636 = vunpack.c.l.b16 %v2568
    %v2637 = vunpack.c.h.b16 %v2568
    %v2638 = vunpack.c.l.b16 %v2569
    %v2639 = vunpack.c.h.b16 %v2569
    %v2640 = vunpack.c.l.b16 %v2570
    %v2641 = vunpack.c.h.b16 %v2570
    %v2642 = vunpack.c.l.b16 %v2571
    %v2643 = vunpack.c.h.b16 %v2571
    %v2644 = vunpack.c.l.b16 %v2572
    %v2645 = vunpack.c.h.b16 %v2572
    %v2646 = vunpack.c.l.b16 %v2573
    %v2647 = vunpack.c.h.b16 %v2573
    %v2648 = vunpack.c.l.b16 %v2574
    %v2649 = vunpack.c.h.b16 %v2574
    %v2650 = vunpack.c.l.b16 %v2575
    %v2651 = vunpack.c.h.b16 %v2575
    %v2652 = vunpack.c.l.b16 %v2576
    %v2653 = vunpack.c.h.b16 %v2576
    %v2654 = vunpack.c.l.b16 %v2577
    %v2655 = vunpack.c.h.b16 %v2577
    %v2656 = vunpack.c.l.b16 %v2578
    %v2657 = vunpack.c.h.b16 %v2578
    %v2658 = vunpack.c.l.b16 %v2579
    %v2659 = vunpack.c.h.b16 %v2579
    %v2660 = vunpack.c.l.b16 %v2580
    %v2661 = vunpack.c.h.b16 %v2580
    %v2662 = vunpack.c.l.b16 %v2581
    %v2663 = vunpack.c.h.b16 %v2581
    %v2664 = vunpack.c.l.b16 %v2582
    %v2665 = vunpack.c.h.b16 %v2582
    %v2666 = vunpack.c.l.b16 %v2583
    %v2667 = vunpack.c.h.b16 %v2583
    %v2668 = vunpack.c.l.b16 %v2584
    %v2669 = vunpack.c.h.b16 %v2584
    %v2670 = vunpack.c.l.b16 %v2585
    %v2671 = vunpack.c.h.b16 %v2585
    %v2672 = vunpack.c.l.b16 %v2586
    %v2673 = vunpack.c.h.b16 %v2586
    %v2674 = vunpack.c.l.b16 %v2587
    %v2675 = vunpack.c.h.b16 %v2587
    %v2676 = vunpack.c.l.b16 %v2588
    %v2677 = vunpack.c.h.b16 %v2588
    %v2678 = vunpack.c.l.b16 %v2589
    %v2679 = vunpack.c.h.b16 %v2589
    %v2680 = vunpack.c.l.b16 %v2590
    %v2681 = vunpack.c.h.b16 %v2590
    %v2682 = vunpack.c.l.b16 %v2591
    %v2683 = vunpack.c.h.b16 %v2591
    %v2684 = vunpack.c.l.b16 %v2592
    %v2685 = vunpack.c.h.b16 %v2592
    %v2686 = vunpack.c.l.b16 %v2593
    %v2687 = vunpack.c.h.b16 %v2593
    %v2688 = vunpack.c.l.b16 %v2594
    %v2689 = vunpack.c.h.b16 %v2594
    %v2690 = vunpack.c.l.b16 %v2595
    %v2691 = vunpack.c.h.b16 %v2595
    %v2692 = vpack.c.b16 %v2632, %v2628
    %v2693 = vpack.c.b16 %v2633, %v2629
    %v2694 = vpack.c.b16 %v2634, %v2630
    %v2695 = vpack.c.b16 %v2635, %v2631
    %v2696 = vpack.c.b16 %v2640, %v2636
    %v2697 = vpack.c.b16 %v2641, %v2637
    %v2698 = vpack.c.b16 %v2642, %v2638
    %v2699 = vpack.c.b16 %v2643, %v2639
    %v2700 = vpack.c.b16 %v2648, %v2644
    %v2701 = vpack.c.b16 %v2649, %v2645
    %v2702 = vpack.c.b16 %v2650, %v2646
    %v2703 = vpack.c.b16 %v2651, %v2647
    %v2704 = vpack.c.b16 %v2656, %v2652
    %v2705 = vpack.c.b16 %v2657, %v2653
    %v2706 = vpack.c.b16 %v2658, %v2654
    %v2707 = vpack.c.b16 %v2659, %v2655
    %v2708 = vpack.c.b16 %v2664, %v2660
    %v2709 = vpack.c.b16 %v2665, %v2661
    %v2710 = vpack.c.b16 %v2666, %v2662
    %v2711 = vpack.c.b16 %v2667, %v2663
    %v2712 = vpack.c.b16 %v2672, %v2668
    %v2713 = vpack.c.b16 %v2673, %v2669
    %v2714 = vpack.c.b16 %v2674, %v2670
    %v2715 = vpack.c.b16 %v2675, %v2671
    %v2716 = vpack.c.b16 %v2680, %v2676
    %v2717 = vpack.c.b16 %v2681, %v2677
    %v2718 = vpack.c.b16 %v2682, %v2678
    %v2719 = vpack.c.b16 %v2683, %v2679
    %v2720 = vpack.c.b16 %v2688, %v2684
    %v2721 = vpack.c.b16 %v2689, %v2685
    %v2722 = vpack.c.b16 %v2690, %v2686
    %v2723 = vpack.c.b16 %v2691, %v2687
    %2756 = vmatprep.subr.bf16.mxu0 %v2693
    %2757 = vmatpush1.bf16.msra.mxu0 %v2692
    %2758 = vmatprep.subr.bf16.mxu0 %v2697
    %2759 = vmatpush1.bf16.msra.mxu0 %v2696
    %2760 = vmatprep.subr.bf16.mxu0 %v2701
    %2761 = vmatpush1.bf16.msra.mxu0 %v2700
    %2762 = vmatprep.subr.bf16.mxu0 %v2705
    %2763 = vmatpush1.bf16.msra.mxu0 %v2704
    %2764 = vmatprep.subr.bf16.mxu0 %v2709
    %2765 = vmatpush1.bf16.msra.mxu0 %v2708
    %2766 = vmatprep.subr.bf16.mxu0 %v2713
    %2767 = vmatpush1.bf16.msra.mxu0 %v2712
    %2768 = vmatprep.subr.bf16.mxu0 %v2717
    %2769 = vmatpush1.bf16.msra.mxu0 %v2716
    %2770 = vmatprep.subr.bf16.mxu0 %v2721
    %2771 = vmatpush1.bf16.msra.mxu0 %v2720
    %2772 = vmatprep.subr.bf16.mxu0 0
    %2773 = vmatpush1.bf16.msra.mxu0 0
    %2774 = vmatprep.subr.bf16.mxu0 0
    %2775 = vmatpush1.bf16.msra.mxu0 0
    %2776 = vmatprep.subr.bf16.mxu0 0
    %2777 = vmatpush1.bf16.msra.mxu0 0
    %2778 = vmatprep.subr.bf16.mxu0 0
    %2779 = vmatpush1.bf16.msra.mxu0 0
    %2780 = vmatprep.subr.bf16.mxu0 0
    %2781 = vmatpush1.bf16.msra.mxu0 0
    %2782 = vmatprep.subr.bf16.mxu0 0
    %2783 = vmatpush1.bf16.msra.mxu0 0
    %2784 = vmatprep.subr.bf16.mxu0 0
    %2785 = vmatpush1.bf16.msra.mxu0 0
    %2786 = vmatprep.subr.bf16.mxu0 0
    %2787 = vmatpush1.bf16.msra.mxu0 0
    %2788 = vmatprep.mubr.bf16.mxu0 0
    %2789 = vmatmul.mubr.bf16.gmra.mrb[0].mxu0 %v2563
    %v2790 = vpop.f32.mrb[0].mxu0
    %v2791 = vadd.f32 0.0, %v2790
    %v2792 = vpop.f32.mrb[0].mxu0
    %v2793 = vadd.f32 0.0, %v2792
    %v2794 = vpop.f32.mrb[0].mxu0
    %v2795 = vpop.f32.mrb[0].mxu0
    %2796 = vdwg.mxu0
    %2797 = vmatprep.subr.bf16.mxu0 %v2695
    %2798 = vmatpush1.bf16.msra.mxu0 %v2694
    %2799 = vmatprep.subr.bf16.mxu0 %v2699
    %2800 = vmatpush1.bf16.msra.mxu0 %v2698
    %2801 = vmatprep.subr.bf16.mxu0 %v2703
    %2802 = vmatpush1.bf16.msra.mxu0 %v2702
    %2803 = vmatprep.subr.bf16.mxu0 %v2707
    %2804 = vmatpush1.bf16.msra.mxu0 %v2706
    %2805 = vmatprep.subr.bf16.mxu0 %v2711
    %2806 = vmatpush1.bf16.msra.mxu0 %v2710
    %2807 = vmatprep.subr.bf16.mxu0 %v2715
    %2808 = vmatpush1.bf16.msra.mxu0 %v2714
    %2809 = vmatprep.subr.bf16.mxu0 %v2719
    %2810 = vmatpush1.bf16.msra.mxu0 %v2718
    %2811 = vmatprep.subr.bf16.mxu0 %v2723
    %2812 = vmatpush1.bf16.msra.mxu0 %v2722
    %2813 = vmatprep.subr.bf16.mxu0 0
    %2814 = vmatpush1.bf16.msra.mxu0 0
    %2815 = vmatprep.subr.bf16.mxu0 0
    %2816 = vmatpush1.bf16.msra.mxu0 0
    %2817 = vmatprep.subr.bf16.mxu0 0
    %2818 = vmatpush1.bf16.msra.mxu0 0
    %2819 = vmatprep.subr.bf16.mxu0 0
    %2820 = vmatpush1.bf16.msra.mxu0 0
    %2821 = vmatprep.subr.bf16.mxu0 0
    %2822 = vmatpush1.bf16.msra.mxu0 0
    %2823 = vmatprep.subr.bf16.mxu0 0
    %2824 = vmatpush1.bf16.msra.mxu0 0
    %2825 = vmatprep.subr.bf16.mxu0 0
    %2826 = vmatpush1.bf16.msra.mxu0 0
    %2827 = vmatprep.subr.bf16.mxu0 0
    %2828 = vmatpush1.bf16.msra.mxu0 0
    %2829 = vmatprep.mubr.bf16.mxu0 0
    %2830 = vmatmul.mubr.bf16.gmra.mrb[0].mxu0 %v2563
    %v2831 = vpop.f32.mrb[0].mxu0
    %v2832 = vadd.f32 0.0, %v2831
    %v2833 = vpop.f32.mrb[0].mxu0
    %v2834 = vadd.f32 0.0, %v2833
    %v2835 = vpop.f32.mrb[0].mxu0
    %v2836 = vpop.f32.mrb[0].mxu0
    %2837 = vdwg.mxu0
    %v2838 = vadd.f32 %v2558, %v2791
    %v2839 = vadd.f32 %v2559, %v2793
    %v2840 = vadd.f32 %v2560, %v2832
    %v2841 = vadd.f32 %v2561, %v2834
    %v2842 = vxor.u32 %v2838, 2147483648
    %v2843 = vmul.f32 %v2842, 1.442695
    %v2844 = vpow.pop %v2843
    %v2845 = vadd.f32 %v2844, 1.0
    %v2846 = vrcp.pop %v2845
    %v2847 = vmul.f32 1.0, %v2846
    %v2848 = vxor.u32 %v2839, 2147483648
    %v2849 = vmul.f32 %v2848, 1.442695
    %v2850 = vpow.pop %v2849
    %v2851 = vadd.f32 %v2850, 1.0
    %v2852 = vrcp.pop %v2851
    %v2853 = vmul.f32 1.0, %v2852
    %v2854 = vtanh.pop %v2840
    %v2855 = vxor.u32 %v2841, 2147483648
    %v2856 = vmul.f32 %v2855, 1.442695
    %v2857 = vpow.pop %v2856
    %v2858 = vadd.f32 %v2857, 1.0
    %v2859 = vrcp.pop %v2858
    %v2860 = vmul.f32 1.0, %v2859
    %v2861 = vld [vmem:[#allocation3] sm:$0xff]
    %v2862 = vmul.f32 %v2853, %v2861
    %v2863 = vmul.f32 %v2847, %v2854
    %v2864 = vadd.f32 %v2862, %v2863
    %v2865 = vtanh.pop %v2864
    %v2866 = vmul.f32 %v2860, %v2865
    %2867 = vst [vmem:[#allocation3] sm:$0xff] %v2864
    %2868 = vst [vmem:[#allocation2] sm:$0xff] %v2866
    %2869 = vst [vmem:[%s2557] sm:$0xff] %v2866
    %v2870 = vld [vmem:[#allocation7] sm:$0xff]
    %v2871 = vld [vmem:[#allocation7 + $0x8] sm:$0xff]
    %v2872 = vld [vmem:[#allocation7 + $0x10] sm:$0xff]
    %v2873 = vld [vmem:[#allocation7 + $0x18] sm:$0xff]
    %v2874 = vld [vmem:[#allocation7 + $0x20] sm:$0xff]
    %v2875 = vld [vmem:[#allocation7 + $0x28] sm:$0xff]
    %v2876 = vld [vmem:[#allocation7 + $0x30] sm:$0xff]
    %v2877 = vld [vmem:[#allocation7 + $0x38] sm:$0xff]
    %v2878 = vld [vmem:[#allocation7 + $0x40] sm:$0xff]
    %v2879 = vld [vmem:[#allocation7 + $0x48] sm:$0xff]
    %v2880 = vld [vmem:[#allocation7 + $0x50] sm:$0xff]
    %v2881 = vld [vmem:[#allocation7 + $0x58] sm:$0xff]
    %v2882 = vld [vmem:[#allocation7 + $0x60] sm:$0xff]
    %v2883 = vld [vmem:[#allocation7 + $0x68] sm:$0xff]
    %v2884 = vld [vmem:[#allocation7 + $0x70] sm:$0xff]
    %v2885 = vld [vmem:[#allocation7 + $0x78] sm:$0xff]
    %v2886 = vld [vmem:[%s4] sm:$0x1]
    %s2887 = smul.u32 0, 4
    %s2888 = smul.addr %s2887, 8
    %s2889 = scalar_lea.vmem [#allocation4], %s2888
    %v2890 = vld [vmem:[%s2889] sm:$0xff]
    %v2891 = vld [vmem:[%s2889 + $0x20] sm:$0xff]
    %v2892 = vld [vmem:[%s2889 + $0x40] sm:$0xff]
    %v2893 = vld [vmem:[%s2889 + $0x60] sm:$0xff]
    %v2894 = vld [vmem:[%s2889 + $0x80] sm:$0xff]
    %v2895 = vld [vmem:[%s2889 + $0xa0] sm:$0xff]
    %v2896 = vld [vmem:[%s2889 + $0xc0] sm:$0xff]
    %v2897 = vld [vmem:[%s2889 + $0xe0] sm:$0xff]
    %v2899 = vlaneseq
    %v2900 = vshrl.u32 %v2899, 7
    %v2901 = vsub.s32 0, %v2900
    %v2902 = vrot.slane %v2886, %v2901
    %2904 = vmatprep.subr.mxu0 0.0
    %2905 = vmatpush1.msra.mxu0 %v2870
    %2906 = vmatprep.subr.mxu0 0.0
    %2907 = vmatpush1.msra.mxu0 %v2871
    %2908 = vmatprep.subr.mxu0 0.0
    %2909 = vmatpush1.msra.mxu0 %v2872
    %2910 = vmatprep.subr.mxu0 0.0
    %2911 = vmatpush1.msra.mxu0 %v2873
    %2912 = vmatprep.subr.mxu0 0.0
    %2913 = vmatpush1.msra.mxu0 %v2874
    %2914 = vmatprep.subr.mxu0 0.0
    %2915 = vmatpush1.msra.mxu0 %v2875
    %2916 = vmatprep.subr.mxu0 0.0
    %2917 = vmatpush1.msra.mxu0 %v2876
    %2918 = vmatprep.subr.mxu0 0.0
    %2919 = vmatpush1.msra.mxu0 %v2877
    %2920 = vmatprep.subr.mxu0 0.0
    %2921 = vmatpush1.msra.mxu0 %v2878
    %2922 = vmatprep.subr.mxu0 0.0
    %2923 = vmatpush1.msra.mxu0 %v2879
    %2924 = vmatprep.subr.mxu0 0.0
    %2925 = vmatpush1.msra.mxu0 %v2880
    %2926 = vmatprep.subr.mxu0 0.0
    %2927 = vmatpush1.msra.mxu0 %v2881
    %2928 = vmatprep.subr.mxu0 0.0
    %2929 = vmatpush1.msra.mxu0 %v2882
    %2930 = vmatprep.subr.mxu0 0.0
    %2931 = vmatpush1.msra.mxu0 %v2883
    %2932 = vmatprep.subr.mxu0 0.0
    %2933 = vmatpush1.msra.mxu0 %v2884
    %2934 = vmatprep.subr.mxu0 0.0
    %2935 = vmatpush1.msra.mxu0 %v2885
    %2936 = vmatprep.subr.mxu0 0.0
    %2937 = vmatpush1.msra.mxu0 0.0
    %2938 = vmatprep.subr.mxu0 0.0
    %2939 = vmatpush1.msra.mxu0 0.0
    %2940 = vmatprep.subr.mxu0 0.0
    %2941 = vmatpush1.msra.mxu0 0.0
    %2942 = vmatprep.subr.mxu0 0.0
    %2943 = vmatpush1.msra.mxu0 0.0
    %2944 = vmatprep.subr.mxu0 0.0
    %2945 = vmatpush1.msra.mxu0 0.0
    %2946 = vmatprep.subr.mxu0 0.0
    %2947 = vmatpush1.msra.mxu0 0.0
    %2948 = vmatprep.subr.mxu0 0.0
    %2949 = vmatpush1.msra.mxu0 0.0
    %2950 = vmatprep.subr.mxu0 0.0
    %2951 = vmatpush1.msra.mxu0 0.0
    %2952 = vmatprep.subr.mxu0 0.0
    %2953 = vmatpush1.msra.mxu0 0.0
    %2954 = vmatprep.subr.mxu0 0.0
    %2955 = vmatpush1.msra.mxu0 0.0
    %2956 = vmatprep.subr.mxu0 0.0
    %2957 = vmatpush1.msra.mxu0 0.0
    %2958 = vmatprep.subr.mxu0 0.0
    %2959 = vmatpush1.msra.mxu0 0.0
    %2960 = vmatprep.subr.mxu0 0.0
    %2961 = vmatpush1.msra.mxu0 0.0
    %2962 = vmatprep.subr.mxu0 0.0
    %2963 = vmatpush1.msra.mxu0 0.0
    %2964 = vmatprep.subr.mxu0 0.0
    %2965 = vmatpush1.msra.mxu0 0.0
    %2966 = vmatprep.subr.mxu0 0.0
    %2967 = vmatpush1.msra.mxu0 0.0
    %2968 = vmatprep.mubr.f32.mxu0 0.0
    %2969 = vmatmul.mubr.f32.gmra.mrb[0].mxu0 %v2890
    %v2970 = vpop.f32.mrb[0].mxu0
    %v2971 = vadd.f32 %v2902, %v2970
    %v2972 = vpop.f32.mrb[0].mxu0
    %2973 = vmatprep.mubr.f32.mxu0 0.0
    %2974 = vmatmul.mubr.f32.gmra.mrb[0].mxu0 %v2891
    %v2975 = vpop.f32.mrb[0].mxu0
    %v2976 = vadd.f32 %v2902, %v2975
    %v2977 = vpop.f32.mrb[0].mxu0
    %2978 = vmatprep.mubr.f32.mxu0 0.0
    %2979 = vmatmul.mubr.f32.gmra.mrb[0].mxu0 %v2892
    %v2980 = vpop.f32.mrb[0].mxu0
    %v2981 = vadd.f32 %v2902, %v2980
    %v2982 = vpop.f32.mrb[0].mxu0
    %2983 = vmatprep.mubr.f32.mxu0 0.0
    %2984 = vmatmul.mubr.f32.gmra.mrb[0].mxu0 %v2893
    %v2985 = vpop.f32.mrb[0].mxu0
    %v2986 = vadd.f32 %v2902, %v2985
    %v2987 = vpop.f32.mrb[0].mxu0
    %2988 = vmatprep.mubr.f32.mxu0 0.0
    %2989 = vmatmul.mubr.f32.gmra.mrb[0].mxu0 %v2894
    %v2990 = vpop.f32.mrb[0].mxu0
    %v2991 = vadd.f32 %v2902, %v2990
    %v2992 = vpop.f32.mrb[0].mxu0
    %2993 = vmatprep.mubr.f32.mxu0 0.0
    %2994 = vmatmul.mubr.f32.gmra.mrb[0].mxu0 %v2895
    %v2995 = vpop.f32.mrb[0].mxu0
    %v2996 = vadd.f32 %v2902, %v2995
    %v2997 = vpop.f32.mrb[0].mxu0
    %2998 = vmatprep.mubr.f32.mxu0 0.0
    %2999 = vmatmul.mubr.f32.gmra.mrb[0].mxu0 %v2896
    %v3000 = vpop.f32.mrb[0].mxu0
    %v3001 = vadd.f32 %v2902, %v3000
    %v3002 = vpop.f32.mrb[0].mxu0
    %3003 = vmatprep.mubr.f32.mxu0 0.0
    %3004 = vmatmul.mubr.f32.gmra.mrb[0].mxu0 %v2897
    %v3005 = vpop.f32.mrb[0].mxu0
    %v3006 = vadd.f32 %v2902, %v3005
    %v3007 = vpop.f32.mrb[0].mxu0
    %3008 = vdwg.mxu0
    %3009 = vst [vmem:[%s5] sm:$0xff] %v2971
    %3010 = vst [vmem:[%s5 + $0x8] sm:$0xff] %v2976
    %3011 = vst [vmem:[%s5 + $0x10] sm:$0xff] %v2981
    %3012 = vst [vmem:[%s5 + $0x18] sm:$0xff] %v2986
    %3013 = vst [vmem:[%s5 + $0x20] sm:$0xff] %v2991
    %3014 = vst [vmem:[%s5 + $0x28] sm:$0xff] %v2996
    %3015 = vst [vmem:[%s5 + $0x30] sm:$0xff] %v3001
    %3016 = vst [vmem:[%s5 + $0x38] sm:$0xff] %v3006
    // Predicated region
    $region30: #{joint_model_apply.1} parent=1 // pred_check
      _
    $region31: #{joint_model_apply.1} parent=1 // pred_check_branch
      %3018 = sbr.rel (0) target = $region33
    $region32: #{joint_model_apply.1} parent=1 // pred_region
      _
    $region33: #{joint_model_apply.1} parent=1 // pred_fallthru
      _
    // Predicated region
    $region34: #{joint_model_apply.1} parent=1 // pred_check
      _
    $region35: #{joint_model_apply.1} parent=1 // pred_check_branch
      %3020 = sbr.rel (0) target = $region37
    $region36: #{joint_model_apply.1} parent=1 // pred_region
      _
    $region37: #{joint_model_apply.1} parent=1 // pred_fallthru
      _
    %3021 = vsyncpa [#allocation6], 1
    %3022 = vsyncpa [#allocation8], 1

</llo_original>
